<compile_context>
chip_gen: v7x
topology: tpu7x:2x2x1
jax: 0.10.0
libtpu: 0.0.40
codegen_flags: <defaults>
</compile_context>

<pallas_src>
import jax
import jax.numpy as jnp
from jax.experimental import pallas as pl
from jax.experimental.pallas import tpu as pltpu


LANE = 128        # TPU lane width; classifier output padded to this
_MXU_ROWS = 256   # target M rows per grid step to fill the MXU


def sen_head_kernel(h_ref, w1_ref, b1_ref, w2_ref, w3_ref, b3_ref, out_ref):
    """One batch tile of the SEN pooling/classifier head.

    h_ref  : (TB, S, H) bf16   last-layer hidden states (streamed per tile)
    w1_ref : (H, A) bf16, b1_ref: (1, A) f32   -- attention Linear(768, 512)
    w2_ref : (1, A) f32                        -- attention Linear(512, 1) row
    w3_ref : (H, LANE) bf16, b3_ref: (1, LANE) -- classifier, lane-padded
    out_ref: (1, TB, LANE) f32 logits (first 13 lanes valid)
    """
    h = h_ref[...]                                   # (TB, S, H) bf16
    TB, S, H = h.shape
    A = w1_ref.shape[1]

    # ---- attention MLP layer 1 on the MXU: bf16 operands, f32 accumulate ----
    a1 = jnp.tanh(
        jnp.dot(h.reshape(TB * S, H), w1_ref[...],
                preferred_element_type=jnp.float32)
        + b1_ref[...])                               # (TB*S, A) f32

    # ---- score projection on the VPU + lane reduce (N=1 MXU pass wasteful) --
    scores = jnp.sum(a1.reshape(TB, S, A) * w2_ref[...].reshape(1, 1, A),
                     axis=-1)                        # (TB, S) f32, lane-dense
    # NOTE: the Linear(512,1) bias is constant over the sequence dimension and
    # cancels exactly in the softmax, so it is not applied here.

    # ---- softmax over the sequence dim (lane axis); reciprocal on the EUP ---
    m = jnp.max(scores, axis=-1, keepdims=True)      # (TB, 1)
    e = jnp.exp(scores - m)                          # (TB, S)
    w = e * pl.reciprocal(jnp.sum(e, axis=-1, keepdims=True), approx=True)

    # ---- context vector: bf16 multiply (h already bf16), f32 S-accumulate ---
    wh = h * w.astype(jnp.bfloat16).reshape(TB, S, 1)       # (TB, S, H) bf16
    ctx = jnp.sum(wh, axis=1, dtype=jnp.float32)            # (TB, H) f32

    # ---- classifier Linear(768, 13), lane-padded for unmasked stores --------
    logits = (jnp.dot(ctx.astype(jnp.bfloat16), w3_ref[...],
                      preferred_element_type=jnp.float32)
              + b3_ref[...])                                 # (TB, LANE) f32
    out_ref[...] = logits[None].astype(out_ref.dtype)


def _vmem_capacity_bytes():
    """Generation-aware VMEM capacity (falls back to v7x's 64 MiB per TC)."""
    try:
        return int(pltpu.get_tpu_info().vmem_capacity_bytes)
    except Exception:
        return 64 << 20


def _pick_batch_tile(B, S, H, A, budget_bytes):
    """Smallest TB whose TB*S reaches ~256 MXU rows, shrunk until the
    double-buffered bf16 tile + f32 intermediates fit the per-step budget."""
    tb = min(max(1, pl.cdiv(_MXU_ROWS, S)), B)

    def fits(tb):
        h_tile = tb * S * H * 2                    # bf16 stream (per buffer)
        out_tile = tb * LANE * 4
        inter = (tb * S * A * 4                    # a1  (f32)
                 + tb * S * H * 2                  # wh  (bf16)
                 + tb * H * 4                      # ctx (f32)
                 + 4 * tb * S * 4)                 # scores / softmax temps
        return 2 * h_tile + 2 * out_tile + inter <= budget_bytes

    while tb > 1 and not fits(tb):
        tb -= 1
    return tb


def sen_head(hidden, w1, b1, w2, b2, w3, b3):
    """Pallas TPU implementation of the SEN_Model head (post-BERT part)."""
    del b2  # constant over the sequence dim -> cancels in the softmax
    B, S, H = hidden.shape
    A = w1.shape[1]
    C = w3.shape[1]

    # bf16 MXU operands (f32 accumulation in-kernel); hidden streamed as bf16;
    # classifier weight/bias lane-padded to 128 so the output store is dense.
    hidden_bf = hidden.astype(jnp.bfloat16)
    w1_bf = w1.astype(jnp.bfloat16)
    b1_f = b1.reshape(1, A).astype(jnp.float32)
    w2_row = w2.reshape(1, A).astype(jnp.float32)          # stays on the VPU
    w3_pad = jnp.zeros((H, LANE), jnp.bfloat16).at[:, :C].set(
        w3.astype(jnp.bfloat16))
    b3_pad = jnp.zeros((1, LANE), jnp.float32).at[:, :C].set(
        b3.reshape(1, C).astype(jnp.float32))

    weight_bytes = H * A * 2 + A * 4 + A * 4 + H * LANE * 2 + LANE * 4
    vmem_cap = _vmem_capacity_bytes()
    tile_budget = min(vmem_cap // 2, 24 << 20) - 2 * weight_bytes
    TB = _pick_batch_tile(B, S, H, A, tile_budget)

    # Pad B up to a multiple of TB (padded rows give bias-only logits that are
    # sliced off below) instead of falling back to a huge TB=B tile.
    G = pl.cdiv(B, TB)
    B_pad = G * TB
    if B_pad != B:
        hidden_bf = jnp.pad(hidden_bf, ((0, B_pad - B), (0, 0), (0, 0)))

    # Explicit, generation-aware VMEM budget with headroom.
    tile_bytes = 2 * TB * S * H * 2 + 2 * TB * LANE * 4
    inter_bytes = TB * S * A * 4 + TB * S * H * 2 + TB * H * 4 + 4 * TB * S * 4
    need = tile_bytes + 2 * weight_bytes + inter_bytes
    vmem_limit = int(min(max(2 * need, 16 << 20), vmem_cap - (8 << 20)))

    const = lambda shape: pl.BlockSpec(shape, lambda i: (0,) * len(shape))
    # TODO(synk): pipeline_mode=pl.Buffered(1) on the constant weight specs
    # would drop their dead second buffer (~1 MiB); left at the default for
    # portability across Pallas versions.

    out3 = pl.pallas_call(
        sen_head_kernel,
        out_shape=jax.ShapeDtypeStruct((G, TB, LANE), jnp.float32),
        grid=(G,),
        in_specs=[
            pl.BlockSpec((TB, S, H), lambda i: (i, 0, 0)),  # streamed, bf16
            const((H, A)),                                  # VMEM-resident
            const((1, A)),
            const((1, A)),
            const((H, LANE)),
            const((1, LANE)),
        ],
        out_specs=pl.BlockSpec((1, TB, LANE), lambda i: (i, 0, 0)),
        compiler_params=pltpu.CompilerParams(
            # TODO(synk): on v7x verify the batch axis shards across both
            # TensorCores; switch to pltpu.CORE_PARALLEL if one core is idle.
            dimension_semantics=("parallel",),
            vmem_limit_bytes=vmem_limit),
    )(hidden_bf, w1_bf, b1_f, w2_row, w3_pad, b3_pad)

    return out3.reshape(B_pad, LANE)[:B, :C]


def sen_head_ref(hidden, w1, b1, w2, b2, w3, b3):
    """Pure-JAX (f32) reference mirroring the PyTorch forward."""
    a1 = jnp.tanh(hidden @ w1 + b1)                 # (B, S, 512)
    scores = a1 @ w2 + b2                           # (B, S, 1)
    weights = jax.nn.softmax(scores, axis=1)        # softmax over the seq dim
    ctx = jnp.sum(weights * hidden, axis=1)         # (B, 768)
    return ctx @ w3 + b3                            # (B, 13)


if __name__ == "__main__":
    # Small shapes consistent with the module (H/A/C fixed by the model).
    B, S, H, A, C = 16, 128, 768, 512, 13

    key = jax.random.PRNGKey(0)
    kh, k1, kb1, k2, kb2, k3, kb3 = jax.random.split(key, 7)

    # Deterministic synthetic "last layer hidden states" and parameters.
    hidden = jax.random.normal(kh, (B, S, H), dtype=jnp.float32)
    w1 = jax.random.normal(k1, (H, A), dtype=jnp.float32) * (1.0 / H) ** 0.5
    b1 = jax.random.normal(kb1, (1, A), dtype=jnp.float32) * 0.01
    w2 = jax.random.normal(k2, (A, 1), dtype=jnp.float32) * (1.0 / A) ** 0.5
    b2 = jax.random.normal(kb2, (1, 1), dtype=jnp.float32) * 0.01
    w3 = jax.random.normal(k3, (H, C), dtype=jnp.float32) * (1.0 / H) ** 0.5
    b3 = jax.random.normal(kb3, (1, C), dtype=jnp.float32) * 0.01

    out = jax.block_until_ready(sen_head(hidden, w1, b1, w2, b2, w3, b3))
    ref = sen_head_ref(hidden, w1, b1, w2, b2, w3, b3)

    assert out.shape == (B, C)
    # hidden/weights are bf16 MXU/VPU operands (f32 accumulation) -> compare
    # at bf16-level tolerance against the f32 reference.
    max_err = jnp.max(jnp.abs(out - ref))
    assert jnp.allclose(out, ref, atol=2e-2, rtol=2e-2), (
        f"max abs err {max_err}")

    print("KERNEL_OK")
</pallas_src>

<mosaic_0001>
module attributes {stable_mosaic.version = 11 : i64} {
  func.func @sen_head_kernel(%arg0: i32, %arg1: memref<2x128x768xbf16, #tpu.memory_space<vmem>>, %arg2: memref<768x512xbf16, #tpu.memory_space<vmem>>, %arg3: memref<1x512xf32, #tpu.memory_space<vmem>>, %arg4: memref<1x512xf32, #tpu.memory_space<vmem>>, %arg5: memref<768x128xbf16, #tpu.memory_space<vmem>>, %arg6: memref<1x128xf32, #tpu.memory_space<vmem>>, %arg7: memref<1x2x128xf32, #tpu.memory_space<vmem>>) attributes {dimension_semantics = [#tpu.dimension_semantics<parallel>], iteration_bounds = array<i64: 8>, scalar_prefetch = 0 : i64, scratch_operands = 0 : i64, tpu.core_type = #tpu.core_type<tc>, window_params = [{transform_indices = @transform_0, window_bounds = array<i64: 2, 128, 768>}, {pipeline_mode = #tpu.pipeline_mode<synchronous>, transform_indices = @transform_1, window_bounds = array<i64: 768, 512>}, {pipeline_mode = #tpu.pipeline_mode<synchronous>, transform_indices = @transform_2, window_bounds = array<i64: 1, 512>}, {pipeline_mode = #tpu.pipeline_mode<synchronous>, transform_indices = @transform_3, window_bounds = array<i64: 1, 512>}, {pipeline_mode = #tpu.pipeline_mode<synchronous>, transform_indices = @transform_4, window_bounds = array<i64: 768, 128>}, {pipeline_mode = #tpu.pipeline_mode<synchronous>, transform_indices = @transform_5, window_bounds = array<i64: 1, 128>}, {transform_indices = @transform_6, window_bounds = array<i64: 1, 2, 128>}]} {
    %c0 = arith.constant 0 : index
    %c0_0 = arith.constant 0 : index
    %c0_1 = arith.constant 0 : index
    %0 = vector.load %arg1[%c0, %c0_0, %c0_1] : memref<2x128x768xbf16, #tpu.memory_space<vmem>>, vector<2x128x768xbf16>
    %1 = vector.shape_cast %0 : vector<2x128x768xbf16> to vector<256x768xbf16>
    %c0_2 = arith.constant 0 : index
    %c0_3 = arith.constant 0 : index
    %2 = vector.load %arg2[%c0_2, %c0_3] : memref<768x512xbf16, #tpu.memory_space<vmem>>, vector<768x512xbf16>
    %cst = arith.constant dense<0.000000e+00> : vector<256x512xf32>
    %3 = tpu.matmul %1, %2, %cst {dimension_numbers = #tpu.dot_dimension_numbers<[1], [0], [0], [1], [0, 0, 1, 1], [], []>} : vector<256x768xbf16>, vector<768x512xbf16>, vector<256x512xf32> -> vector<256x512xf32>
    %c0_4 = arith.constant 0 : index
    %c0_5 = arith.constant 0 : index
    %4 = vector.load %arg3[%c0_4, %c0_5] : memref<1x512xf32, #tpu.memory_space<vmem>>, vector<1x512xf32>
    %5 = vector.broadcast %4 : vector<1x512xf32> to vector<256x512xf32>
    %6 = arith.addf %3, %5 : vector<256x512xf32>
    %7 = math.tanh %6 : vector<256x512xf32>
    %8 = vector.shape_cast %7 : vector<256x512xf32> to vector<2x128x512xf32>
    %c0_6 = arith.constant 0 : index
    %c0_7 = arith.constant 0 : index
    %9 = vector.load %arg4[%c0_6, %c0_7] : memref<1x512xf32, #tpu.memory_space<vmem>>, vector<1x512xf32>
    %10 = vector.shape_cast %9 : vector<1x512xf32> to vector<1x1x512xf32>
    %11 = vector.broadcast %10 : vector<1x1x512xf32> to vector<2x128x512xf32>
    %12 = arith.mulf %8, %11 : vector<2x128x512xf32>
    %cst_8 = arith.constant dense<0.000000e+00> : vector<2x128xf32>
    %13 = vector.multi_reduction <add>, %12, %cst_8 [2] : vector<2x128x512xf32> to vector<2x128xf32>
    %cst_9 = arith.constant dense<0xFF800000> : vector<2xf32>
    %14 = vector.multi_reduction <maximumf>, %13, %cst_9 [1] : vector<2x128xf32> to vector<2xf32>
    %15 = vector.shape_cast %14 : vector<2xf32> to vector<2x1xf32>
    %16 = vector.broadcast %15 : vector<2x1xf32> to vector<2x128xf32>
    %17 = arith.subf %13, %16 : vector<2x128xf32>
    %18 = math.exp %17 : vector<2x128xf32>
    %cst_10 = arith.constant dense<0.000000e+00> : vector<2xf32>
    %19 = vector.multi_reduction <add>, %18, %cst_10 [1] : vector<2x128xf32> to vector<2xf32>
    %20 = vector.shape_cast %19 : vector<2xf32> to vector<2x1xf32>
    %21 = tpu.reciprocal %20 {approx = true} : vector<2x1xf32> -> vector<2x1xf32>
    %22 = vector.broadcast %21 : vector<2x1xf32> to vector<2x128xf32>
    %23 = arith.mulf %18, %22 : vector<2x128xf32>
    %24 = arith.truncf %23 : vector<2x128xf32> to vector<2x128xbf16>
    %25 = vector.shape_cast %24 : vector<2x128xbf16> to vector<2x128x1xbf16>
    %26 = vector.broadcast %25 : vector<2x128x1xbf16> to vector<2x128x768xbf16>
    %27 = arith.mulf %0, %26 : vector<2x128x768xbf16>
    %28 = arith.extf %27 : vector<2x128x768xbf16> to vector<2x128x768xf32>
    %cst_11 = arith.constant dense<0.000000e+00> : vector<2x768xf32>
    %29 = vector.multi_reduction <add>, %28, %cst_11 [1] : vector<2x128x768xf32> to vector<2x768xf32>
    %30 = arith.truncf %29 : vector<2x768xf32> to vector<2x768xbf16>
    %c0_12 = arith.constant 0 : index
    %c0_13 = arith.constant 0 : index
    %31 = vector.load %arg5[%c0_12, %c0_13] : memref<768x128xbf16, #tpu.memory_space<vmem>>, vector<768x128xbf16>
    %cst_14 = arith.constant dense<0.000000e+00> : vector<2x128xf32>
    %32 = tpu.matmul %30, %31, %cst_14 {dimension_numbers = #tpu.dot_dimension_numbers<[1], [0], [0], [1], [0, 0, 1, 1], [], []>} : vector<2x768xbf16>, vector<768x128xbf16>, vector<2x128xf32> -> vector<2x128xf32>
    %c0_15 = arith.constant 0 : index
    %c0_16 = arith.constant 0 : index
    %33 = vector.load %arg6[%c0_15, %c0_16] : memref<1x128xf32, #tpu.memory_space<vmem>>, vector<1x128xf32>
    %34 = vector.broadcast %33 : vector<1x128xf32> to vector<2x128xf32>
    %35 = arith.addf %32, %34 : vector<2x128xf32>
    %36 = vector.shape_cast %35 : vector<2x128xf32> to vector<1x2x128xf32>
    %c0_17 = arith.constant 0 : index
    %c0_18 = arith.constant 0 : index
    %c0_19 = arith.constant 0 : index
    %37 = vector.load %arg7[%c0_17, %c0_18, %c0_19] : memref<1x2x128xf32, #tpu.memory_space<vmem>>, vector<1x2x128xf32>
    tpu.vector_store %arg7[%c0_17, %c0_18, %c0_19], %36 {strides = array<i32>} : memref<1x2x128xf32, #tpu.memory_space<vmem>>, vector<1x2x128xf32>,
    return
  }
  func.func @transform_0(%arg0: i32) -> (i32, i32, i32) {
    %c0_i32 = arith.constant 0 : i32
    %c0_i32_0 = arith.constant 0 : i32
    %c0_i32_1 = arith.constant 0 : i32
    return %arg0, %c0_i32, %c0_i32_0 : i32, i32, i32
  }
  func.func @transform_1(%arg0: i32) -> (i32, i32) {
    %c0_i32 = arith.constant 0 : i32
    %c0_i32_0 = arith.constant 0 : i32
    %c0_i32_1 = arith.constant 0 : i32
    return %c0_i32, %c0_i32_0 : i32, i32
  }
  func.func @transform_2(%arg0: i32) -> (i32, i32) {
    %c0_i32 = arith.constant 0 : i32
    %c0_i32_0 = arith.constant 0 : i32
    %c0_i32_1 = arith.constant 0 : i32
    return %c0_i32, %c0_i32_0 : i32, i32
  }
  func.func @transform_3(%arg0: i32) -> (i32, i32) {
    %c0_i32 = arith.constant 0 : i32
    %c0_i32_0 = arith.constant 0 : i32
    %c0_i32_1 = arith.constant 0 : i32
    return %c0_i32, %c0_i32_0 : i32, i32
  }
  func.func @transform_4(%arg0: i32) -> (i32, i32) {
    %c0_i32 = arith.constant 0 : i32
    %c0_i32_0 = arith.constant 0 : i32
    %c0_i32_1 = arith.constant 0 : i32
    return %c0_i32, %c0_i32_0 : i32, i32
  }
  func.func @transform_5(%arg0: i32) -> (i32, i32) {
    %c0_i32 = arith.constant 0 : i32
    %c0_i32_0 = arith.constant 0 : i32
    %c0_i32_1 = arith.constant 0 : i32
    return %c0_i32, %c0_i32_0 : i32, i32
  }
  func.func @transform_6(%arg0: i32) -> (i32, i32, i32) {
    %c0_i32 = arith.constant 0 : i32
    %c0_i32_0 = arith.constant 0 : i32
    %c0_i32_1 = arith.constant 0 : i32
    return %arg0, %c0_i32, %c0_i32_0 : i32, i32, i32
  }
}

</mosaic_0001>

<llo_original>
// kernel: tpu_custom_call.1
$region0: #{tpu_custom_call.1}
  #allocation0 [shape = 'u32[]', space=smem, size = 0x4, offset = 0x4, fixed_abs, tag = 'smem constant byte address 0x4 - core index']
  #allocation1 [shape = 'u32[144,128]{1,0:T(1,128)}', space=vmem, size = 0x12000, scoped, tag = 'internal scratch']
  %s0 = inlined_call_operand.hbm [shape: bf16[16,128,768], index: 0, kind: input, shape index: {}]
  %s1 = inlined_call_operand.hbm [shape: bf16[768,512], index: 1, kind: input, shape index: {}]
  %s2 = inlined_call_operand.hbm [shape: f32[1,512], index: 2, kind: input, shape index: {}]
  %s3 = inlined_call_operand.hbm [shape: f32[1,512], index: 3, kind: input, shape index: {}]
  %s4 = inlined_call_operand.hbm [shape: bf16[768,128], index: 4, kind: input, shape index: {}]
  %s5 = inlined_call_operand.hbm [shape: f32[1,128], index: 5, kind: input, shape index: {}]
  %s6 = inlined_call_operand.hbm [shape: f32[8,2,128], index: 6, kind: output, shape index: {}]
  %s7 = sld [smem:[#allocation0]]
  $region81: #{tpu_custom_call.1} parent=0
    _
  %s9 = ssub.s32 1, %s7
  %s10 = scalar_select 0, %s9, %s7
  $region1: #{tpu_custom_call.1} parent=0
    #allocation2 [shape = 'u8[786432]{0}', space=vmem, size = 0xc0000, scoped, tag = 'input window, operand 0']
    #allocation3 [shape = 's32[2]{0}', space=sflag, size = 0x8, scoped, tag = 'scoped memory for tpu_custom_call.1']
    #allocation4 [shape = 's32[2]{0}', space=sflag, size = 0x8, scoped, tag = 'scoped memory for tpu_custom_call.1']
    #allocation5 [shape = 'u8[786432]{0}', space=vmem, size = 0xc0000, scoped, tag = 'input window, operand 1, single buffered']
    #allocation6 [shape = 's32[1]{0}', space=sflag, size = 0x4, scoped, tag = 'scoped memory for tpu_custom_call.1']
    #allocation7 [shape = 'u8[2048]{0}', space=vmem, size = 0x800, scoped, tag = 'input window, operand 2, single buffered']
    #allocation8 [shape = 'u8[2048]{0}', space=vmem, size = 0x800, scoped, tag = 'input window, operand 3, single buffered']
    #allocation9 [shape = 's32[1]{0}', space=sflag, size = 0x4, scoped, tag = 'scoped memory for tpu_custom_call.1']
    #allocation10 [shape = 'u8[196608]{0}', space=vmem, size = 0x30000, scoped, tag = 'input window, operand 4, single buffered']
    #allocation11 [shape = 'u8[512]{0}', space=vmem, size = 0x400, scoped, tag = 'input window, operand 5, single buffered']
    #allocation12 [shape = 's32[1]{0}', space=sflag, size = 0x4, scoped, tag = 'scoped memory for tpu_custom_call.1']
    #allocation13 [shape = 'u8[2048]{0}', space=vmem, size = 0x800, scoped, tag = 'output window, operand 0']
    %11 = vsyncpa [#allocation3], 0
    %s12 = scalar_lea.sflag [#allocation3], 1
    %13 = vsyncpa %s12, 0
    %14 = vsyncpa [#allocation6], 0
    %15 = vsyncpa [#allocation9], 0
    %16 = vsyncpa [#allocation12], 0
    %17 = vsyncpa [#allocation4], 0
    %s18 = scalar_lea.sflag [#allocation4], 1
    %19 = vsyncpa %s18, 0
    loop: start=0, step=1, limit=10
    $region2: #{tpu_custom_call.1} parent=1 // loop_pre_header
      _
    $region3: #{tpu_custom_call.1} parent=1 // loop_header
      %s21 = sphi 0, %s25
      %p22 = scmp.ge.s32.totalorder %s21, 10
      %s31 = sphi 0, %s33
      %s34 = sphi 0, %s31
      %s35 = sphi 0, %s34
      %s51 = sphi 0, %s35
      %s55 = sphi 0, %s55
      %s57 = sphi 0, %s55
      %s58 = sphi 0, %s57
      %s72 = sphi 0, %s58
      %s76 = sphi 0, %s76
      %s78 = sphi 0, %s76
      %s79 = sphi 0, %s78
      %s93 = sphi 0, %s79
      %s97 = sphi 0, %s97
      %s99 = sphi 0, %s97
      %s100 = sphi 0, %s99
      %s114 = sphi 0, %s100
      %s118 = sphi 0, %s118
      %s120 = sphi 0, %s118
      %s121 = sphi 0, %s120
      %s135 = sphi 0, %s121
      %s139 = sphi 0, %s139
      %s141 = sphi 0, %s139
      %s142 = sphi 0, %s141
      %s156 = sphi 0, %s142
      %s162 = sphi 0, %s164
      %s165 = sphi 0, %s162
      %s166 = sphi 0, %s165
      %s182 = sphi 0, %s166
    $region4: #{tpu_custom_call.1} parent=1 // loop_header_branch
      %24 = sbr.rel (%p22) target = $region8
    $region5: #{tpu_custom_call.1} parent=1 // loop_body
      %s26 = ssub.s32 %s21, 1
      %s27 = ssub.s32 %s21, 2
      %s28 = sadd.s32 %s21, 1
      %s29 = ssub.s32 %s21, %s28
      %p30 = scmp.eq.s32.totalorder %s29, 0
      %s32 = sadd.s32 %s31, 1
      %s33 = scalar_select %p30, %s31, %s32
      %p36 = pneg %p30
      %p37 = scmp.eq.s32.totalorder %s21, 7
      %p38 = por %p36, %p37
      %p39 = scmp.ne.s32.totalorder %s31, %s34
      %p40 = scmp.eq.s32.totalorder %s21, 0
      %p41 = por %p39, %p40
      %p42 = scmp.ne.s32.totalorder %s31, %s34
      %p43 = scmp.eq.s32.totalorder %s26, 7
      %p44 = por %p42, %p43
      %p45 = scmp.ne.s32.totalorder %s34, %s35
      %p46 = scmp.eq.s32.totalorder %s26, 0
      %p47 = por %p45, %p46
      %p48 = scmp.ne.s32.totalorder %s34, %s35
      %p49 = scmp.eq.s32.totalorder %s27, 7
      %p50 = por %p48, %p49
      %p52 = scmp.ne.s32.totalorder %s35, %s51
      %p53 = scmp.eq.s32.totalorder %s27, 0
      %p54 = por %p52, %p53
      %s56 = sadd.s32 %s55, 1
      %p59 = scmp.eq.s32.totalorder %s21, 7
      %p60 = scmp.ne.s32.totalorder %s55, %s57
      %p61 = scmp.eq.s32.totalorder %s21, 0
      %p62 = por %p60, %p61
      %p63 = scmp.ne.s32.totalorder %s55, %s57
      %p64 = scmp.eq.s32.totalorder %s26, 7
      %p65 = por %p63, %p64
      %p66 = scmp.ne.s32.totalorder %s57, %s58
      %p67 = scmp.eq.s32.totalorder %s26, 0
      %p68 = por %p66, %p67
      %p69 = scmp.ne.s32.totalorder %s57, %s58
      %p70 = scmp.eq.s32.totalorder %s27, 7
      %p71 = por %p69, %p70
      %p73 = scmp.ne.s32.totalorder %s58, %s72
      %p74 = scmp.eq.s32.totalorder %s27, 0
      %p75 = por %p73, %p74
      %s77 = sadd.s32 %s76, 1
      %p80 = scmp.eq.s32.totalorder %s21, 7
      %p81 = scmp.ne.s32.totalorder %s76, %s78
      %p82 = scmp.eq.s32.totalorder %s21, 0
      %p83 = por %p81, %p82
      %p84 = scmp.ne.s32.totalorder %s76, %s78
      %p85 = scmp.eq.s32.totalorder %s26, 7
      %p86 = por %p84, %p85
      %p87 = scmp.ne.s32.totalorder %s78, %s79
      %p88 = scmp.eq.s32.totalorder %s26, 0
      %p89 = por %p87, %p88
      %p90 = scmp.ne.s32.totalorder %s78, %s79
      %p91 = scmp.eq.s32.totalorder %s27, 7
      %p92 = por %p90, %p91
      %p94 = scmp.ne.s32.totalorder %s79, %s93
      %p95 = scmp.eq.s32.totalorder %s27, 0
      %p96 = por %p94, %p95
      %s98 = sadd.s32 %s97, 1
      %p101 = scmp.eq.s32.totalorder %s21, 7
      %p102 = scmp.ne.s32.totalorder %s97, %s99
      %p103 = scmp.eq.s32.totalorder %s21, 0
      %p104 = por %p102, %p103
      %p105 = scmp.ne.s32.totalorder %s97, %s99
      %p106 = scmp.eq.s32.totalorder %s26, 7
      %p107 = por %p105, %p106
      %p108 = scmp.ne.s32.totalorder %s99, %s100
      %p109 = scmp.eq.s32.totalorder %s26, 0
      %p110 = por %p108, %p109
      %p111 = scmp.ne.s32.totalorder %s99, %s100
      %p112 = scmp.eq.s32.totalorder %s27, 7
      %p113 = por %p111, %p112
      %p115 = scmp.ne.s32.totalorder %s100, %s114
      %p116 = scmp.eq.s32.totalorder %s27, 0
      %p117 = por %p115, %p116
      %s119 = sadd.s32 %s118, 1
      %p122 = scmp.eq.s32.totalorder %s21, 7
      %p123 = scmp.ne.s32.totalorder %s118, %s120
      %p124 = scmp.eq.s32.totalorder %s21, 0
      %p125 = por %p123, %p124
      %p126 = scmp.ne.s32.totalorder %s118, %s120
      %p127 = scmp.eq.s32.totalorder %s26, 7
      %p128 = por %p126, %p127
      %p129 = scmp.ne.s32.totalorder %s120, %s121
      %p130 = scmp.eq.s32.totalorder %s26, 0
      %p131 = por %p129, %p130
      %p132 = scmp.ne.s32.totalorder %s120, %s121
      %p133 = scmp.eq.s32.totalorder %s27, 7
      %p134 = por %p132, %p133
      %p136 = scmp.ne.s32.totalorder %s121, %s135
      %p137 = scmp.eq.s32.totalorder %s27, 0
      %p138 = por %p136, %p137
      %s140 = sadd.s32 %s139, 1
      %p143 = scmp.eq.s32.totalorder %s21, 7
      %p144 = scmp.ne.s32.totalorder %s139, %s141
      %p145 = scmp.eq.s32.totalorder %s21, 0
      %p146 = por %p144, %p145
      %p147 = scmp.ne.s32.totalorder %s139, %s141
      %p148 = scmp.eq.s32.totalorder %s26, 7
      %p149 = por %p147, %p148
      %p150 = scmp.ne.s32.totalorder %s141, %s142
      %p151 = scmp.eq.s32.totalorder %s26, 0
      %p152 = por %p150, %p151
      %p153 = scmp.ne.s32.totalorder %s141, %s142
      %p154 = scmp.eq.s32.totalorder %s27, 7
      %p155 = por %p153, %p154
      %p157 = scmp.ne.s32.totalorder %s142, %s156
      %p158 = scmp.eq.s32.totalorder %s27, 0
      %p159 = por %p157, %p158
      %s160 = ssub.s32 %s21, %s28
      %p161 = scmp.eq.s32.totalorder %s160, 0
      %s163 = sadd.s32 %s162, 1
      %s164 = scalar_select %p161, %s162, %s163
      %p167 = pneg %p161
      %p168 = scmp.eq.s32.totalorder %s21, 7
      %p169 = por %p167, %p168
      %p170 = scmp.ne.s32.totalorder %s162, %s165
      %p171 = scmp.eq.s32.totalorder %s21, 0
      %p172 = por %p170, %p171
      %p173 = scmp.ne.s32.totalorder %s162, %s165
      %p174 = scmp.eq.s32.totalorder %s26, 7
      %p175 = por %p173, %p174
      %p176 = scmp.ne.s32.totalorder %s165, %s166
      %p177 = scmp.eq.s32.totalorder %s26, 0
      %p178 = por %p176, %p177
      %p179 = scmp.ne.s32.totalorder %s165, %s166
      %p180 = scmp.eq.s32.totalorder %s27, 7
      %p181 = por %p179, %p180
      %p183 = scmp.ne.s32.totalorder %s166, %s182
      %p184 = scmp.eq.s32.totalorder %s27, 0
      %p185 = por %p183, %p184
      %p186 = scmp.le.s32.totalorder 1, %s21
      %p187 = scmp.lt.s32.totalorder %s21, 9
      %p188 = pnand %p186, %p187
      %p189 = pneg %p188
      // Predicated region
      $region9: #{tpu_custom_call.1} parent=5 // pred_check
        _
      $region10: #{tpu_custom_call.1} parent=5 // pred_check_branch
        %191 = sbr.rel (%p188) target = $region12
      $region11: #{tpu_custom_call.1} parent=5 // pred_region
        %s192 = ssub.s32 %s21, 1
        // Predicated region
        $region13: #{tpu_custom_call.1} parent=11 // pred_check
          %p193 = pneg %p68
        $region14: #{tpu_custom_call.1} parent=11 // pred_check_branch
          %195 = sbr.rel (%p193) target = $region16
        $region15: #{tpu_custom_call.1} parent=11 // pred_region
          %s197 = ssub.s32 24576, 24576
          %198 = vsyncadd [#allocation6], %s197
          %s199 = sshll.u32 [#allocation5], 4
          %s200 = int_to_ptr.vmem [resolvable:$true] %s199
          %205 = dma.hbm_to_vmem [thread:$0]  %s1, 24576, %s200, [#allocation6], 256, 256, 16
        $region16: #{tpu_custom_call.1} parent=11 // pred_fallthru
          _
        // Predicated region
        $region17: #{tpu_custom_call.1} parent=11 // pred_check
          %p206 = pneg %p89
        $region18: #{tpu_custom_call.1} parent=11 // pred_check_branch
          %208 = sbr.rel (%p206) target = $region20
        $region19: #{tpu_custom_call.1} parent=11 // pred_region
          %s210 = ssub.s32 64, 64
          %211 = vsyncadd [#allocation6], %s210
          %s213 = sshll.u32 [#allocation7], 4
          %s214 = int_to_ptr.vmem [resolvable:$true] %s213
          %216 = dma.hbm_to_vmem [thread:$0]  %s2, 64, %s214, [#allocation6]
        $region20: #{tpu_custom_call.1} parent=11 // pred_fallthru
          _
        // Predicated region
        $region21: #{tpu_custom_call.1} parent=11 // pred_check
          %p217 = pneg %p110
        $region22: #{tpu_custom_call.1} parent=11 // pred_check_branch
          %219 = sbr.rel (%p217) target = $region24
        $region23: #{tpu_custom_call.1} parent=11 // pred_region
          %s221 = ssub.s32 64, 64
          %222 = vsyncadd [#allocation9], %s221
          %s224 = sshll.u32 [#allocation8], 4
          %s225 = int_to_ptr.vmem [resolvable:$true] %s224
          %227 = dma.hbm_to_vmem [thread:$0]  %s3, 64, %s225, [#allocation9]
        $region24: #{tpu_custom_call.1} parent=11 // pred_fallthru
          _
        // Predicated region
        $region25: #{tpu_custom_call.1} parent=11 // pred_check
          %p228 = pneg %p131
        $region26: #{tpu_custom_call.1} parent=11 // pred_check_branch
          %230 = sbr.rel (%p228) target = $region28
        $region27: #{tpu_custom_call.1} parent=11 // pred_region
          %s232 = ssub.s32 6144, 6144
          %233 = vsyncadd [#allocation9], %s232
          %s234 = sshll.u32 [#allocation10], 4
          %s235 = int_to_ptr.vmem [resolvable:$true] %s234
          %240 = dma.hbm_to_vmem [thread:$0]  %s4, 6144, %s235, [#allocation9], 64, 64, 4
        $region28: #{tpu_custom_call.1} parent=11 // pred_fallthru
          _
        // Predicated region
        $region29: #{tpu_custom_call.1} parent=11 // pred_check
          %p241 = pneg %p152
        $region30: #{tpu_custom_call.1} parent=11 // pred_check_branch
          %243 = sbr.rel (%p241) target = $region32
        $region31: #{tpu_custom_call.1} parent=11 // pred_region
          %s245 = ssub.s32 16, 16
          %246 = vsyncadd [#allocation12], %s245
          %s248 = sshll.u32 [#allocation11], 4
          %s249 = int_to_ptr.vmem [resolvable:$true] %s248
          %251 = dma.hbm_to_vmem [thread:$0]  %s5, 16, %s249, [#allocation12]
        $region32: #{tpu_custom_call.1} parent=11 // pred_fallthru
          _
      $region12: #{tpu_custom_call.1} parent=5 // pred_fallthru
        _
      %p252 = scmp.lt.s32.totalorder %s21, 8
      // Predicated region
      $region33: #{tpu_custom_call.1} parent=5 // pred_check
        %p253 = pneg %p252
      $region34: #{tpu_custom_call.1} parent=5 // pred_check_branch
        %255 = sbr.rel (%p253) target = $region36
      $region35: #{tpu_custom_call.1} parent=5 // pred_region
        // Predicated region
        $region37: #{tpu_custom_call.1} parent=35 // pred_check
          %p256 = pneg %p41
        $region38: #{tpu_custom_call.1} parent=35 // pred_check_branch
          %258 = sbr.rel (%p256) target = $region40
        $region39: #{tpu_custom_call.1} parent=35 // pred_region
          %s259 = sand.u32 %s31, 1
          %s260 = scalar_lea.sflag [#allocation3], %s259
          %s261 = sand.u32 %s31, 1
          %s262 = smul.addr %s261, 768
          %s263 = scalar_lea.vmem [#allocation2], %s262
          %s264 = smul.u32 2, %s21
          %s266 = ssub.s32 12288, 12288
          %267 = vsyncadd %s260, %s266
          %s268 = smul.addr %s264, 96
          %s269 = smul.addr %s268, 64
          %s270 = scalar_lea.hbm %s0, %s269
          %s271 = sshll.u32 %s263, 4
          %s272 = int_to_ptr.vmem [resolvable:$true] %s271
          %277 = dma.hbm_to_vmem [thread:$0]  %s270, 12288, %s272, %s260, 384, 384, 24
        $region40: #{tpu_custom_call.1} parent=35 // pred_fallthru
          _
      $region36: #{tpu_custom_call.1} parent=5 // pred_fallthru
        _
      %p278 = scmp.le.s32.totalorder 1, %s21
      %p279 = scmp.lt.s32.totalorder %s21, 9
      %p280 = pnand %p278, %p279
      %p281 = pneg %p280
      // Predicated region
      $region41: #{tpu_custom_call.1} parent=5 // pred_check
        _
      $region42: #{tpu_custom_call.1} parent=5 // pred_check_branch
        %283 = sbr.rel (%p280) target = $region44
      $region43: #{tpu_custom_call.1} parent=5 // pred_region
        %s284 = ssub.s32 %s21, 1
        %s285 = sand.u32 %s34, 1
        %s286 = scalar_lea.sflag [#allocation3], %s285
        %s287 = sand.u32 %s34, 1
        %s288 = smul.addr %s287, 768
        %s289 = scalar_lea.vmem [#allocation2], %s288
        // Predicated region
        $region45: #{tpu_custom_call.1} parent=43 // pred_check
          %p290 = pneg %p47
        $region46: #{tpu_custom_call.1} parent=43 // pred_check_branch
          %292 = sbr.rel (%p290) target = $region48
        $region47: #{tpu_custom_call.1} parent=43 // pred_region
          %293 = dma.done %s286, 12288
        $region48: #{tpu_custom_call.1} parent=43 // pred_fallthru
          _
        // Predicated region
        $region49: #{tpu_custom_call.1} parent=43 // pred_check
          %p294 = pneg %p68
        $region50: #{tpu_custom_call.1} parent=43 // pred_check_branch
          %296 = sbr.rel (%p294) target = $region52
        $region51: #{tpu_custom_call.1} parent=43 // pred_region
          %297 = dma.done [#allocation6], 24576
        $region52: #{tpu_custom_call.1} parent=43 // pred_fallthru
          _
        // Predicated region
        $region53: #{tpu_custom_call.1} parent=43 // pred_check
          %p298 = pneg %p89
        $region54: #{tpu_custom_call.1} parent=43 // pred_check_branch
          %300 = sbr.rel (%p298) target = $region56
        $region55: #{tpu_custom_call.1} parent=43 // pred_region
          %301 = dma.done [#allocation6], 64
        $region56: #{tpu_custom_call.1} parent=43 // pred_fallthru
          _
        // Predicated region
        $region57: #{tpu_custom_call.1} parent=43 // pred_check
          %p302 = pneg %p110
        $region58: #{tpu_custom_call.1} parent=43 // pred_check_branch
          %304 = sbr.rel (%p302) target = $region60
        $region59: #{tpu_custom_call.1} parent=43 // pred_region
          %305 = dma.done [#allocation9], 64
        $region60: #{tpu_custom_call.1} parent=43 // pred_fallthru
          _
        // Predicated region
        $region61: #{tpu_custom_call.1} parent=43 // pred_check
          %p306 = pneg %p131
        $region62: #{tpu_custom_call.1} parent=43 // pred_check_branch
          %308 = sbr.rel (%p306) target = $region64
        $region63: #{tpu_custom_call.1} parent=43 // pred_region
          %309 = dma.done [#allocation9], 6144
        $region64: #{tpu_custom_call.1} parent=43 // pred_fallthru
          _
        // Predicated region
        $region65: #{tpu_custom_call.1} parent=43 // pred_check
          %p310 = pneg %p152
        $region66: #{tpu_custom_call.1} parent=43 // pred_check_branch
          %312 = sbr.rel (%p310) target = $region68
        $region67: #{tpu_custom_call.1} parent=43 // pred_region
          %313 = dma.done [#allocation12], 16
        $region68: #{tpu_custom_call.1} parent=43 // pred_fallthru
          _
        %s314 = sand.u32 %s34, 1
        %s315 = scalar_lea.sflag [#allocation3], %s314
        %s316 = sand.u32 %s34, 1
        %s317 = smul.addr %s316, 768
        %s318 = scalar_lea.vmem [#allocation2], %s317
        %p319 = pneg %p47
        %p320 = pneg %p44
        %p321 = pneg %p68
        %p322 = pneg %p65
        %p323 = pneg %p89
        %p324 = pneg %p86
        %p325 = pneg %p110
        %p326 = pneg %p107
        %p327 = pneg %p131
        %p328 = pneg %p128
        %p329 = pneg %p152
        %p330 = pneg %p149
        %p331 = pneg %p178
        %p332 = pneg %p175
        %s333 = sand.u32 %s165, 1
        %s334 = scalar_lea.sflag [#allocation4], %s333
        %s335 = sand.u32 %s165, 1
        %s336 = smul.addr %s335, 2
        %s337 = scalar_lea.vmem [#allocation13], %s336
        %s338 = smul.u32 2, %s26
        %v340 = vld [vmem:[%s289] sm:$0xff]
        %v341 = vld [vmem:[%s289 + $0x8] sm:$0xff]
        %v342 = vld [vmem:[%s289 + $0x10] sm:$0xff]
        %v343 = vld [vmem:[%s289 + $0x18] sm:$0xff]
        %v344 = vld [vmem:[%s289 + $0x20] sm:$0xff]
        %v345 = vld [vmem:[%s289 + $0x28] sm:$0xff]
        %v346 = vld [vmem:[%s289 + $0x30] sm:$0xff]
        %v347 = vld [vmem:[%s289 + $0x38] sm:$0xff]
        %v348 = vld [vmem:[%s289 + $0x40] sm:$0xff]
        %v349 = vld [vmem:[%s289 + $0x48] sm:$0xff]
        %v350 = vld [vmem:[%s289 + $0x50] sm:$0xff]
        %v351 = vld [vmem:[%s289 + $0x58] sm:$0xff]
        %v352 = vld [vmem:[%s289 + $0x60] sm:$0xff]
        %v353 = vld [vmem:[%s289 + $0x68] sm:$0xff]
        %v354 = vld [vmem:[%s289 + $0x70] sm:$0xff]
        %v355 = vld [vmem:[%s289 + $0x78] sm:$0xff]
        %v356 = vld [vmem:[%s289 + $0x80] sm:$0xff]
        %v357 = vld [vmem:[%s289 + $0x88] sm:$0xff]
        %v358 = vld [vmem:[%s289 + $0x90] sm:$0xff]
        %v359 = vld [vmem:[%s289 + $0x98] sm:$0xff]
        %v360 = vld [vmem:[%s289 + $0xa0] sm:$0xff]
        %v361 = vld [vmem:[%s289 + $0xa8] sm:$0xff]
        %v362 = vld [vmem:[%s289 + $0xb0] sm:$0xff]
        %v363 = vld [vmem:[%s289 + $0xb8] sm:$0xff]
        %v364 = vld [vmem:[%s289 + $0xc0] sm:$0xff]
        %v365 = vld [vmem:[%s289 + $0xc8] sm:$0xff]
        %v366 = vld [vmem:[%s289 + $0xd0] sm:$0xff]
        %v367 = vld [vmem:[%s289 + $0xd8] sm:$0xff]
        %v368 = vld [vmem:[%s289 + $0xe0] sm:$0xff]
        %v369 = vld [vmem:[%s289 + $0xe8] sm:$0xff]
        %v370 = vld [vmem:[%s289 + $0xf0] sm:$0xff]
        %v371 = vld [vmem:[%s289 + $0xf8] sm:$0xff]
        %v372 = vld [vmem:[%s289 + $0x100] sm:$0xff]
        %v373 = vld [vmem:[%s289 + $0x108] sm:$0xff]
        %v374 = vld [vmem:[%s289 + $0x110] sm:$0xff]
        %v375 = vld [vmem:[%s289 + $0x118] sm:$0xff]
        %v376 = vld [vmem:[%s289 + $0x120] sm:$0xff]
        %v377 = vld [vmem:[%s289 + $0x128] sm:$0xff]
        %v378 = vld [vmem:[%s289 + $0x130] sm:$0xff]
        %v379 = vld [vmem:[%s289 + $0x138] sm:$0xff]
        %v380 = vld [vmem:[%s289 + $0x140] sm:$0xff]
        %v381 = vld [vmem:[%s289 + $0x148] sm:$0xff]
        %v382 = vld [vmem:[%s289 + $0x150] sm:$0xff]
        %v383 = vld [vmem:[%s289 + $0x158] sm:$0xff]
        %v384 = vld [vmem:[%s289 + $0x160] sm:$0xff]
        %v385 = vld [vmem:[%s289 + $0x168] sm:$0xff]
        %v386 = vld [vmem:[%s289 + $0x170] sm:$0xff]
        %v387 = vld [vmem:[%s289 + $0x178] sm:$0xff]
        %v388 = vld [vmem:[%s289 + $0x180] sm:$0xff]
        %v389 = vld [vmem:[%s289 + $0x188] sm:$0xff]
        %v390 = vld [vmem:[%s289 + $0x190] sm:$0xff]
        %v391 = vld [vmem:[%s289 + $0x198] sm:$0xff]
        %v392 = vld [vmem:[%s289 + $0x1a0] sm:$0xff]
        %v393 = vld [vmem:[%s289 + $0x1a8] sm:$0xff]
        %v394 = vld [vmem:[%s289 + $0x1b0] sm:$0xff]
        %v395 = vld [vmem:[%s289 + $0x1b8] sm:$0xff]
        %v396 = vld [vmem:[%s289 + $0x1c0] sm:$0xff]
        %v397 = vld [vmem:[%s289 + $0x1c8] sm:$0xff]
        %v398 = vld [vmem:[%s289 + $0x1d0] sm:$0xff]
        %v399 = vld [vmem:[%s289 + $0x1d8] sm:$0xff]
        %v400 = vld [vmem:[%s289 + $0x1e0] sm:$0xff]
        %v401 = vld [vmem:[%s289 + $0x1e8] sm:$0xff]
        %v402 = vld [vmem:[%s289 + $0x1f0] sm:$0xff]
        %v403 = vld [vmem:[%s289 + $0x1f8] sm:$0xff]
        %v404 = vld [vmem:[%s289 + $0x200] sm:$0xff]
        %v405 = vld [vmem:[%s289 + $0x208] sm:$0xff]
        %v406 = vld [vmem:[%s289 + $0x210] sm:$0xff]
        %v407 = vld [vmem:[%s289 + $0x218] sm:$0xff]
        %v408 = vld [vmem:[%s289 + $0x220] sm:$0xff]
        %v409 = vld [vmem:[%s289 + $0x228] sm:$0xff]
        %v410 = vld [vmem:[%s289 + $0x230] sm:$0xff]
        %v411 = vld [vmem:[%s289 + $0x238] sm:$0xff]
        %v412 = vld [vmem:[%s289 + $0x240] sm:$0xff]
        %v413 = vld [vmem:[%s289 + $0x248] sm:$0xff]
        %v414 = vld [vmem:[%s289 + $0x250] sm:$0xff]
        %v415 = vld [vmem:[%s289 + $0x258] sm:$0xff]
        %v416 = vld [vmem:[%s289 + $0x260] sm:$0xff]
        %v417 = vld [vmem:[%s289 + $0x268] sm:$0xff]
        %v418 = vld [vmem:[%s289 + $0x270] sm:$0xff]
        %v419 = vld [vmem:[%s289 + $0x278] sm:$0xff]
        %v420 = vld [vmem:[%s289 + $0x280] sm:$0xff]
        %v421 = vld [vmem:[%s289 + $0x288] sm:$0xff]
        %v422 = vld [vmem:[%s289 + $0x290] sm:$0xff]
        %v423 = vld [vmem:[%s289 + $0x298] sm:$0xff]
        %v424 = vld [vmem:[%s289 + $0x2a0] sm:$0xff]
        %v425 = vld [vmem:[%s289 + $0x2a8] sm:$0xff]
        %v426 = vld [vmem:[%s289 + $0x2b0] sm:$0xff]
        %v427 = vld [vmem:[%s289 + $0x2b8] sm:$0xff]
        %v428 = vld [vmem:[%s289 + $0x2c0] sm:$0xff]
        %v429 = vld [vmem:[%s289 + $0x2c8] sm:$0xff]
        %v430 = vld [vmem:[%s289 + $0x2d0] sm:$0xff]
        %v431 = vld [vmem:[%s289 + $0x2d8] sm:$0xff]
        %v432 = vld [vmem:[%s289 + $0x2e0] sm:$0xff]
        %v433 = vld [vmem:[%s289 + $0x2e8] sm:$0xff]
        %v434 = vld [vmem:[%s289 + $0x2f0] sm:$0xff]
        %v435 = vld [vmem:[%s289 + $0x2f8] sm:$0xff]
        %v436 = vld [vmem:[#allocation5] sm:$0xff]
        %v437 = vld [vmem:[#allocation5 + $0x8] sm:$0xff]
        %v438 = vld [vmem:[#allocation5 + $0x10] sm:$0xff]
        %v439 = vld [vmem:[#allocation5 + $0x18] sm:$0xff]
        %v440 = vld [vmem:[#allocation5 + $0x20] sm:$0xff]
        %v441 = vld [vmem:[#allocation5 + $0x28] sm:$0xff]
        %v442 = vld [vmem:[#allocation5 + $0x30] sm:$0xff]
        %v443 = vld [vmem:[#allocation5 + $0x38] sm:$0xff]
        %v444 = vld [vmem:[#allocation5 + $0x40] sm:$0xff]
        %v445 = vld [vmem:[#allocation5 + $0x48] sm:$0xff]
        %v446 = vld [vmem:[#allocation5 + $0x50] sm:$0xff]
        %v447 = vld [vmem:[#allocation5 + $0x58] sm:$0xff]
        %v448 = vld [vmem:[#allocation5 + $0x60] sm:$0xff]
        %v449 = vld [vmem:[#allocation5 + $0x68] sm:$0xff]
        %v450 = vld [vmem:[#allocation5 + $0x70] sm:$0xff]
        %v451 = vld [vmem:[#allocation5 + $0x78] sm:$0xff]
        %v452 = vld [vmem:[#allocation5 + $0x80] sm:$0xff]
        %v453 = vld [vmem:[#allocation5 + $0x88] sm:$0xff]
        %v454 = vld [vmem:[#allocation5 + $0x90] sm:$0xff]
        %v455 = vld [vmem:[#allocation5 + $0x98] sm:$0xff]
        %v456 = vld [vmem:[#allocation5 + $0xa0] sm:$0xff]
        %v457 = vld [vmem:[#allocation5 + $0xa8] sm:$0xff]
        %v458 = vld [vmem:[#allocation5 + $0xb0] sm:$0xff]
        %v459 = vld [vmem:[#allocation5 + $0xb8] sm:$0xff]
        %v460 = vld [vmem:[#allocation5 + $0xc0] sm:$0xff]
        %v461 = vld [vmem:[#allocation5 + $0xc8] sm:$0xff]
        %v462 = vld [vmem:[#allocation5 + $0xd0] sm:$0xff]
        %v463 = vld [vmem:[#allocation5 + $0xd8] sm:$0xff]
        %v464 = vld [vmem:[#allocation5 + $0xe0] sm:$0xff]
        %v465 = vld [vmem:[#allocation5 + $0xe8] sm:$0xff]
        %v466 = vld [vmem:[#allocation5 + $0xf0] sm:$0xff]
        %v467 = vld [vmem:[#allocation5 + $0xf8] sm:$0xff]
        %v468 = vld [vmem:[#allocation5 + $0x100] sm:$0xff]
        %v469 = vld [vmem:[#allocation5 + $0x108] sm:$0xff]
        %v470 = vld [vmem:[#allocation5 + $0x110] sm:$0xff]
        %v471 = vld [vmem:[#allocation5 + $0x118] sm:$0xff]
        %v472 = vld [vmem:[#allocation5 + $0x120] sm:$0xff]
        %v473 = vld [vmem:[#allocation5 + $0x128] sm:$0xff]
        %v474 = vld [vmem:[#allocation5 + $0x130] sm:$0xff]
        %v475 = vld [vmem:[#allocation5 + $0x138] sm:$0xff]
        %v476 = vld [vmem:[#allocation5 + $0x140] sm:$0xff]
        %v477 = vld [vmem:[#allocation5 + $0x148] sm:$0xff]
        %v478 = vld [vmem:[#allocation5 + $0x150] sm:$0xff]
        %v479 = vld [vmem:[#allocation5 + $0x158] sm:$0xff]
        %v480 = vld [vmem:[#allocation5 + $0x160] sm:$0xff]
        %v481 = vld [vmem:[#allocation5 + $0x168] sm:$0xff]
        %v482 = vld [vmem:[#allocation5 + $0x170] sm:$0xff]
        %v483 = vld [vmem:[#allocation5 + $0x178] sm:$0xff]
        %v484 = vld [vmem:[#allocation5 + $0x180] sm:$0xff]
        %v485 = vld [vmem:[#allocation5 + $0x188] sm:$0xff]
        %v486 = vld [vmem:[#allocation5 + $0x190] sm:$0xff]
        %v487 = vld [vmem:[#allocation5 + $0x198] sm:$0xff]
        %v488 = vld [vmem:[#allocation5 + $0x1a0] sm:$0xff]
        %v489 = vld [vmem:[#allocation5 + $0x1a8] sm:$0xff]
        %v490 = vld [vmem:[#allocation5 + $0x1b0] sm:$0xff]
        %v491 = vld [vmem:[#allocation5 + $0x1b8] sm:$0xff]
        %v492 = vld [vmem:[#allocation5 + $0x1c0] sm:$0xff]
        %v493 = vld [vmem:[#allocation5 + $0x1c8] sm:$0xff]
        %v494 = vld [vmem:[#allocation5 + $0x1d0] sm:$0xff]
        %v495 = vld [vmem:[#allocation5 + $0x1d8] sm:$0xff]
        %v496 = vld [vmem:[#allocation5 + $0x1e0] sm:$0xff]
        %v497 = vld [vmem:[#allocation5 + $0x1e8] sm:$0xff]
        %v498 = vld [vmem:[#allocation5 + $0x1f0] sm:$0xff]
        %v499 = vld [vmem:[#allocation5 + $0x1f8] sm:$0xff]
        %v500 = vld [vmem:[#allocation5 + $0x200] sm:$0xff]
        %v501 = vld [vmem:[#allocation5 + $0x208] sm:$0xff]
        %v502 = vld [vmem:[#allocation5 + $0x210] sm:$0xff]
        %v503 = vld [vmem:[#allocation5 + $0x218] sm:$0xff]
        %v504 = vld [vmem:[#allocation5 + $0x220] sm:$0xff]
        %v505 = vld [vmem:[#allocation5 + $0x228] sm:$0xff]
        %v506 = vld [vmem:[#allocation5 + $0x230] sm:$0xff]
        %v507 = vld [vmem:[#allocation5 + $0x238] sm:$0xff]
        %v508 = vld [vmem:[#allocation5 + $0x240] sm:$0xff]
        %v509 = vld [vmem:[#allocation5 + $0x248] sm:$0xff]
        %v510 = vld [vmem:[#allocation5 + $0x250] sm:$0xff]
        %v511 = vld [vmem:[#allocation5 + $0x258] sm:$0xff]
        %v512 = vld [vmem:[#allocation5 + $0x260] sm:$0xff]
        %v513 = vld [vmem:[#allocation5 + $0x268] sm:$0xff]
        %v514 = vld [vmem:[#allocation5 + $0x270] sm:$0xff]
        %v515 = vld [vmem:[#allocation5 + $0x278] sm:$0xff]
        %v516 = vld [vmem:[#allocation5 + $0x280] sm:$0xff]
        %v517 = vld [vmem:[#allocation5 + $0x288] sm:$0xff]
        %v518 = vld [vmem:[#allocation5 + $0x290] sm:$0xff]
        %v519 = vld [vmem:[#allocation5 + $0x298] sm:$0xff]
        %v520 = vld [vmem:[#allocation5 + $0x2a0] sm:$0xff]
        %v521 = vld [vmem:[#allocation5 + $0x2a8] sm:$0xff]
        %v522 = vld [vmem:[#allocation5 + $0x2b0] sm:$0xff]
        %v523 = vld [vmem:[#allocation5 + $0x2b8] sm:$0xff]
        %v524 = vld [vmem:[#allocation5 + $0x2c0] sm:$0xff]
        %v525 = vld [vmem:[#allocation5 + $0x2c8] sm:$0xff]
        %v526 = vld [vmem:[#allocation5 + $0x2d0] sm:$0xff]
        %v527 = vld [vmem:[#allocation5 + $0x2d8] sm:$0xff]
        %v528 = vld [vmem:[#allocation5 + $0x2e0] sm:$0xff]
        %v529 = vld [vmem:[#allocation5 + $0x2e8] sm:$0xff]
        %v530 = vld [vmem:[#allocation5 + $0x2f0] sm:$0xff]
        %v531 = vld [vmem:[#allocation5 + $0x2f8] sm:$0xff]
        %v532 = vld [vmem:[#allocation5 + $0x300] sm:$0xff]
        %v533 = vld [vmem:[#allocation5 + $0x308] sm:$0xff]
        %v534 = vld [vmem:[#allocation5 + $0x310] sm:$0xff]
        %v535 = vld [vmem:[#allocation5 + $0x318] sm:$0xff]
        %v536 = vld [vmem:[#allocation5 + $0x320] sm:$0xff]
        %v537 = vld [vmem:[#allocation5 + $0x328] sm:$0xff]
        %v538 = vld [vmem:[#allocation5 + $0x330] sm:$0xff]
        %v539 = vld [vmem:[#allocation5 + $0x338] sm:$0xff]
        %v540 = vld [vmem:[#allocation5 + $0x340] sm:$0xff]
        %v541 = vld [vmem:[#allocation5 + $0x348] sm:$0xff]
        %v542 = vld [vmem:[#allocation5 + $0x350] sm:$0xff]
        %v543 = vld [vmem:[#allocation5 + $0x358] sm:$0xff]
        %v544 = vld [vmem:[#allocation5 + $0x360] sm:$0xff]
        %v545 = vld [vmem:[#allocation5 + $0x368] sm:$0xff]
        %v546 = vld [vmem:[#allocation5 + $0x370] sm:$0xff]
        %v547 = vld [vmem:[#allocation5 + $0x378] sm:$0xff]
        %v548 = vld [vmem:[#allocation5 + $0x380] sm:$0xff]
        %v549 = vld [vmem:[#allocation5 + $0x388] sm:$0xff]
        %v550 = vld [vmem:[#allocation5 + $0x390] sm:$0xff]
        %v551 = vld [vmem:[#allocation5 + $0x398] sm:$0xff]
        %v552 = vld [vmem:[#allocation5 + $0x3a0] sm:$0xff]
        %v553 = vld [vmem:[#allocation5 + $0x3a8] sm:$0xff]
        %v554 = vld [vmem:[#allocation5 + $0x3b0] sm:$0xff]
        %v555 = vld [vmem:[#allocation5 + $0x3b8] sm:$0xff]
        %v556 = vld [vmem:[#allocation5 + $0x3c0] sm:$0xff]
        %v557 = vld [vmem:[#allocation5 + $0x3c8] sm:$0xff]
        %v558 = vld [vmem:[#allocation5 + $0x3d0] sm:$0xff]
        %v559 = vld [vmem:[#allocation5 + $0x3d8] sm:$0xff]
        %v560 = vld [vmem:[#allocation5 + $0x3e0] sm:$0xff]
        %v561 = vld [vmem:[#allocation5 + $0x3e8] sm:$0xff]
        %v562 = vld [vmem:[#allocation5 + $0x3f0] sm:$0xff]
        %v563 = vld [vmem:[#allocation5 + $0x3f8] sm:$0xff]
        %v564 = vld [vmem:[#allocation5 + $0x400] sm:$0xff]
        %v565 = vld [vmem:[#allocation5 + $0x408] sm:$0xff]
        %v566 = vld [vmem:[#allocation5 + $0x410] sm:$0xff]
        %v567 = vld [vmem:[#allocation5 + $0x418] sm:$0xff]
        %v568 = vld [vmem:[#allocation5 + $0x420] sm:$0xff]
        %v569 = vld [vmem:[#allocation5 + $0x428] sm:$0xff]
        %v570 = vld [vmem:[#allocation5 + $0x430] sm:$0xff]
        %v571 = vld [vmem:[#allocation5 + $0x438] sm:$0xff]
        %v572 = vld [vmem:[#allocation5 + $0x440] sm:$0xff]
        %v573 = vld [vmem:[#allocation5 + $0x448] sm:$0xff]
        %v574 = vld [vmem:[#allocation5 + $0x450] sm:$0xff]
        %v575 = vld [vmem:[#allocation5 + $0x458] sm:$0xff]
        %v576 = vld [vmem:[#allocation5 + $0x460] sm:$0xff]
        %v577 = vld [vmem:[#allocation5 + $0x468] sm:$0xff]
        %v578 = vld [vmem:[#allocation5 + $0x470] sm:$0xff]
        %v579 = vld [vmem:[#allocation5 + $0x478] sm:$0xff]
        %v580 = vld [vmem:[#allocation5 + $0x480] sm:$0xff]
        %v581 = vld [vmem:[#allocation5 + $0x488] sm:$0xff]
        %v582 = vld [vmem:[#allocation5 + $0x490] sm:$0xff]
        %v583 = vld [vmem:[#allocation5 + $0x498] sm:$0xff]
        %v584 = vld [vmem:[#allocation5 + $0x4a0] sm:$0xff]
        %v585 = vld [vmem:[#allocation5 + $0x4a8] sm:$0xff]
        %v586 = vld [vmem:[#allocation5 + $0x4b0] sm:$0xff]
        %v587 = vld [vmem:[#allocation5 + $0x4b8] sm:$0xff]
        %v588 = vld [vmem:[#allocation5 + $0x4c0] sm:$0xff]
        %v589 = vld [vmem:[#allocation5 + $0x4c8] sm:$0xff]
        %v590 = vld [vmem:[#allocation5 + $0x4d0] sm:$0xff]
        %v591 = vld [vmem:[#allocation5 + $0x4d8] sm:$0xff]
        %v592 = vld [vmem:[#allocation5 + $0x4e0] sm:$0xff]
        %v593 = vld [vmem:[#allocation5 + $0x4e8] sm:$0xff]
        %v594 = vld [vmem:[#allocation5 + $0x4f0] sm:$0xff]
        %v595 = vld [vmem:[#allocation5 + $0x4f8] sm:$0xff]
        %v596 = vld [vmem:[#allocation5 + $0x500] sm:$0xff]
        %v597 = vld [vmem:[#allocation5 + $0x508] sm:$0xff]
        %v598 = vld [vmem:[#allocation5 + $0x510] sm:$0xff]
        %v599 = vld [vmem:[#allocation5 + $0x518] sm:$0xff]
        %v600 = vld [vmem:[#allocation5 + $0x520] sm:$0xff]
        %v601 = vld [vmem:[#allocation5 + $0x528] sm:$0xff]
        %v602 = vld [vmem:[#allocation5 + $0x530] sm:$0xff]
        %v603 = vld [vmem:[#allocation5 + $0x538] sm:$0xff]
        %v604 = vld [vmem:[#allocation5 + $0x540] sm:$0xff]
        %v605 = vld [vmem:[#allocation5 + $0x548] sm:$0xff]
        %v606 = vld [vmem:[#allocation5 + $0x550] sm:$0xff]
        %v607 = vld [vmem:[#allocation5 + $0x558] sm:$0xff]
        %v608 = vld [vmem:[#allocation5 + $0x560] sm:$0xff]
        %v609 = vld [vmem:[#allocation5 + $0x568] sm:$0xff]
        %v610 = vld [vmem:[#allocation5 + $0x570] sm:$0xff]
        %v611 = vld [vmem:[#allocation5 + $0x578] sm:$0xff]
        %v612 = vld [vmem:[#allocation5 + $0x580] sm:$0xff]
        %v613 = vld [vmem:[#allocation5 + $0x588] sm:$0xff]
        %v614 = vld [vmem:[#allocation5 + $0x590] sm:$0xff]
        %v615 = vld [vmem:[#allocation5 + $0x598] sm:$0xff]
        %v616 = vld [vmem:[#allocation5 + $0x5a0] sm:$0xff]
        %v617 = vld [vmem:[#allocation5 + $0x5a8] sm:$0xff]
        %v618 = vld [vmem:[#allocation5 + $0x5b0] sm:$0xff]
        %v619 = vld [vmem:[#allocation5 + $0x5b8] sm:$0xff]
        %v620 = vld [vmem:[#allocation5 + $0x5c0] sm:$0xff]
        %v621 = vld [vmem:[#allocation5 + $0x5c8] sm:$0xff]
        %v622 = vld [vmem:[#allocation5 + $0x5d0] sm:$0xff]
        %v623 = vld [vmem:[#allocation5 + $0x5d8] sm:$0xff]
        %v624 = vld [vmem:[#allocation5 + $0x5e0] sm:$0xff]
        %v625 = vld [vmem:[#allocation5 + $0x5e8] sm:$0xff]
        %v626 = vld [vmem:[#allocation5 + $0x5f0] sm:$0xff]
        %v627 = vld [vmem:[#allocation5 + $0x5f8] sm:$0xff]
        %v628 = vld [vmem:[#allocation7] sm:$0xf]
        %v630 = vlaneseq
        %v631 = vshrl.u32 %v630, 7
        %v632 = vsub.s32 0, %v631
        %v633 = vrot.slane %v628, %v632
        %v634 = vlaneseq
        %v635 = vshrl.u32 %v634, 7
        %v636 = vsub.s32 1, %v635
        %v637 = vrot.slane %v628, %v636
        %v638 = vlaneseq
        %v639 = vshrl.u32 %v638, 7
        %v640 = vsub.s32 2, %v639
        %v641 = vrot.slane %v628, %v640
        %v642 = vlaneseq
        %v643 = vshrl.u32 %v642, 7
        %v644 = vsub.s32 3, %v643
        %v645 = vrot.slane %v628, %v644
        %v746 = vunpack.c.l.b16 %v340
        %v747 = vunpack.c.h.b16 %v340
        %v748 = vunpack.c.l.b16 %v341
        %v749 = vunpack.c.h.b16 %v341
        %v750 = vunpack.c.l.b16 %v342
        %v751 = vunpack.c.h.b16 %v342
        %v752 = vunpack.c.l.b16 %v343
        %v753 = vunpack.c.h.b16 %v343
        %v754 = vunpack.c.l.b16 %v344
        %v755 = vunpack.c.h.b16 %v344
        %v756 = vunpack.c.l.b16 %v345
        %v757 = vunpack.c.h.b16 %v345
        %v758 = vunpack.c.l.b16 %v346
        %v759 = vunpack.c.h.b16 %v346
        %v760 = vunpack.c.l.b16 %v347
        %v761 = vunpack.c.h.b16 %v347
        %v762 = vunpack.c.l.b16 %v348
        %v763 = vunpack.c.h.b16 %v348
        %v764 = vunpack.c.l.b16 %v349
        %v765 = vunpack.c.h.b16 %v349
        %v766 = vunpack.c.l.b16 %v350
        %v767 = vunpack.c.h.b16 %v350
        %v768 = vunpack.c.l.b16 %v351
        %v769 = vunpack.c.h.b16 %v351
        %v770 = vunpack.c.l.b16 %v352
        %v771 = vunpack.c.h.b16 %v352
        %v772 = vunpack.c.l.b16 %v353
        %v773 = vunpack.c.h.b16 %v353
        %v774 = vunpack.c.l.b16 %v354
        %v775 = vunpack.c.h.b16 %v354
        %v776 = vunpack.c.l.b16 %v355
        %v777 = vunpack.c.h.b16 %v355
        %v778 = vunpack.c.l.b16 %v356
        %v779 = vunpack.c.h.b16 %v356
        %v780 = vunpack.c.l.b16 %v357
        %v781 = vunpack.c.h.b16 %v357
        %v782 = vunpack.c.l.b16 %v358
        %v783 = vunpack.c.h.b16 %v358
        %v784 = vunpack.c.l.b16 %v359
        %v785 = vunpack.c.h.b16 %v359
        %v786 = vunpack.c.l.b16 %v360
        %v787 = vunpack.c.h.b16 %v360
        %v788 = vunpack.c.l.b16 %v361
        %v789 = vunpack.c.h.b16 %v361
        %v790 = vunpack.c.l.b16 %v362
        %v791 = vunpack.c.h.b16 %v362
        %v792 = vunpack.c.l.b16 %v363
        %v793 = vunpack.c.h.b16 %v363
        %v794 = vunpack.c.l.b16 %v364
        %v795 = vunpack.c.h.b16 %v364
        %v796 = vunpack.c.l.b16 %v365
        %v797 = vunpack.c.h.b16 %v365
        %v798 = vunpack.c.l.b16 %v366
        %v799 = vunpack.c.h.b16 %v366
        %v800 = vunpack.c.l.b16 %v367
        %v801 = vunpack.c.h.b16 %v367
        %v802 = vunpack.c.l.b16 %v368
        %v803 = vunpack.c.h.b16 %v368
        %v804 = vunpack.c.l.b16 %v369
        %v805 = vunpack.c.h.b16 %v369
        %v806 = vunpack.c.l.b16 %v370
        %v807 = vunpack.c.h.b16 %v370
        %v808 = vunpack.c.l.b16 %v371
        %v809 = vunpack.c.h.b16 %v371
        %v810 = vunpack.c.l.b16 %v372
        %v811 = vunpack.c.h.b16 %v372
        %v812 = vunpack.c.l.b16 %v373
        %v813 = vunpack.c.h.b16 %v373
        %v814 = vunpack.c.l.b16 %v374
        %v815 = vunpack.c.h.b16 %v374
        %v816 = vunpack.c.l.b16 %v375
        %v817 = vunpack.c.h.b16 %v375
        %v818 = vunpack.c.l.b16 %v376
        %v819 = vunpack.c.h.b16 %v376
        %v820 = vunpack.c.l.b16 %v377
        %v821 = vunpack.c.h.b16 %v377
        %v822 = vunpack.c.l.b16 %v378
        %v823 = vunpack.c.h.b16 %v378
        %v824 = vunpack.c.l.b16 %v379
        %v825 = vunpack.c.h.b16 %v379
        %v826 = vunpack.c.l.b16 %v380
        %v827 = vunpack.c.h.b16 %v380
        %v828 = vunpack.c.l.b16 %v381
        %v829 = vunpack.c.h.b16 %v381
        %v830 = vunpack.c.l.b16 %v382
        %v831 = vunpack.c.h.b16 %v382
        %v832 = vunpack.c.l.b16 %v383
        %v833 = vunpack.c.h.b16 %v383
        %v834 = vunpack.c.l.b16 %v384
        %v835 = vunpack.c.h.b16 %v384
        %v836 = vunpack.c.l.b16 %v385
        %v837 = vunpack.c.h.b16 %v385
        %v838 = vunpack.c.l.b16 %v386
        %v839 = vunpack.c.h.b16 %v386
        %v840 = vunpack.c.l.b16 %v387
        %v841 = vunpack.c.h.b16 %v387
        %v842 = vunpack.c.l.b16 %v388
        %v843 = vunpack.c.h.b16 %v388
        %v844 = vunpack.c.l.b16 %v389
        %v845 = vunpack.c.h.b16 %v389
        %v846 = vunpack.c.l.b16 %v390
        %v847 = vunpack.c.h.b16 %v390
        %v848 = vunpack.c.l.b16 %v391
        %v849 = vunpack.c.h.b16 %v391
        %v850 = vunpack.c.l.b16 %v392
        %v851 = vunpack.c.h.b16 %v392
        %v852 = vunpack.c.l.b16 %v393
        %v853 = vunpack.c.h.b16 %v393
        %v854 = vunpack.c.l.b16 %v394
        %v855 = vunpack.c.h.b16 %v394
        %v856 = vunpack.c.l.b16 %v395
        %v857 = vunpack.c.h.b16 %v395
        %v858 = vunpack.c.l.b16 %v396
        %v859 = vunpack.c.h.b16 %v396
        %v860 = vunpack.c.l.b16 %v397
        %v861 = vunpack.c.h.b16 %v397
        %v862 = vunpack.c.l.b16 %v398
        %v863 = vunpack.c.h.b16 %v398
        %v864 = vunpack.c.l.b16 %v399
        %v865 = vunpack.c.h.b16 %v399
        %v866 = vunpack.c.l.b16 %v400
        %v867 = vunpack.c.h.b16 %v400
        %v868 = vunpack.c.l.b16 %v401
        %v869 = vunpack.c.h.b16 %v401
        %v870 = vunpack.c.l.b16 %v402
        %v871 = vunpack.c.h.b16 %v402
        %v872 = vunpack.c.l.b16 %v403
        %v873 = vunpack.c.h.b16 %v403
        %v874 = vunpack.c.l.b16 %v404
        %v875 = vunpack.c.h.b16 %v404
        %v876 = vunpack.c.l.b16 %v405
        %v877 = vunpack.c.h.b16 %v405
        %v878 = vunpack.c.l.b16 %v406
        %v879 = vunpack.c.h.b16 %v406
        %v880 = vunpack.c.l.b16 %v407
        %v881 = vunpack.c.h.b16 %v407
        %v882 = vunpack.c.l.b16 %v408
        %v883 = vunpack.c.h.b16 %v408
        %v884 = vunpack.c.l.b16 %v409
        %v885 = vunpack.c.h.b16 %v409
        %v886 = vunpack.c.l.b16 %v410
        %v887 = vunpack.c.h.b16 %v410
        %v888 = vunpack.c.l.b16 %v411
        %v889 = vunpack.c.h.b16 %v411
        %v890 = vunpack.c.l.b16 %v412
        %v891 = vunpack.c.h.b16 %v412
        %v892 = vunpack.c.l.b16 %v413
        %v893 = vunpack.c.h.b16 %v413
        %v894 = vunpack.c.l.b16 %v414
        %v895 = vunpack.c.h.b16 %v414
        %v896 = vunpack.c.l.b16 %v415
        %v897 = vunpack.c.h.b16 %v415
        %v898 = vunpack.c.l.b16 %v416
        %v899 = vunpack.c.h.b16 %v416
        %v900 = vunpack.c.l.b16 %v417
        %v901 = vunpack.c.h.b16 %v417
        %v902 = vunpack.c.l.b16 %v418
        %v903 = vunpack.c.h.b16 %v418
        %v904 = vunpack.c.l.b16 %v419
        %v905 = vunpack.c.h.b16 %v419
        %v906 = vunpack.c.l.b16 %v420
        %v907 = vunpack.c.h.b16 %v420
        %v908 = vunpack.c.l.b16 %v421
        %v909 = vunpack.c.h.b16 %v421
        %v910 = vunpack.c.l.b16 %v422
        %v911 = vunpack.c.h.b16 %v422
        %v912 = vunpack.c.l.b16 %v423
        %v913 = vunpack.c.h.b16 %v423
        %v914 = vunpack.c.l.b16 %v424
        %v915 = vunpack.c.h.b16 %v424
        %v916 = vunpack.c.l.b16 %v425
        %v917 = vunpack.c.h.b16 %v425
        %v918 = vunpack.c.l.b16 %v426
        %v919 = vunpack.c.h.b16 %v426
        %v920 = vunpack.c.l.b16 %v427
        %v921 = vunpack.c.h.b16 %v427
        %v922 = vunpack.c.l.b16 %v428
        %v923 = vunpack.c.h.b16 %v428
        %v924 = vunpack.c.l.b16 %v429
        %v925 = vunpack.c.h.b16 %v429
        %v926 = vunpack.c.l.b16 %v430
        %v927 = vunpack.c.h.b16 %v430
        %v928 = vunpack.c.l.b16 %v431
        %v929 = vunpack.c.h.b16 %v431
        %v930 = vunpack.c.l.b16 %v432
        %v931 = vunpack.c.h.b16 %v432
        %v932 = vunpack.c.l.b16 %v433
        %v933 = vunpack.c.h.b16 %v433
        %v934 = vunpack.c.l.b16 %v434
        %v935 = vunpack.c.h.b16 %v434
        %v936 = vunpack.c.l.b16 %v435
        %v937 = vunpack.c.h.b16 %v435
        %v938 = vpack.c.b16 %v752, %v746
        %v939 = vpack.c.b16 %v753, %v747
        %v940 = vpack.c.b16 %v754, %v748
        %v941 = vpack.c.b16 %v755, %v749
        %v942 = vpack.c.b16 %v756, %v750
        %v943 = vpack.c.b16 %v757, %v751
        %v944 = vpack.c.b16 %v764, %v758
        %v945 = vpack.c.b16 %v765, %v759
        %v946 = vpack.c.b16 %v766, %v760
        %v947 = vpack.c.b16 %v767, %v761
        %v948 = vpack.c.b16 %v768, %v762
        %v949 = vpack.c.b16 %v769, %v763
        %v950 = vpack.c.b16 %v776, %v770
        %v951 = vpack.c.b16 %v777, %v771
        %v952 = vpack.c.b16 %v778, %v772
        %v953 = vpack.c.b16 %v779, %v773
        %v954 = vpack.c.b16 %v780, %v774
        %v955 = vpack.c.b16 %v781, %v775
        %v956 = vpack.c.b16 %v788, %v782
        %v957 = vpack.c.b16 %v789, %v783
        %v958 = vpack.c.b16 %v790, %v784
        %v959 = vpack.c.b16 %v791, %v785
        %v960 = vpack.c.b16 %v792, %v786
        %v961 = vpack.c.b16 %v793, %v787
        %v962 = vpack.c.b16 %v800, %v794
        %v963 = vpack.c.b16 %v801, %v795
        %v964 = vpack.c.b16 %v802, %v796
        %v965 = vpack.c.b16 %v803, %v797
        %v966 = vpack.c.b16 %v804, %v798
        %v967 = vpack.c.b16 %v805, %v799
        %v968 = vpack.c.b16 %v812, %v806
        %v969 = vpack.c.b16 %v813, %v807
        %v970 = vpack.c.b16 %v814, %v808
        %v971 = vpack.c.b16 %v815, %v809
        %v972 = vpack.c.b16 %v816, %v810
        %v973 = vpack.c.b16 %v817, %v811
        %v974 = vpack.c.b16 %v824, %v818
        %v975 = vpack.c.b16 %v825, %v819
        %v976 = vpack.c.b16 %v826, %v820
        %v977 = vpack.c.b16 %v827, %v821
        %v978 = vpack.c.b16 %v828, %v822
        %v979 = vpack.c.b16 %v829, %v823
        %v980 = vpack.c.b16 %v836, %v830
        %v981 = vpack.c.b16 %v837, %v831
        %v982 = vpack.c.b16 %v838, %v832
        %v983 = vpack.c.b16 %v839, %v833
        %v984 = vpack.c.b16 %v840, %v834
        %v985 = vpack.c.b16 %v841, %v835
        %v986 = vpack.c.b16 %v848, %v842
        %v987 = vpack.c.b16 %v849, %v843
        %v988 = vpack.c.b16 %v850, %v844
        %v989 = vpack.c.b16 %v851, %v845
        %v990 = vpack.c.b16 %v852, %v846
        %v991 = vpack.c.b16 %v853, %v847
        %v992 = vpack.c.b16 %v860, %v854
        %v993 = vpack.c.b16 %v861, %v855
        %v994 = vpack.c.b16 %v862, %v856
        %v995 = vpack.c.b16 %v863, %v857
        %v996 = vpack.c.b16 %v864, %v858
        %v997 = vpack.c.b16 %v865, %v859
        %v998 = vpack.c.b16 %v872, %v866
        %v999 = vpack.c.b16 %v873, %v867
        %v1000 = vpack.c.b16 %v874, %v868
        %v1001 = vpack.c.b16 %v875, %v869
        %v1002 = vpack.c.b16 %v876, %v870
        %v1003 = vpack.c.b16 %v877, %v871
        %v1004 = vpack.c.b16 %v884, %v878
        %v1005 = vpack.c.b16 %v885, %v879
        %v1006 = vpack.c.b16 %v886, %v880
        %v1007 = vpack.c.b16 %v887, %v881
        %v1008 = vpack.c.b16 %v888, %v882
        %v1009 = vpack.c.b16 %v889, %v883
        %v1010 = vpack.c.b16 %v896, %v890
        %v1011 = vpack.c.b16 %v897, %v891
        %v1012 = vpack.c.b16 %v898, %v892
        %v1013 = vpack.c.b16 %v899, %v893
        %v1014 = vpack.c.b16 %v900, %v894
        %v1015 = vpack.c.b16 %v901, %v895
        %v1016 = vpack.c.b16 %v908, %v902
        %v1017 = vpack.c.b16 %v909, %v903
        %v1018 = vpack.c.b16 %v910, %v904
        %v1019 = vpack.c.b16 %v911, %v905
        %v1020 = vpack.c.b16 %v912, %v906
        %v1021 = vpack.c.b16 %v913, %v907
        %v1022 = vpack.c.b16 %v920, %v914
        %v1023 = vpack.c.b16 %v921, %v915
        %v1024 = vpack.c.b16 %v922, %v916
        %v1025 = vpack.c.b16 %v923, %v917
        %v1026 = vpack.c.b16 %v924, %v918
        %v1027 = vpack.c.b16 %v925, %v919
        %v1028 = vpack.c.b16 %v932, %v926
        %v1029 = vpack.c.b16 %v933, %v927
        %v1030 = vpack.c.b16 %v934, %v928
        %v1031 = vpack.c.b16 %v935, %v929
        %v1032 = vpack.c.b16 %v936, %v930
        %v1033 = vpack.c.b16 %v937, %v931
        %v1322 = vunpack.c.l.b16 %v436
        %v1323 = vunpack.c.h.b16 %v436
        %v1324 = vunpack.c.l.b16 %v437
        %v1325 = vunpack.c.h.b16 %v437
        %v1326 = vunpack.c.l.b16 %v438
        %v1327 = vunpack.c.h.b16 %v438
        %v1328 = vunpack.c.l.b16 %v439
        %v1329 = vunpack.c.h.b16 %v439
        %v1330 = vunpack.c.l.b16 %v440
        %v1331 = vunpack.c.h.b16 %v440
        %v1332 = vunpack.c.l.b16 %v441
        %v1333 = vunpack.c.h.b16 %v441
        %v1334 = vunpack.c.l.b16 %v442
        %v1335 = vunpack.c.h.b16 %v442
        %v1336 = vunpack.c.l.b16 %v443
        %v1337 = vunpack.c.h.b16 %v443
        %v1338 = vunpack.c.l.b16 %v444
        %v1339 = vunpack.c.h.b16 %v444
        %v1340 = vunpack.c.l.b16 %v445
        %v1341 = vunpack.c.h.b16 %v445
        %v1342 = vunpack.c.l.b16 %v446
        %v1343 = vunpack.c.h.b16 %v446
        %v1344 = vunpack.c.l.b16 %v447
        %v1345 = vunpack.c.h.b16 %v447
        %v1346 = vunpack.c.l.b16 %v448
        %v1347 = vunpack.c.h.b16 %v448
        %v1348 = vunpack.c.l.b16 %v449
        %v1349 = vunpack.c.h.b16 %v449
        %v1350 = vunpack.c.l.b16 %v450
        %v1351 = vunpack.c.h.b16 %v450
        %v1352 = vunpack.c.l.b16 %v451
        %v1353 = vunpack.c.h.b16 %v451
        %v1354 = vunpack.c.l.b16 %v452
        %v1355 = vunpack.c.h.b16 %v452
        %v1356 = vunpack.c.l.b16 %v453
        %v1357 = vunpack.c.h.b16 %v453
        %v1358 = vunpack.c.l.b16 %v454
        %v1359 = vunpack.c.h.b16 %v454
        %v1360 = vunpack.c.l.b16 %v455
        %v1361 = vunpack.c.h.b16 %v455
        %v1362 = vunpack.c.l.b16 %v456
        %v1363 = vunpack.c.h.b16 %v456
        %v1364 = vunpack.c.l.b16 %v457
        %v1365 = vunpack.c.h.b16 %v457
        %v1366 = vunpack.c.l.b16 %v458
        %v1367 = vunpack.c.h.b16 %v458
        %v1368 = vunpack.c.l.b16 %v459
        %v1369 = vunpack.c.h.b16 %v459
        %v1370 = vunpack.c.l.b16 %v460
        %v1371 = vunpack.c.h.b16 %v460
        %v1372 = vunpack.c.l.b16 %v461
        %v1373 = vunpack.c.h.b16 %v461
        %v1374 = vunpack.c.l.b16 %v462
        %v1375 = vunpack.c.h.b16 %v462
        %v1376 = vunpack.c.l.b16 %v463
        %v1377 = vunpack.c.h.b16 %v463
        %v1378 = vunpack.c.l.b16 %v464
        %v1379 = vunpack.c.h.b16 %v464
        %v1380 = vunpack.c.l.b16 %v465
        %v1381 = vunpack.c.h.b16 %v465
        %v1382 = vunpack.c.l.b16 %v466
        %v1383 = vunpack.c.h.b16 %v466
        %v1384 = vunpack.c.l.b16 %v467
        %v1385 = vunpack.c.h.b16 %v467
        %v1386 = vunpack.c.l.b16 %v468
        %v1387 = vunpack.c.h.b16 %v468
        %v1388 = vunpack.c.l.b16 %v469
        %v1389 = vunpack.c.h.b16 %v469
        %v1390 = vunpack.c.l.b16 %v470
        %v1391 = vunpack.c.h.b16 %v470
        %v1392 = vunpack.c.l.b16 %v471
        %v1393 = vunpack.c.h.b16 %v471
        %v1394 = vunpack.c.l.b16 %v472
        %v1395 = vunpack.c.h.b16 %v472
        %v1396 = vunpack.c.l.b16 %v473
        %v1397 = vunpack.c.h.b16 %v473
        %v1398 = vunpack.c.l.b16 %v474
        %v1399 = vunpack.c.h.b16 %v474
        %v1400 = vunpack.c.l.b16 %v475
        %v1401 = vunpack.c.h.b16 %v475
        %v1402 = vunpack.c.l.b16 %v476
        %v1403 = vunpack.c.h.b16 %v476
        %v1404 = vunpack.c.l.b16 %v477
        %v1405 = vunpack.c.h.b16 %v477
        %v1406 = vunpack.c.l.b16 %v478
        %v1407 = vunpack.c.h.b16 %v478
        %v1408 = vunpack.c.l.b16 %v479
        %v1409 = vunpack.c.h.b16 %v479
        %v1410 = vunpack.c.l.b16 %v480
        %v1411 = vunpack.c.h.b16 %v480
        %v1412 = vunpack.c.l.b16 %v481
        %v1413 = vunpack.c.h.b16 %v481
        %v1414 = vunpack.c.l.b16 %v482
        %v1415 = vunpack.c.h.b16 %v482
        %v1416 = vunpack.c.l.b16 %v483
        %v1417 = vunpack.c.h.b16 %v483
        %v1418 = vunpack.c.l.b16 %v484
        %v1419 = vunpack.c.h.b16 %v484
        %v1420 = vunpack.c.l.b16 %v485
        %v1421 = vunpack.c.h.b16 %v485
        %v1422 = vunpack.c.l.b16 %v486
        %v1423 = vunpack.c.h.b16 %v486
        %v1424 = vunpack.c.l.b16 %v487
        %v1425 = vunpack.c.h.b16 %v487
        %v1426 = vunpack.c.l.b16 %v488
        %v1427 = vunpack.c.h.b16 %v488
        %v1428 = vunpack.c.l.b16 %v489
        %v1429 = vunpack.c.h.b16 %v489
        %v1430 = vunpack.c.l.b16 %v490
        %v1431 = vunpack.c.h.b16 %v490
        %v1432 = vunpack.c.l.b16 %v491
        %v1433 = vunpack.c.h.b16 %v491
        %v1434 = vunpack.c.l.b16 %v492
        %v1435 = vunpack.c.h.b16 %v492
        %v1436 = vunpack.c.l.b16 %v493
        %v1437 = vunpack.c.h.b16 %v493
        %v1438 = vunpack.c.l.b16 %v494
        %v1439 = vunpack.c.h.b16 %v494
        %v1440 = vunpack.c.l.b16 %v495
        %v1441 = vunpack.c.h.b16 %v495
        %v1442 = vunpack.c.l.b16 %v496
        %v1443 = vunpack.c.h.b16 %v496
        %v1444 = vunpack.c.l.b16 %v497
        %v1445 = vunpack.c.h.b16 %v497
        %v1446 = vunpack.c.l.b16 %v498
        %v1447 = vunpack.c.h.b16 %v498
        %v1448 = vunpack.c.l.b16 %v499
        %v1449 = vunpack.c.h.b16 %v499
        %v1450 = vunpack.c.l.b16 %v500
        %v1451 = vunpack.c.h.b16 %v500
        %v1452 = vunpack.c.l.b16 %v501
        %v1453 = vunpack.c.h.b16 %v501
        %v1454 = vunpack.c.l.b16 %v502
        %v1455 = vunpack.c.h.b16 %v502
        %v1456 = vunpack.c.l.b16 %v503
        %v1457 = vunpack.c.h.b16 %v503
        %v1458 = vunpack.c.l.b16 %v504
        %v1459 = vunpack.c.h.b16 %v504
        %v1460 = vunpack.c.l.b16 %v505
        %v1461 = vunpack.c.h.b16 %v505
        %v1462 = vunpack.c.l.b16 %v506
        %v1463 = vunpack.c.h.b16 %v506
        %v1464 = vunpack.c.l.b16 %v507
        %v1465 = vunpack.c.h.b16 %v507
        %v1466 = vunpack.c.l.b16 %v508
        %v1467 = vunpack.c.h.b16 %v508
        %v1468 = vunpack.c.l.b16 %v509
        %v1469 = vunpack.c.h.b16 %v509
        %v1470 = vunpack.c.l.b16 %v510
        %v1471 = vunpack.c.h.b16 %v510
        %v1472 = vunpack.c.l.b16 %v511
        %v1473 = vunpack.c.h.b16 %v511
        %v1474 = vunpack.c.l.b16 %v512
        %v1475 = vunpack.c.h.b16 %v512
        %v1476 = vunpack.c.l.b16 %v513
        %v1477 = vunpack.c.h.b16 %v513
        %v1478 = vunpack.c.l.b16 %v514
        %v1479 = vunpack.c.h.b16 %v514
        %v1480 = vunpack.c.l.b16 %v515
        %v1481 = vunpack.c.h.b16 %v515
        %v1482 = vunpack.c.l.b16 %v516
        %v1483 = vunpack.c.h.b16 %v516
        %v1484 = vunpack.c.l.b16 %v517
        %v1485 = vunpack.c.h.b16 %v517
        %v1486 = vunpack.c.l.b16 %v518
        %v1487 = vunpack.c.h.b16 %v518
        %v1488 = vunpack.c.l.b16 %v519
        %v1489 = vunpack.c.h.b16 %v519
        %v1490 = vunpack.c.l.b16 %v520
        %v1491 = vunpack.c.h.b16 %v520
        %v1492 = vunpack.c.l.b16 %v521
        %v1493 = vunpack.c.h.b16 %v521
        %v1494 = vunpack.c.l.b16 %v522
        %v1495 = vunpack.c.h.b16 %v522
        %v1496 = vunpack.c.l.b16 %v523
        %v1497 = vunpack.c.h.b16 %v523
        %v1498 = vunpack.c.l.b16 %v524
        %v1499 = vunpack.c.h.b16 %v524
        %v1500 = vunpack.c.l.b16 %v525
        %v1501 = vunpack.c.h.b16 %v525
        %v1502 = vunpack.c.l.b16 %v526
        %v1503 = vunpack.c.h.b16 %v526
        %v1504 = vunpack.c.l.b16 %v527
        %v1505 = vunpack.c.h.b16 %v527
        %v1506 = vunpack.c.l.b16 %v528
        %v1507 = vunpack.c.h.b16 %v528
        %v1508 = vunpack.c.l.b16 %v529
        %v1509 = vunpack.c.h.b16 %v529
        %v1510 = vunpack.c.l.b16 %v530
        %v1511 = vunpack.c.h.b16 %v530
        %v1512 = vunpack.c.l.b16 %v531
        %v1513 = vunpack.c.h.b16 %v531
        %v1514 = vunpack.c.l.b16 %v532
        %v1515 = vunpack.c.h.b16 %v532
        %v1516 = vunpack.c.l.b16 %v533
        %v1517 = vunpack.c.h.b16 %v533
        %v1518 = vunpack.c.l.b16 %v534
        %v1519 = vunpack.c.h.b16 %v534
        %v1520 = vunpack.c.l.b16 %v535
        %v1521 = vunpack.c.h.b16 %v535
        %v1522 = vunpack.c.l.b16 %v536
        %v1523 = vunpack.c.h.b16 %v536
        %v1524 = vunpack.c.l.b16 %v537
        %v1525 = vunpack.c.h.b16 %v537
        %v1526 = vunpack.c.l.b16 %v538
        %v1527 = vunpack.c.h.b16 %v538
        %v1528 = vunpack.c.l.b16 %v539
        %v1529 = vunpack.c.h.b16 %v539
        %v1530 = vunpack.c.l.b16 %v540
        %v1531 = vunpack.c.h.b16 %v540
        %v1532 = vunpack.c.l.b16 %v541
        %v1533 = vunpack.c.h.b16 %v541
        %v1534 = vunpack.c.l.b16 %v542
        %v1535 = vunpack.c.h.b16 %v542
        %v1536 = vunpack.c.l.b16 %v543
        %v1537 = vunpack.c.h.b16 %v543
        %v1538 = vunpack.c.l.b16 %v544
        %v1539 = vunpack.c.h.b16 %v544
        %v1540 = vunpack.c.l.b16 %v545
        %v1541 = vunpack.c.h.b16 %v545
        %v1542 = vunpack.c.l.b16 %v546
        %v1543 = vunpack.c.h.b16 %v546
        %v1544 = vunpack.c.l.b16 %v547
        %v1545 = vunpack.c.h.b16 %v547
        %v1546 = vunpack.c.l.b16 %v548
        %v1547 = vunpack.c.h.b16 %v548
        %v1548 = vunpack.c.l.b16 %v549
        %v1549 = vunpack.c.h.b16 %v549
        %v1550 = vunpack.c.l.b16 %v550
        %v1551 = vunpack.c.h.b16 %v550
        %v1552 = vunpack.c.l.b16 %v551
        %v1553 = vunpack.c.h.b16 %v551
        %v1554 = vunpack.c.l.b16 %v552
        %v1555 = vunpack.c.h.b16 %v552
        %v1556 = vunpack.c.l.b16 %v553
        %v1557 = vunpack.c.h.b16 %v553
        %v1558 = vunpack.c.l.b16 %v554
        %v1559 = vunpack.c.h.b16 %v554
        %v1560 = vunpack.c.l.b16 %v555
        %v1561 = vunpack.c.h.b16 %v555
        %v1562 = vunpack.c.l.b16 %v556
        %v1563 = vunpack.c.h.b16 %v556
        %v1564 = vunpack.c.l.b16 %v557
        %v1565 = vunpack.c.h.b16 %v557
        %v1566 = vunpack.c.l.b16 %v558
        %v1567 = vunpack.c.h.b16 %v558
        %v1568 = vunpack.c.l.b16 %v559
        %v1569 = vunpack.c.h.b16 %v559
        %v1570 = vunpack.c.l.b16 %v560
        %v1571 = vunpack.c.h.b16 %v560
        %v1572 = vunpack.c.l.b16 %v561
        %v1573 = vunpack.c.h.b16 %v561
        %v1574 = vunpack.c.l.b16 %v562
        %v1575 = vunpack.c.h.b16 %v562
        %v1576 = vunpack.c.l.b16 %v563
        %v1577 = vunpack.c.h.b16 %v563
        %v1578 = vunpack.c.l.b16 %v564
        %v1579 = vunpack.c.h.b16 %v564
        %v1580 = vunpack.c.l.b16 %v565
        %v1581 = vunpack.c.h.b16 %v565
        %v1582 = vunpack.c.l.b16 %v566
        %v1583 = vunpack.c.h.b16 %v566
        %v1584 = vunpack.c.l.b16 %v567
        %v1585 = vunpack.c.h.b16 %v567
        %v1586 = vunpack.c.l.b16 %v568
        %v1587 = vunpack.c.h.b16 %v568
        %v1588 = vunpack.c.l.b16 %v569
        %v1589 = vunpack.c.h.b16 %v569
        %v1590 = vunpack.c.l.b16 %v570
        %v1591 = vunpack.c.h.b16 %v570
        %v1592 = vunpack.c.l.b16 %v571
        %v1593 = vunpack.c.h.b16 %v571
        %v1594 = vunpack.c.l.b16 %v572
        %v1595 = vunpack.c.h.b16 %v572
        %v1596 = vunpack.c.l.b16 %v573
        %v1597 = vunpack.c.h.b16 %v573
        %v1598 = vunpack.c.l.b16 %v574
        %v1599 = vunpack.c.h.b16 %v574
        %v1600 = vunpack.c.l.b16 %v575
        %v1601 = vunpack.c.h.b16 %v575
        %v1602 = vunpack.c.l.b16 %v576
        %v1603 = vunpack.c.h.b16 %v576
        %v1604 = vunpack.c.l.b16 %v577
        %v1605 = vunpack.c.h.b16 %v577
        %v1606 = vunpack.c.l.b16 %v578
        %v1607 = vunpack.c.h.b16 %v578
        %v1608 = vunpack.c.l.b16 %v579
        %v1609 = vunpack.c.h.b16 %v579
        %v1610 = vunpack.c.l.b16 %v580
        %v1611 = vunpack.c.h.b16 %v580
        %v1612 = vunpack.c.l.b16 %v581
        %v1613 = vunpack.c.h.b16 %v581
        %v1614 = vunpack.c.l.b16 %v582
        %v1615 = vunpack.c.h.b16 %v582
        %v1616 = vunpack.c.l.b16 %v583
        %v1617 = vunpack.c.h.b16 %v583
        %v1618 = vunpack.c.l.b16 %v584
        %v1619 = vunpack.c.h.b16 %v584
        %v1620 = vunpack.c.l.b16 %v585
        %v1621 = vunpack.c.h.b16 %v585
        %v1622 = vunpack.c.l.b16 %v586
        %v1623 = vunpack.c.h.b16 %v586
        %v1624 = vunpack.c.l.b16 %v587
        %v1625 = vunpack.c.h.b16 %v587
        %v1626 = vunpack.c.l.b16 %v588
        %v1627 = vunpack.c.h.b16 %v588
        %v1628 = vunpack.c.l.b16 %v589
        %v1629 = vunpack.c.h.b16 %v589
        %v1630 = vunpack.c.l.b16 %v590
        %v1631 = vunpack.c.h.b16 %v590
        %v1632 = vunpack.c.l.b16 %v591
        %v1633 = vunpack.c.h.b16 %v591
        %v1634 = vunpack.c.l.b16 %v592
        %v1635 = vunpack.c.h.b16 %v592
        %v1636 = vunpack.c.l.b16 %v593
        %v1637 = vunpack.c.h.b16 %v593
        %v1638 = vunpack.c.l.b16 %v594
        %v1639 = vunpack.c.h.b16 %v594
        %v1640 = vunpack.c.l.b16 %v595
        %v1641 = vunpack.c.h.b16 %v595
        %v1642 = vunpack.c.l.b16 %v596
        %v1643 = vunpack.c.h.b16 %v596
        %v1644 = vunpack.c.l.b16 %v597
        %v1645 = vunpack.c.h.b16 %v597
        %v1646 = vunpack.c.l.b16 %v598
        %v1647 = vunpack.c.h.b16 %v598
        %v1648 = vunpack.c.l.b16 %v599
        %v1649 = vunpack.c.h.b16 %v599
        %v1650 = vunpack.c.l.b16 %v600
        %v1651 = vunpack.c.h.b16 %v600
        %v1652 = vunpack.c.l.b16 %v601
        %v1653 = vunpack.c.h.b16 %v601
        %v1654 = vunpack.c.l.b16 %v602
        %v1655 = vunpack.c.h.b16 %v602
        %v1656 = vunpack.c.l.b16 %v603
        %v1657 = vunpack.c.h.b16 %v603
        %v1658 = vunpack.c.l.b16 %v604
        %v1659 = vunpack.c.h.b16 %v604
        %v1660 = vunpack.c.l.b16 %v605
        %v1661 = vunpack.c.h.b16 %v605
        %v1662 = vunpack.c.l.b16 %v606
        %v1663 = vunpack.c.h.b16 %v606
        %v1664 = vunpack.c.l.b16 %v607
        %v1665 = vunpack.c.h.b16 %v607
        %v1666 = vunpack.c.l.b16 %v608
        %v1667 = vunpack.c.h.b16 %v608
        %v1668 = vunpack.c.l.b16 %v609
        %v1669 = vunpack.c.h.b16 %v609
        %v1670 = vunpack.c.l.b16 %v610
        %v1671 = vunpack.c.h.b16 %v610
        %v1672 = vunpack.c.l.b16 %v611
        %v1673 = vunpack.c.h.b16 %v611
        %v1674 = vunpack.c.l.b16 %v612
        %v1675 = vunpack.c.h.b16 %v612
        %v1676 = vunpack.c.l.b16 %v613
        %v1677 = vunpack.c.h.b16 %v613
        %v1678 = vunpack.c.l.b16 %v614
        %v1679 = vunpack.c.h.b16 %v614
        %v1680 = vunpack.c.l.b16 %v615
        %v1681 = vunpack.c.h.b16 %v615
        %v1682 = vunpack.c.l.b16 %v616
        %v1683 = vunpack.c.h.b16 %v616
        %v1684 = vunpack.c.l.b16 %v617
        %v1685 = vunpack.c.h.b16 %v617
        %v1686 = vunpack.c.l.b16 %v618
        %v1687 = vunpack.c.h.b16 %v618
        %v1688 = vunpack.c.l.b16 %v619
        %v1689 = vunpack.c.h.b16 %v619
        %v1690 = vunpack.c.l.b16 %v620
        %v1691 = vunpack.c.h.b16 %v620
        %v1692 = vunpack.c.l.b16 %v621
        %v1693 = vunpack.c.h.b16 %v621
        %v1694 = vunpack.c.l.b16 %v622
        %v1695 = vunpack.c.h.b16 %v622
        %v1696 = vunpack.c.l.b16 %v623
        %v1697 = vunpack.c.h.b16 %v623
        %v1698 = vunpack.c.l.b16 %v624
        %v1699 = vunpack.c.h.b16 %v624
        %v1700 = vunpack.c.l.b16 %v625
        %v1701 = vunpack.c.h.b16 %v625
        %v1702 = vunpack.c.l.b16 %v626
        %v1703 = vunpack.c.h.b16 %v626
        %v1704 = vunpack.c.l.b16 %v627
        %v1705 = vunpack.c.h.b16 %v627
        %v1706 = vpack.c.b16 %v1326, %v1322
        %v1707 = vpack.c.b16 %v1327, %v1323
        %v1708 = vpack.c.b16 %v1328, %v1324
        %v1709 = vpack.c.b16 %v1329, %v1325
        %v1710 = vpack.c.b16 %v1334, %v1330
        %v1711 = vpack.c.b16 %v1335, %v1331
        %v1712 = vpack.c.b16 %v1336, %v1332
        %v1713 = vpack.c.b16 %v1337, %v1333
        %v1714 = vpack.c.b16 %v1342, %v1338
        %v1715 = vpack.c.b16 %v1343, %v1339
        %v1716 = vpack.c.b16 %v1344, %v1340
        %v1717 = vpack.c.b16 %v1345, %v1341
        %v1718 = vpack.c.b16 %v1350, %v1346
        %v1719 = vpack.c.b16 %v1351, %v1347
        %v1720 = vpack.c.b16 %v1352, %v1348
        %v1721 = vpack.c.b16 %v1353, %v1349
        %v1722 = vpack.c.b16 %v1358, %v1354
        %v1723 = vpack.c.b16 %v1359, %v1355
        %v1724 = vpack.c.b16 %v1360, %v1356
        %v1725 = vpack.c.b16 %v1361, %v1357
        %v1726 = vpack.c.b16 %v1366, %v1362
        %v1727 = vpack.c.b16 %v1367, %v1363
        %v1728 = vpack.c.b16 %v1368, %v1364
        %v1729 = vpack.c.b16 %v1369, %v1365
        %v1730 = vpack.c.b16 %v1374, %v1370
        %v1731 = vpack.c.b16 %v1375, %v1371
        %v1732 = vpack.c.b16 %v1376, %v1372
        %v1733 = vpack.c.b16 %v1377, %v1373
        %v1734 = vpack.c.b16 %v1382, %v1378
        %v1735 = vpack.c.b16 %v1383, %v1379
        %v1736 = vpack.c.b16 %v1384, %v1380
        %v1737 = vpack.c.b16 %v1385, %v1381
        %v1738 = vpack.c.b16 %v1390, %v1386
        %v1739 = vpack.c.b16 %v1391, %v1387
        %v1740 = vpack.c.b16 %v1392, %v1388
        %v1741 = vpack.c.b16 %v1393, %v1389
        %v1742 = vpack.c.b16 %v1398, %v1394
        %v1743 = vpack.c.b16 %v1399, %v1395
        %v1744 = vpack.c.b16 %v1400, %v1396
        %v1745 = vpack.c.b16 %v1401, %v1397
        %v1746 = vpack.c.b16 %v1406, %v1402
        %v1747 = vpack.c.b16 %v1407, %v1403
        %v1748 = vpack.c.b16 %v1408, %v1404
        %v1749 = vpack.c.b16 %v1409, %v1405
        %v1750 = vpack.c.b16 %v1414, %v1410
        %v1751 = vpack.c.b16 %v1415, %v1411
        %v1752 = vpack.c.b16 %v1416, %v1412
        %v1753 = vpack.c.b16 %v1417, %v1413
        %v1754 = vpack.c.b16 %v1422, %v1418
        %v1755 = vpack.c.b16 %v1423, %v1419
        %v1756 = vpack.c.b16 %v1424, %v1420
        %v1757 = vpack.c.b16 %v1425, %v1421
        %v1758 = vpack.c.b16 %v1430, %v1426
        %v1759 = vpack.c.b16 %v1431, %v1427
        %v1760 = vpack.c.b16 %v1432, %v1428
        %v1761 = vpack.c.b16 %v1433, %v1429
        %v1762 = vpack.c.b16 %v1438, %v1434
        %v1763 = vpack.c.b16 %v1439, %v1435
        %v1764 = vpack.c.b16 %v1440, %v1436
        %v1765 = vpack.c.b16 %v1441, %v1437
        %v1766 = vpack.c.b16 %v1446, %v1442
        %v1767 = vpack.c.b16 %v1447, %v1443
        %v1768 = vpack.c.b16 %v1448, %v1444
        %v1769 = vpack.c.b16 %v1449, %v1445
        %v1770 = vpack.c.b16 %v1454, %v1450
        %v1771 = vpack.c.b16 %v1455, %v1451
        %v1772 = vpack.c.b16 %v1456, %v1452
        %v1773 = vpack.c.b16 %v1457, %v1453
        %v1774 = vpack.c.b16 %v1462, %v1458
        %v1775 = vpack.c.b16 %v1463, %v1459
        %v1776 = vpack.c.b16 %v1464, %v1460
        %v1777 = vpack.c.b16 %v1465, %v1461
        %v1778 = vpack.c.b16 %v1470, %v1466
        %v1779 = vpack.c.b16 %v1471, %v1467
        %v1780 = vpack.c.b16 %v1472, %v1468
        %v1781 = vpack.c.b16 %v1473, %v1469
        %v1782 = vpack.c.b16 %v1478, %v1474
        %v1783 = vpack.c.b16 %v1479, %v1475
        %v1784 = vpack.c.b16 %v1480, %v1476
        %v1785 = vpack.c.b16 %v1481, %v1477
        %v1786 = vpack.c.b16 %v1486, %v1482
        %v1787 = vpack.c.b16 %v1487, %v1483
        %v1788 = vpack.c.b16 %v1488, %v1484
        %v1789 = vpack.c.b16 %v1489, %v1485
        %v1790 = vpack.c.b16 %v1494, %v1490
        %v1791 = vpack.c.b16 %v1495, %v1491
        %v1792 = vpack.c.b16 %v1496, %v1492
        %v1793 = vpack.c.b16 %v1497, %v1493
        %v1794 = vpack.c.b16 %v1502, %v1498
        %v1795 = vpack.c.b16 %v1503, %v1499
        %v1796 = vpack.c.b16 %v1504, %v1500
        %v1797 = vpack.c.b16 %v1505, %v1501
        %v1798 = vpack.c.b16 %v1510, %v1506
        %v1799 = vpack.c.b16 %v1511, %v1507
        %v1800 = vpack.c.b16 %v1512, %v1508
        %v1801 = vpack.c.b16 %v1513, %v1509
        %v1802 = vpack.c.b16 %v1518, %v1514
        %v1803 = vpack.c.b16 %v1519, %v1515
        %v1804 = vpack.c.b16 %v1520, %v1516
        %v1805 = vpack.c.b16 %v1521, %v1517
        %v1806 = vpack.c.b16 %v1526, %v1522
        %v1807 = vpack.c.b16 %v1527, %v1523
        %v1808 = vpack.c.b16 %v1528, %v1524
        %v1809 = vpack.c.b16 %v1529, %v1525
        %v1810 = vpack.c.b16 %v1534, %v1530
        %v1811 = vpack.c.b16 %v1535, %v1531
        %v1812 = vpack.c.b16 %v1536, %v1532
        %v1813 = vpack.c.b16 %v1537, %v1533
        %v1814 = vpack.c.b16 %v1542, %v1538
        %v1815 = vpack.c.b16 %v1543, %v1539
        %v1816 = vpack.c.b16 %v1544, %v1540
        %v1817 = vpack.c.b16 %v1545, %v1541
        %v1818 = vpack.c.b16 %v1550, %v1546
        %v1819 = vpack.c.b16 %v1551, %v1547
        %v1820 = vpack.c.b16 %v1552, %v1548
        %v1821 = vpack.c.b16 %v1553, %v1549
        %v1822 = vpack.c.b16 %v1558, %v1554
        %v1823 = vpack.c.b16 %v1559, %v1555
        %v1824 = vpack.c.b16 %v1560, %v1556
        %v1825 = vpack.c.b16 %v1561, %v1557
        %v1826 = vpack.c.b16 %v1566, %v1562
        %v1827 = vpack.c.b16 %v1567, %v1563
        %v1828 = vpack.c.b16 %v1568, %v1564
        %v1829 = vpack.c.b16 %v1569, %v1565
        %v1830 = vpack.c.b16 %v1574, %v1570
        %v1831 = vpack.c.b16 %v1575, %v1571
        %v1832 = vpack.c.b16 %v1576, %v1572
        %v1833 = vpack.c.b16 %v1577, %v1573
        %v1834 = vpack.c.b16 %v1582, %v1578
        %v1835 = vpack.c.b16 %v1583, %v1579
        %v1836 = vpack.c.b16 %v1584, %v1580
        %v1837 = vpack.c.b16 %v1585, %v1581
        %v1838 = vpack.c.b16 %v1590, %v1586
        %v1839 = vpack.c.b16 %v1591, %v1587
        %v1840 = vpack.c.b16 %v1592, %v1588
        %v1841 = vpack.c.b16 %v1593, %v1589
        %v1842 = vpack.c.b16 %v1598, %v1594
        %v1843 = vpack.c.b16 %v1599, %v1595
        %v1844 = vpack.c.b16 %v1600, %v1596
        %v1845 = vpack.c.b16 %v1601, %v1597
        %v1846 = vpack.c.b16 %v1606, %v1602
        %v1847 = vpack.c.b16 %v1607, %v1603
        %v1848 = vpack.c.b16 %v1608, %v1604
        %v1849 = vpack.c.b16 %v1609, %v1605
        %v1850 = vpack.c.b16 %v1614, %v1610
        %v1851 = vpack.c.b16 %v1615, %v1611
        %v1852 = vpack.c.b16 %v1616, %v1612
        %v1853 = vpack.c.b16 %v1617, %v1613
        %v1854 = vpack.c.b16 %v1622, %v1618
        %v1855 = vpack.c.b16 %v1623, %v1619
        %v1856 = vpack.c.b16 %v1624, %v1620
        %v1857 = vpack.c.b16 %v1625, %v1621
        %v1858 = vpack.c.b16 %v1630, %v1626
        %v1859 = vpack.c.b16 %v1631, %v1627
        %v1860 = vpack.c.b16 %v1632, %v1628
        %v1861 = vpack.c.b16 %v1633, %v1629
        %v1862 = vpack.c.b16 %v1638, %v1634
        %v1863 = vpack.c.b16 %v1639, %v1635
        %v1864 = vpack.c.b16 %v1640, %v1636
        %v1865 = vpack.c.b16 %v1641, %v1637
        %v1866 = vpack.c.b16 %v1646, %v1642
        %v1867 = vpack.c.b16 %v1647, %v1643
        %v1868 = vpack.c.b16 %v1648, %v1644
        %v1869 = vpack.c.b16 %v1649, %v1645
        %v1870 = vpack.c.b16 %v1654, %v1650
        %v1871 = vpack.c.b16 %v1655, %v1651
        %v1872 = vpack.c.b16 %v1656, %v1652
        %v1873 = vpack.c.b16 %v1657, %v1653
        %v1874 = vpack.c.b16 %v1662, %v1658
        %v1875 = vpack.c.b16 %v1663, %v1659
        %v1876 = vpack.c.b16 %v1664, %v1660
        %v1877 = vpack.c.b16 %v1665, %v1661
        %v1878 = vpack.c.b16 %v1670, %v1666
        %v1879 = vpack.c.b16 %v1671, %v1667
        %v1880 = vpack.c.b16 %v1672, %v1668
        %v1881 = vpack.c.b16 %v1673, %v1669
        %v1882 = vpack.c.b16 %v1678, %v1674
        %v1883 = vpack.c.b16 %v1679, %v1675
        %v1884 = vpack.c.b16 %v1680, %v1676
        %v1885 = vpack.c.b16 %v1681, %v1677
        %v1886 = vpack.c.b16 %v1686, %v1682
        %v1887 = vpack.c.b16 %v1687, %v1683
        %v1888 = vpack.c.b16 %v1688, %v1684
        %v1889 = vpack.c.b16 %v1689, %v1685
        %v1890 = vpack.c.b16 %v1694, %v1690
        %v1891 = vpack.c.b16 %v1695, %v1691
        %v1892 = vpack.c.b16 %v1696, %v1692
        %v1893 = vpack.c.b16 %v1697, %v1693
        %v1894 = vpack.c.b16 %v1702, %v1698
        %v1895 = vpack.c.b16 %v1703, %v1699
        %v1896 = vpack.c.b16 %v1704, %v1700
        %v1897 = vpack.c.b16 %v1705, %v1701
        %2090 = vmatprep.subr.bf16.mxu0 %v1707
        %2091 = vmatpush1.bf16.msra.mxu0 %v1706
        %2092 = vmatprep.subr.bf16.mxu0 %v1711
        %2093 = vmatpush1.bf16.msra.mxu0 %v1710
        %2094 = vmatprep.subr.bf16.mxu0 %v1715
        %2095 = vmatpush1.bf16.msra.mxu0 %v1714
        %2096 = vmatprep.subr.bf16.mxu0 %v1719
        %2097 = vmatpush1.bf16.msra.mxu0 %v1718
        %2098 = vmatprep.subr.bf16.mxu0 %v1723
        %2099 = vmatpush1.bf16.msra.mxu0 %v1722
        %2100 = vmatprep.subr.bf16.mxu0 %v1727
        %2101 = vmatpush1.bf16.msra.mxu0 %v1726
        %2102 = vmatprep.subr.bf16.mxu0 %v1731
        %2103 = vmatpush1.bf16.msra.mxu0 %v1730
        %2104 = vmatprep.subr.bf16.mxu0 %v1735
        %2105 = vmatpush1.bf16.msra.mxu0 %v1734
        %2106 = vmatprep.subr.bf16.mxu0 %v1739
        %2107 = vmatpush1.bf16.msra.mxu0 %v1738
        %2108 = vmatprep.subr.bf16.mxu0 %v1743
        %2109 = vmatpush1.bf16.msra.mxu0 %v1742
        %2110 = vmatprep.subr.bf16.mxu0 %v1747
        %2111 = vmatpush1.bf16.msra.mxu0 %v1746
        %2112 = vmatprep.subr.bf16.mxu0 %v1751
        %2113 = vmatpush1.bf16.msra.mxu0 %v1750
        %2114 = vmatprep.subr.bf16.mxu0 %v1755
        %2115 = vmatpush1.bf16.msra.mxu0 %v1754
        %2116 = vmatprep.subr.bf16.mxu0 %v1759
        %2117 = vmatpush1.bf16.msra.mxu0 %v1758
        %2118 = vmatprep.subr.bf16.mxu0 %v1763
        %2119 = vmatpush1.bf16.msra.mxu0 %v1762
        %2120 = vmatprep.subr.bf16.mxu0 %v1767
        %2121 = vmatpush1.bf16.msra.mxu0 %v1766
        %2122 = vmatprep.mubr.bf16.mxu0 %v939
        %2123 = vmatmul.mubr.bf16.gmra.mrb[0].mxu0 %v938
        %v2124 = vpop.f32.mrb[0].mxu0
        %v2125 = vadd.f32 %v633, %v2124
        %v2126 = vpop.f32.mrb[0].mxu0
        %v2127 = vadd.f32 %v637, %v2126
        %v2128 = vpop.f32.mrb[0].mxu0
        %v2129 = vadd.f32 %v633, %v2128
        %v2130 = vpop.f32.mrb[0].mxu0
        %v2131 = vadd.f32 %v637, %v2130
        %2132 = vmatprep.mubr.bf16.mxu0 %v945
        %2133 = vmatmul.mubr.bf16.gmra.mrb[0].mxu0 %v944
        %v2134 = vpop.f32.mrb[0].mxu0
        %v2135 = vadd.f32 %v633, %v2134
        %v2136 = vpop.f32.mrb[0].mxu0
        %v2137 = vadd.f32 %v637, %v2136
        %v2138 = vpop.f32.mrb[0].mxu0
        %v2139 = vadd.f32 %v633, %v2138
        %v2140 = vpop.f32.mrb[0].mxu0
        %v2141 = vadd.f32 %v637, %v2140
        %2142 = vmatprep.mubr.bf16.mxu0 %v951
        %2143 = vmatmul.mubr.bf16.gmra.mrb[0].mxu0 %v950
        %v2144 = vpop.f32.mrb[0].mxu0
        %v2145 = vadd.f32 %v633, %v2144
        %v2146 = vpop.f32.mrb[0].mxu0
        %v2147 = vadd.f32 %v637, %v2146
        %v2148 = vpop.f32.mrb[0].mxu0
        %v2149 = vadd.f32 %v633, %v2148
        %v2150 = vpop.f32.mrb[0].mxu0
        %v2151 = vadd.f32 %v637, %v2150
        %2152 = vmatprep.mubr.bf16.mxu0 %v957
        %2153 = vmatmul.mubr.bf16.gmra.mrb[0].mxu0 %v956
        %v2154 = vpop.f32.mrb[0].mxu0
        %v2155 = vadd.f32 %v633, %v2154
        %v2156 = vpop.f32.mrb[0].mxu0
        %v2157 = vadd.f32 %v637, %v2156
        %v2158 = vpop.f32.mrb[0].mxu0
        %v2159 = vadd.f32 %v633, %v2158
        %v2160 = vpop.f32.mrb[0].mxu0
        %v2161 = vadd.f32 %v637, %v2160
        %2162 = vmatprep.mubr.bf16.mxu0 %v963
        %2163 = vmatmul.mubr.bf16.gmra.mrb[0].mxu0 %v962
        %v2164 = vpop.f32.mrb[0].mxu0
        %v2165 = vadd.f32 %v633, %v2164
        %v2166 = vpop.f32.mrb[0].mxu0
        %v2167 = vadd.f32 %v637, %v2166
        %v2168 = vpop.f32.mrb[0].mxu0
        %v2169 = vadd.f32 %v633, %v2168
        %v2170 = vpop.f32.mrb[0].mxu0
        %v2171 = vadd.f32 %v637, %v2170
        %2172 = vmatprep.mubr.bf16.mxu0 %v969
        %2173 = vmatmul.mubr.bf16.gmra.mrb[0].mxu0 %v968
        %v2174 = vpop.f32.mrb[0].mxu0
        %v2175 = vadd.f32 %v633, %v2174
        %v2176 = vpop.f32.mrb[0].mxu0
        %v2177 = vadd.f32 %v637, %v2176
        %v2178 = vpop.f32.mrb[0].mxu0
        %v2179 = vadd.f32 %v633, %v2178
        %v2180 = vpop.f32.mrb[0].mxu0
        %v2181 = vadd.f32 %v637, %v2180
        %2182 = vmatprep.mubr.bf16.mxu0 %v975
        %2183 = vmatmul.mubr.bf16.gmra.mrb[0].mxu0 %v974
        %v2184 = vpop.f32.mrb[0].mxu0
        %v2185 = vadd.f32 %v633, %v2184
        %v2186 = vpop.f32.mrb[0].mxu0
        %v2187 = vadd.f32 %v637, %v2186
        %v2188 = vpop.f32.mrb[0].mxu0
        %v2189 = vadd.f32 %v633, %v2188
        %v2190 = vpop.f32.mrb[0].mxu0
        %v2191 = vadd.f32 %v637, %v2190
        %2192 = vmatprep.mubr.bf16.mxu0 %v981
        %2193 = vmatmul.mubr.bf16.gmra.mrb[0].mxu0 %v980
        %v2194 = vpop.f32.mrb[0].mxu0
        %v2195 = vadd.f32 %v633, %v2194
        %v2196 = vpop.f32.mrb[0].mxu0
        %v2197 = vadd.f32 %v637, %v2196
        %v2198 = vpop.f32.mrb[0].mxu0
        %v2199 = vadd.f32 %v633, %v2198
        %v2200 = vpop.f32.mrb[0].mxu0
        %v2201 = vadd.f32 %v637, %v2200
        %2202 = vmatprep.mubr.bf16.mxu0 %v987
        %2203 = vmatmul.mubr.bf16.gmra.mrb[0].mxu0 %v986
        %v2204 = vpop.f32.mrb[0].mxu0
        %v2205 = vadd.f32 %v633, %v2204
        %v2206 = vpop.f32.mrb[0].mxu0
        %v2207 = vadd.f32 %v637, %v2206
        %v2208 = vpop.f32.mrb[0].mxu0
        %v2209 = vadd.f32 %v633, %v2208
        %v2210 = vpop.f32.mrb[0].mxu0
        %v2211 = vadd.f32 %v637, %v2210
        %2212 = vmatprep.mubr.bf16.mxu0 %v993
        %2213 = vmatmul.mubr.bf16.gmra.mrb[0].mxu0 %v992
        %v2214 = vpop.f32.mrb[0].mxu0
        %v2215 = vadd.f32 %v633, %v2214
        %v2216 = vpop.f32.mrb[0].mxu0
        %v2217 = vadd.f32 %v637, %v2216
        %v2218 = vpop.f32.mrb[0].mxu0
        %v2219 = vadd.f32 %v633, %v2218
        %v2220 = vpop.f32.mrb[0].mxu0
        %v2221 = vadd.f32 %v637, %v2220
        %2222 = vmatprep.mubr.bf16.mxu0 %v999
        %2223 = vmatmul.mubr.bf16.gmra.mrb[0].mxu0 %v998
        %v2224 = vpop.f32.mrb[0].mxu0
        %v2225 = vadd.f32 %v633, %v2224
        %v2226 = vpop.f32.mrb[0].mxu0
        %v2227 = vadd.f32 %v637, %v2226
        %v2228 = vpop.f32.mrb[0].mxu0
        %v2229 = vadd.f32 %v633, %v2228
        %v2230 = vpop.f32.mrb[0].mxu0
        %v2231 = vadd.f32 %v637, %v2230
        %2232 = vmatprep.mubr.bf16.mxu0 %v1005
        %2233 = vmatmul.mubr.bf16.gmra.mrb[0].mxu0 %v1004
        %v2234 = vpop.f32.mrb[0].mxu0
        %v2235 = vadd.f32 %v633, %v2234
        %v2236 = vpop.f32.mrb[0].mxu0
        %v2237 = vadd.f32 %v637, %v2236
        %v2238 = vpop.f32.mrb[0].mxu0
        %v2239 = vadd.f32 %v633, %v2238
        %v2240 = vpop.f32.mrb[0].mxu0
        %v2241 = vadd.f32 %v637, %v2240
        %2242 = vmatprep.mubr.bf16.mxu0 %v1011
        %2243 = vmatmul.mubr.bf16.gmra.mrb[0].mxu0 %v1010
        %v2244 = vpop.f32.mrb[0].mxu0
        %v2245 = vadd.f32 %v633, %v2244
        %v2246 = vpop.f32.mrb[0].mxu0
        %v2247 = vadd.f32 %v637, %v2246
        %v2248 = vpop.f32.mrb[0].mxu0
        %v2249 = vadd.f32 %v633, %v2248
        %v2250 = vpop.f32.mrb[0].mxu0
        %v2251 = vadd.f32 %v637, %v2250
        %2252 = vmatprep.mubr.bf16.mxu0 %v1017
        %2253 = vmatmul.mubr.bf16.gmra.mrb[0].mxu0 %v1016
        %v2254 = vpop.f32.mrb[0].mxu0
        %v2255 = vadd.f32 %v633, %v2254
        %v2256 = vpop.f32.mrb[0].mxu0
        %v2257 = vadd.f32 %v637, %v2256
        %v2258 = vpop.f32.mrb[0].mxu0
        %v2259 = vadd.f32 %v633, %v2258
        %v2260 = vpop.f32.mrb[0].mxu0
        %v2261 = vadd.f32 %v637, %v2260
        %2262 = vmatprep.mubr.bf16.mxu0 %v1023
        %2263 = vmatmul.mubr.bf16.gmra.mrb[0].mxu0 %v1022
        %v2264 = vpop.f32.mrb[0].mxu0
        %v2265 = vadd.f32 %v633, %v2264
        %v2266 = vpop.f32.mrb[0].mxu0
        %v2267 = vadd.f32 %v637, %v2266
        %v2268 = vpop.f32.mrb[0].mxu0
        %v2269 = vadd.f32 %v633, %v2268
        %v2270 = vpop.f32.mrb[0].mxu0
        %v2271 = vadd.f32 %v637, %v2270
        %2272 = vmatprep.mubr.bf16.mxu0 %v1029
        %2273 = vmatmul.mubr.bf16.gmra.mrb[0].mxu0 %v1028
        %v2274 = vpop.f32.mrb[0].mxu0
        %v2275 = vadd.f32 %v633, %v2274
        %v2276 = vpop.f32.mrb[0].mxu0
        %v2277 = vadd.f32 %v637, %v2276
        %v2278 = vpop.f32.mrb[0].mxu0
        %v2279 = vadd.f32 %v633, %v2278
        %v2280 = vpop.f32.mrb[0].mxu0
        %v2281 = vadd.f32 %v637, %v2280
        %2282 = vdwg.mxu0
        %2283 = vmatprep.subr.bf16.mxu0 %v1771
        %2284 = vmatpush1.bf16.msra.mxu0 %v1770
        %2285 = vmatprep.subr.bf16.mxu0 %v1775
        %2286 = vmatpush1.bf16.msra.mxu0 %v1774
        %2287 = vmatprep.subr.bf16.mxu0 %v1779
        %2288 = vmatpush1.bf16.msra.mxu0 %v1778
        %2289 = vmatprep.subr.bf16.mxu0 %v1783
        %2290 = vmatpush1.bf16.msra.mxu0 %v1782
        %2291 = vmatprep.subr.bf16.mxu0 %v1787
        %2292 = vmatpush1.bf16.msra.mxu0 %v1786
        %2293 = vmatprep.subr.bf16.mxu0 %v1791
        %2294 = vmatpush1.bf16.msra.mxu0 %v1790
        %2295 = vmatprep.subr.bf16.mxu0 %v1795
        %2296 = vmatpush1.bf16.msra.mxu0 %v1794
        %2297 = vmatprep.subr.bf16.mxu0 %v1799
        %2298 = vmatpush1.bf16.msra.mxu0 %v1798
        %2299 = vmatprep.subr.bf16.mxu0 %v1803
        %2300 = vmatpush1.bf16.msra.mxu0 %v1802
        %2301 = vmatprep.subr.bf16.mxu0 %v1807
        %2302 = vmatpush1.bf16.msra.mxu0 %v1806
        %2303 = vmatprep.subr.bf16.mxu0 %v1811
        %2304 = vmatpush1.bf16.msra.mxu0 %v1810
        %2305 = vmatprep.subr.bf16.mxu0 %v1815
        %2306 = vmatpush1.bf16.msra.mxu0 %v1814
        %2307 = vmatprep.subr.bf16.mxu0 %v1819
        %2308 = vmatpush1.bf16.msra.mxu0 %v1818
        %2309 = vmatprep.subr.bf16.mxu0 %v1823
        %2310 = vmatpush1.bf16.msra.mxu0 %v1822
        %2311 = vmatprep.subr.bf16.mxu0 %v1827
        %2312 = vmatpush1.bf16.msra.mxu0 %v1826
        %2313 = vmatprep.subr.bf16.mxu0 %v1831
        %2314 = vmatpush1.bf16.msra.mxu0 %v1830
        %2315 = vmatprep.mubr.bf16.mxu0 %v941
        %2316 = vmatmul.mubr.bf16.gmra.mrb[0].mxu0 %v940
        %v2317 = vpop.f32.mrb[0].mxu0
        %v2318 = vadd.f32 %v2125, %v2317
        %v2319 = vpop.f32.mrb[0].mxu0
        %v2320 = vadd.f32 %v2127, %v2319
        %v2321 = vpop.f32.mrb[0].mxu0
        %v2322 = vadd.f32 %v2129, %v2321
        %v2323 = vpop.f32.mrb[0].mxu0
        %v2324 = vadd.f32 %v2131, %v2323
        %2325 = vmatprep.mubr.bf16.mxu0 %v947
        %2326 = vmatmul.mubr.bf16.gmra.mrb[0].mxu0 %v946
        %v2327 = vpop.f32.mrb[0].mxu0
        %v2328 = vadd.f32 %v2135, %v2327
        %v2329 = vpop.f32.mrb[0].mxu0
        %v2330 = vadd.f32 %v2137, %v2329
        %v2331 = vpop.f32.mrb[0].mxu0
        %v2332 = vadd.f32 %v2139, %v2331
        %v2333 = vpop.f32.mrb[0].mxu0
        %v2334 = vadd.f32 %v2141, %v2333
        %2335 = vmatprep.mubr.bf16.mxu0 %v953
        %2336 = vmatmul.mubr.bf16.gmra.mrb[0].mxu0 %v952
        %v2337 = vpop.f32.mrb[0].mxu0
        %v2338 = vadd.f32 %v2145, %v2337
        %v2339 = vpop.f32.mrb[0].mxu0
        %v2340 = vadd.f32 %v2147, %v2339
        %v2341 = vpop.f32.mrb[0].mxu0
        %v2342 = vadd.f32 %v2149, %v2341
        %v2343 = vpop.f32.mrb[0].mxu0
        %v2344 = vadd.f32 %v2151, %v2343
        %2345 = vmatprep.mubr.bf16.mxu0 %v959
        %2346 = vmatmul.mubr.bf16.gmra.mrb[0].mxu0 %v958
        %v2347 = vpop.f32.mrb[0].mxu0
        %v2348 = vadd.f32 %v2155, %v2347
        %v2349 = vpop.f32.mrb[0].mxu0
        %v2350 = vadd.f32 %v2157, %v2349
        %v2351 = vpop.f32.mrb[0].mxu0
        %v2352 = vadd.f32 %v2159, %v2351
        %v2353 = vpop.f32.mrb[0].mxu0
        %v2354 = vadd.f32 %v2161, %v2353
        %2355 = vmatprep.mubr.bf16.mxu0 %v965
        %2356 = vmatmul.mubr.bf16.gmra.mrb[0].mxu0 %v964
        %v2357 = vpop.f32.mrb[0].mxu0
        %v2358 = vadd.f32 %v2165, %v2357
        %v2359 = vpop.f32.mrb[0].mxu0
        %v2360 = vadd.f32 %v2167, %v2359
        %v2361 = vpop.f32.mrb[0].mxu0
        %v2362 = vadd.f32 %v2169, %v2361
        %v2363 = vpop.f32.mrb[0].mxu0
        %v2364 = vadd.f32 %v2171, %v2363
        %2365 = vmatprep.mubr.bf16.mxu0 %v971
        %2366 = vmatmul.mubr.bf16.gmra.mrb[0].mxu0 %v970
        %v2367 = vpop.f32.mrb[0].mxu0
        %v2368 = vadd.f32 %v2175, %v2367
        %v2369 = vpop.f32.mrb[0].mxu0
        %v2370 = vadd.f32 %v2177, %v2369
        %v2371 = vpop.f32.mrb[0].mxu0
        %v2372 = vadd.f32 %v2179, %v2371
        %v2373 = vpop.f32.mrb[0].mxu0
        %v2374 = vadd.f32 %v2181, %v2373
        %2375 = vmatprep.mubr.bf16.mxu0 %v977
        %2376 = vmatmul.mubr.bf16.gmra.mrb[0].mxu0 %v976
        %v2377 = vpop.f32.mrb[0].mxu0
        %v2378 = vadd.f32 %v2185, %v2377
        %v2379 = vpop.f32.mrb[0].mxu0
        %v2380 = vadd.f32 %v2187, %v2379
        %v2381 = vpop.f32.mrb[0].mxu0
        %v2382 = vadd.f32 %v2189, %v2381
        %v2383 = vpop.f32.mrb[0].mxu0
        %v2384 = vadd.f32 %v2191, %v2383
        %2385 = vmatprep.mubr.bf16.mxu0 %v983
        %2386 = vmatmul.mubr.bf16.gmra.mrb[0].mxu0 %v982
        %v2387 = vpop.f32.mrb[0].mxu0
        %v2388 = vadd.f32 %v2195, %v2387
        %v2389 = vpop.f32.mrb[0].mxu0
        %v2390 = vadd.f32 %v2197, %v2389
        %v2391 = vpop.f32.mrb[0].mxu0
        %v2392 = vadd.f32 %v2199, %v2391
        %v2393 = vpop.f32.mrb[0].mxu0
        %v2394 = vadd.f32 %v2201, %v2393
        %2395 = vmatprep.mubr.bf16.mxu0 %v989
        %2396 = vmatmul.mubr.bf16.gmra.mrb[0].mxu0 %v988
        %v2397 = vpop.f32.mrb[0].mxu0
        %v2398 = vadd.f32 %v2205, %v2397
        %v2399 = vpop.f32.mrb[0].mxu0
        %v2400 = vadd.f32 %v2207, %v2399
        %v2401 = vpop.f32.mrb[0].mxu0
        %v2402 = vadd.f32 %v2209, %v2401
        %v2403 = vpop.f32.mrb[0].mxu0
        %v2404 = vadd.f32 %v2211, %v2403
        %2405 = vmatprep.mubr.bf16.mxu0 %v995
        %2406 = vmatmul.mubr.bf16.gmra.mrb[0].mxu0 %v994
        %v2407 = vpop.f32.mrb[0].mxu0
        %v2408 = vadd.f32 %v2215, %v2407
        %v2409 = vpop.f32.mrb[0].mxu0
        %v2410 = vadd.f32 %v2217, %v2409
        %v2411 = vpop.f32.mrb[0].mxu0
        %v2412 = vadd.f32 %v2219, %v2411
        %v2413 = vpop.f32.mrb[0].mxu0
        %v2414 = vadd.f32 %v2221, %v2413
        %2415 = vmatprep.mubr.bf16.mxu0 %v1001
        %2416 = vmatmul.mubr.bf16.gmra.mrb[0].mxu0 %v1000
        %v2417 = vpop.f32.mrb[0].mxu0
        %v2418 = vadd.f32 %v2225, %v2417
        %v2419 = vpop.f32.mrb[0].mxu0
        %v2420 = vadd.f32 %v2227, %v2419
        %v2421 = vpop.f32.mrb[0].mxu0
        %v2422 = vadd.f32 %v2229, %v2421
        %v2423 = vpop.f32.mrb[0].mxu0
        %v2424 = vadd.f32 %v2231, %v2423
        %2425 = vmatprep.mubr.bf16.mxu0 %v1007
        %2426 = vmatmul.mubr.bf16.gmra.mrb[0].mxu0 %v1006
        %v2427 = vpop.f32.mrb[0].mxu0
        %v2428 = vadd.f32 %v2235, %v2427
        %v2429 = vpop.f32.mrb[0].mxu0
        %v2430 = vadd.f32 %v2237, %v2429
        %v2431 = vpop.f32.mrb[0].mxu0
        %v2432 = vadd.f32 %v2239, %v2431
        %v2433 = vpop.f32.mrb[0].mxu0
        %v2434 = vadd.f32 %v2241, %v2433
        %2435 = vmatprep.mubr.bf16.mxu0 %v1013
        %2436 = vmatmul.mubr.bf16.gmra.mrb[0].mxu0 %v1012
        %v2437 = vpop.f32.mrb[0].mxu0
        %v2438 = vadd.f32 %v2245, %v2437
        %v2439 = vpop.f32.mrb[0].mxu0
        %v2440 = vadd.f32 %v2247, %v2439
        %v2441 = vpop.f32.mrb[0].mxu0
        %v2442 = vadd.f32 %v2249, %v2441
        %v2443 = vpop.f32.mrb[0].mxu0
        %v2444 = vadd.f32 %v2251, %v2443
        %2445 = vmatprep.mubr.bf16.mxu0 %v1019
        %2446 = vmatmul.mubr.bf16.gmra.mrb[0].mxu0 %v1018
        %v2447 = vpop.f32.mrb[0].mxu0
        %v2448 = vadd.f32 %v2255, %v2447
        %v2449 = vpop.f32.mrb[0].mxu0
        %v2450 = vadd.f32 %v2257, %v2449
        %v2451 = vpop.f32.mrb[0].mxu0
        %v2452 = vadd.f32 %v2259, %v2451
        %v2453 = vpop.f32.mrb[0].mxu0
        %v2454 = vadd.f32 %v2261, %v2453
        %2455 = vmatprep.mubr.bf16.mxu0 %v1025
        %2456 = vmatmul.mubr.bf16.gmra.mrb[0].mxu0 %v1024
        %v2457 = vpop.f32.mrb[0].mxu0
        %v2458 = vadd.f32 %v2265, %v2457
        %v2459 = vpop.f32.mrb[0].mxu0
        %v2460 = vadd.f32 %v2267, %v2459
        %v2461 = vpop.f32.mrb[0].mxu0
        %v2462 = vadd.f32 %v2269, %v2461
        %v2463 = vpop.f32.mrb[0].mxu0
        %v2464 = vadd.f32 %v2271, %v2463
        %2465 = vmatprep.mubr.bf16.mxu0 %v1031
        %2466 = vmatmul.mubr.bf16.gmra.mrb[0].mxu0 %v1030
        %v2467 = vpop.f32.mrb[0].mxu0
        %v2468 = vadd.f32 %v2275, %v2467
        %v2469 = vpop.f32.mrb[0].mxu0
        %v2470 = vadd.f32 %v2277, %v2469
        %v2471 = vpop.f32.mrb[0].mxu0
        %v2472 = vadd.f32 %v2279, %v2471
        %v2473 = vpop.f32.mrb[0].mxu0
        %v2474 = vadd.f32 %v2281, %v2473
        %2475 = vdwg.mxu0
        %2476 = vmatprep.subr.bf16.mxu0 %v1835
        %2477 = vmatpush1.bf16.msra.mxu0 %v1834
        %2478 = vmatprep.subr.bf16.mxu0 %v1839
        %2479 = vmatpush1.bf16.msra.mxu0 %v1838
        %2480 = vmatprep.subr.bf16.mxu0 %v1843
        %2481 = vmatpush1.bf16.msra.mxu0 %v1842
        %2482 = vmatprep.subr.bf16.mxu0 %v1847
        %2483 = vmatpush1.bf16.msra.mxu0 %v1846
        %2484 = vmatprep.subr.bf16.mxu0 %v1851
        %2485 = vmatpush1.bf16.msra.mxu0 %v1850
        %2486 = vmatprep.subr.bf16.mxu0 %v1855
        %2487 = vmatpush1.bf16.msra.mxu0 %v1854
        %2488 = vmatprep.subr.bf16.mxu0 %v1859
        %2489 = vmatpush1.bf16.msra.mxu0 %v1858
        %2490 = vmatprep.subr.bf16.mxu0 %v1863
        %2491 = vmatpush1.bf16.msra.mxu0 %v1862
        %2492 = vmatprep.subr.bf16.mxu0 %v1867
        %2493 = vmatpush1.bf16.msra.mxu0 %v1866
        %2494 = vmatprep.subr.bf16.mxu0 %v1871
        %2495 = vmatpush1.bf16.msra.mxu0 %v1870
        %2496 = vmatprep.subr.bf16.mxu0 %v1875
        %2497 = vmatpush1.bf16.msra.mxu0 %v1874
        %2498 = vmatprep.subr.bf16.mxu0 %v1879
        %2499 = vmatpush1.bf16.msra.mxu0 %v1878
        %2500 = vmatprep.subr.bf16.mxu0 %v1883
        %2501 = vmatpush1.bf16.msra.mxu0 %v1882
        %2502 = vmatprep.subr.bf16.mxu0 %v1887
        %2503 = vmatpush1.bf16.msra.mxu0 %v1886
        %2504 = vmatprep.subr.bf16.mxu0 %v1891
        %2505 = vmatpush1.bf16.msra.mxu0 %v1890
        %2506 = vmatprep.subr.bf16.mxu0 %v1895
        %2507 = vmatpush1.bf16.msra.mxu0 %v1894
        %2508 = vmatprep.mubr.bf16.mxu0 %v943
        %2509 = vmatmul.mubr.bf16.gmra.mrb[0].mxu0 %v942
        %v2510 = vpop.f32.mrb[0].mxu0
        %v2511 = vadd.f32 %v2318, %v2510
        %v2512 = vpop.f32.mrb[0].mxu0
        %v2513 = vadd.f32 %v2320, %v2512
        %v2514 = vpop.f32.mrb[0].mxu0
        %v2515 = vadd.f32 %v2322, %v2514
        %v2516 = vpop.f32.mrb[0].mxu0
        %v2517 = vadd.f32 %v2324, %v2516
        %2518 = vmatprep.mubr.bf16.mxu0 %v949
        %2519 = vmatmul.mubr.bf16.gmra.mrb[0].mxu0 %v948
        %v2520 = vpop.f32.mrb[0].mxu0
        %v2521 = vadd.f32 %v2328, %v2520
        %v2522 = vpop.f32.mrb[0].mxu0
        %v2523 = vadd.f32 %v2330, %v2522
        %v2524 = vpop.f32.mrb[0].mxu0
        %v2525 = vadd.f32 %v2332, %v2524
        %v2526 = vpop.f32.mrb[0].mxu0
        %v2527 = vadd.f32 %v2334, %v2526
        %2528 = vmatprep.mubr.bf16.mxu0 %v955
        %2529 = vmatmul.mubr.bf16.gmra.mrb[0].mxu0 %v954
        %v2530 = vpop.f32.mrb[0].mxu0
        %v2531 = vadd.f32 %v2338, %v2530
        %v2532 = vpop.f32.mrb[0].mxu0
        %v2533 = vadd.f32 %v2340, %v2532
        %v2534 = vpop.f32.mrb[0].mxu0
        %v2535 = vadd.f32 %v2342, %v2534
        %v2536 = vpop.f32.mrb[0].mxu0
        %v2537 = vadd.f32 %v2344, %v2536
        %2538 = vmatprep.mubr.bf16.mxu0 %v961
        %2539 = vmatmul.mubr.bf16.gmra.mrb[0].mxu0 %v960
        %v2540 = vpop.f32.mrb[0].mxu0
        %v2541 = vadd.f32 %v2348, %v2540
        %v2542 = vpop.f32.mrb[0].mxu0
        %v2543 = vadd.f32 %v2350, %v2542
        %v2544 = vpop.f32.mrb[0].mxu0
        %v2545 = vadd.f32 %v2352, %v2544
        %v2546 = vpop.f32.mrb[0].mxu0
        %v2547 = vadd.f32 %v2354, %v2546
        %2548 = vmatprep.mubr.bf16.mxu0 %v967
        %2549 = vmatmul.mubr.bf16.gmra.mrb[0].mxu0 %v966
        %v2550 = vpop.f32.mrb[0].mxu0
        %v2551 = vadd.f32 %v2358, %v2550
        %v2552 = vpop.f32.mrb[0].mxu0
        %v2553 = vadd.f32 %v2360, %v2552
        %v2554 = vpop.f32.mrb[0].mxu0
        %v2555 = vadd.f32 %v2362, %v2554
        %v2556 = vpop.f32.mrb[0].mxu0
        %v2557 = vadd.f32 %v2364, %v2556
        %2558 = vmatprep.mubr.bf16.mxu0 %v973
        %2559 = vmatmul.mubr.bf16.gmra.mrb[0].mxu0 %v972
        %v2560 = vpop.f32.mrb[0].mxu0
        %v2561 = vadd.f32 %v2368, %v2560
        %v2562 = vpop.f32.mrb[0].mxu0
        %v2563 = vadd.f32 %v2370, %v2562
        %v2564 = vpop.f32.mrb[0].mxu0
        %v2565 = vadd.f32 %v2372, %v2564
        %v2566 = vpop.f32.mrb[0].mxu0
        %v2567 = vadd.f32 %v2374, %v2566
        %2568 = vmatprep.mubr.bf16.mxu0 %v979
        %2569 = vmatmul.mubr.bf16.gmra.mrb[0].mxu0 %v978
        %v2570 = vpop.f32.mrb[0].mxu0
        %v2571 = vadd.f32 %v2378, %v2570
        %v2572 = vpop.f32.mrb[0].mxu0
        %v2573 = vadd.f32 %v2380, %v2572
        %v2574 = vpop.f32.mrb[0].mxu0
        %v2575 = vadd.f32 %v2382, %v2574
        %v2576 = vpop.f32.mrb[0].mxu0
        %v2577 = vadd.f32 %v2384, %v2576
        %2578 = vmatprep.mubr.bf16.mxu0 %v985
        %2579 = vmatmul.mubr.bf16.gmra.mrb[0].mxu0 %v984
        %v2580 = vpop.f32.mrb[0].mxu0
        %v2581 = vadd.f32 %v2388, %v2580
        %v2582 = vpop.f32.mrb[0].mxu0
        %v2583 = vadd.f32 %v2390, %v2582
        %v2584 = vpop.f32.mrb[0].mxu0
        %v2585 = vadd.f32 %v2392, %v2584
        %v2586 = vpop.f32.mrb[0].mxu0
        %v2587 = vadd.f32 %v2394, %v2586
        %2588 = vmatprep.mubr.bf16.mxu0 %v991
        %2589 = vmatmul.mubr.bf16.gmra.mrb[0].mxu0 %v990
        %v2590 = vpop.f32.mrb[0].mxu0
        %v2591 = vadd.f32 %v2398, %v2590
        %v2592 = vpop.f32.mrb[0].mxu0
        %v2593 = vadd.f32 %v2400, %v2592
        %v2594 = vpop.f32.mrb[0].mxu0
        %v2595 = vadd.f32 %v2402, %v2594
        %v2596 = vpop.f32.mrb[0].mxu0
        %v2597 = vadd.f32 %v2404, %v2596
        %2598 = vmatprep.mubr.bf16.mxu0 %v997
        %2599 = vmatmul.mubr.bf16.gmra.mrb[0].mxu0 %v996
        %v2600 = vpop.f32.mrb[0].mxu0
        %v2601 = vadd.f32 %v2408, %v2600
        %v2602 = vpop.f32.mrb[0].mxu0
        %v2603 = vadd.f32 %v2410, %v2602
        %v2604 = vpop.f32.mrb[0].mxu0
        %v2605 = vadd.f32 %v2412, %v2604
        %v2606 = vpop.f32.mrb[0].mxu0
        %v2607 = vadd.f32 %v2414, %v2606
        %2608 = vmatprep.mubr.bf16.mxu0 %v1003
        %2609 = vmatmul.mubr.bf16.gmra.mrb[0].mxu0 %v1002
        %v2610 = vpop.f32.mrb[0].mxu0
        %v2611 = vadd.f32 %v2418, %v2610
        %v2612 = vpop.f32.mrb[0].mxu0
        %v2613 = vadd.f32 %v2420, %v2612
        %v2614 = vpop.f32.mrb[0].mxu0
        %v2615 = vadd.f32 %v2422, %v2614
        %v2616 = vpop.f32.mrb[0].mxu0
        %v2617 = vadd.f32 %v2424, %v2616
        %2618 = vmatprep.mubr.bf16.mxu0 %v1009
        %2619 = vmatmul.mubr.bf16.gmra.mrb[0].mxu0 %v1008
        %v2620 = vpop.f32.mrb[0].mxu0
        %v2621 = vadd.f32 %v2428, %v2620
        %v2622 = vpop.f32.mrb[0].mxu0
        %v2623 = vadd.f32 %v2430, %v2622
        %v2624 = vpop.f32.mrb[0].mxu0
        %v2625 = vadd.f32 %v2432, %v2624
        %v2626 = vpop.f32.mrb[0].mxu0
        %v2627 = vadd.f32 %v2434, %v2626
        %2628 = vmatprep.mubr.bf16.mxu0 %v1015
        %2629 = vmatmul.mubr.bf16.gmra.mrb[0].mxu0 %v1014
        %v2630 = vpop.f32.mrb[0].mxu0
        %v2631 = vadd.f32 %v2438, %v2630
        %v2632 = vpop.f32.mrb[0].mxu0
        %v2633 = vadd.f32 %v2440, %v2632
        %v2634 = vpop.f32.mrb[0].mxu0
        %v2635 = vadd.f32 %v2442, %v2634
        %v2636 = vpop.f32.mrb[0].mxu0
        %v2637 = vadd.f32 %v2444, %v2636
        %2638 = vmatprep.mubr.bf16.mxu0 %v1021
        %2639 = vmatmul.mubr.bf16.gmra.mrb[0].mxu0 %v1020
        %v2640 = vpop.f32.mrb[0].mxu0
        %v2641 = vadd.f32 %v2448, %v2640
        %v2642 = vpop.f32.mrb[0].mxu0
        %v2643 = vadd.f32 %v2450, %v2642
        %v2644 = vpop.f32.mrb[0].mxu0
        %v2645 = vadd.f32 %v2452, %v2644
        %v2646 = vpop.f32.mrb[0].mxu0
        %v2647 = vadd.f32 %v2454, %v2646
        %2648 = vmatprep.mubr.bf16.mxu0 %v1027
        %2649 = vmatmul.mubr.bf16.gmra.mrb[0].mxu0 %v1026
        %v2650 = vpop.f32.mrb[0].mxu0
        %v2651 = vadd.f32 %v2458, %v2650
        %v2652 = vpop.f32.mrb[0].mxu0
        %v2653 = vadd.f32 %v2460, %v2652
        %v2654 = vpop.f32.mrb[0].mxu0
        %v2655 = vadd.f32 %v2462, %v2654
        %v2656 = vpop.f32.mrb[0].mxu0
        %v2657 = vadd.f32 %v2464, %v2656
        %2658 = vmatprep.mubr.bf16.mxu0 %v1033
        %2659 = vmatmul.mubr.bf16.gmra.mrb[0].mxu0 %v1032
        %v2660 = vpop.f32.mrb[0].mxu0
        %v2661 = vadd.f32 %v2468, %v2660
        %v2662 = vpop.f32.mrb[0].mxu0
        %v2663 = vadd.f32 %v2470, %v2662
        %v2664 = vpop.f32.mrb[0].mxu0
        %v2665 = vadd.f32 %v2472, %v2664
        %v2666 = vpop.f32.mrb[0].mxu0
        %v2667 = vadd.f32 %v2474, %v2666
        %2668 = vdwg.mxu0
        %2669 = vmatprep.subr.bf16.mxu0 %v1709
        %2670 = vmatpush1.bf16.msra.mxu0 %v1708
        %2671 = vmatprep.subr.bf16.mxu0 %v1713
        %2672 = vmatpush1.bf16.msra.mxu0 %v1712
        %2673 = vmatprep.subr.bf16.mxu0 %v1717
        %2674 = vmatpush1.bf16.msra.mxu0 %v1716
        %2675 = vmatprep.subr.bf16.mxu0 %v1721
        %2676 = vmatpush1.bf16.msra.mxu0 %v1720
        %2677 = vmatprep.subr.bf16.mxu0 %v1725
        %2678 = vmatpush1.bf16.msra.mxu0 %v1724
        %2679 = vmatprep.subr.bf16.mxu0 %v1729
        %2680 = vmatpush1.bf16.msra.mxu0 %v1728
        %2681 = vmatprep.subr.bf16.mxu0 %v1733
        %2682 = vmatpush1.bf16.msra.mxu0 %v1732
        %2683 = vmatprep.subr.bf16.mxu0 %v1737
        %2684 = vmatpush1.bf16.msra.mxu0 %v1736
        %2685 = vmatprep.subr.bf16.mxu0 %v1741
        %2686 = vmatpush1.bf16.msra.mxu0 %v1740
        %2687 = vmatprep.subr.bf16.mxu0 %v1745
        %2688 = vmatpush1.bf16.msra.mxu0 %v1744
        %2689 = vmatprep.subr.bf16.mxu0 %v1749
        %2690 = vmatpush1.bf16.msra.mxu0 %v1748
        %2691 = vmatprep.subr.bf16.mxu0 %v1753
        %2692 = vmatpush1.bf16.msra.mxu0 %v1752
        %2693 = vmatprep.subr.bf16.mxu0 %v1757
        %2694 = vmatpush1.bf16.msra.mxu0 %v1756
        %2695 = vmatprep.subr.bf16.mxu0 %v1761
        %2696 = vmatpush1.bf16.msra.mxu0 %v1760
        %2697 = vmatprep.subr.bf16.mxu0 %v1765
        %2698 = vmatpush1.bf16.msra.mxu0 %v1764
        %2699 = vmatprep.subr.bf16.mxu0 %v1769
        %2700 = vmatpush1.bf16.msra.mxu0 %v1768
        %2701 = vmatprep.mubr.bf16.mxu0 %v939
        %2702 = vmatmul.mubr.bf16.gmra.mrb[0].mxu0 %v938
        %v2703 = vpop.f32.mrb[0].mxu0
        %v2704 = vadd.f32 %v641, %v2703
        %v2705 = vpop.f32.mrb[0].mxu0
        %v2706 = vadd.f32 %v645, %v2705
        %v2707 = vpop.f32.mrb[0].mxu0
        %v2708 = vadd.f32 %v641, %v2707
        %v2709 = vpop.f32.mrb[0].mxu0
        %v2710 = vadd.f32 %v645, %v2709
        %2711 = vmatprep.mubr.bf16.mxu0 %v945
        %2712 = vmatmul.mubr.bf16.gmra.mrb[0].mxu0 %v944
        %v2713 = vpop.f32.mrb[0].mxu0
        %v2714 = vadd.f32 %v641, %v2713
        %v2715 = vpop.f32.mrb[0].mxu0
        %v2716 = vadd.f32 %v645, %v2715
        %v2717 = vpop.f32.mrb[0].mxu0
        %v2718 = vadd.f32 %v641, %v2717
        %v2719 = vpop.f32.mrb[0].mxu0
        %v2720 = vadd.f32 %v645, %v2719
        %2721 = vmatprep.mubr.bf16.mxu0 %v951
        %2722 = vmatmul.mubr.bf16.gmra.mrb[0].mxu0 %v950
        %v2723 = vpop.f32.mrb[0].mxu0
        %v2724 = vadd.f32 %v641, %v2723
        %v2725 = vpop.f32.mrb[0].mxu0
        %v2726 = vadd.f32 %v645, %v2725
        %v2727 = vpop.f32.mrb[0].mxu0
        %v2728 = vadd.f32 %v641, %v2727
        %v2729 = vpop.f32.mrb[0].mxu0
        %v2730 = vadd.f32 %v645, %v2729
        %2731 = vmatprep.mubr.bf16.mxu0 %v957
        %2732 = vmatmul.mubr.bf16.gmra.mrb[0].mxu0 %v956
        %v2733 = vpop.f32.mrb[0].mxu0
        %v2734 = vadd.f32 %v641, %v2733
        %v2735 = vpop.f32.mrb[0].mxu0
        %v2736 = vadd.f32 %v645, %v2735
        %v2737 = vpop.f32.mrb[0].mxu0
        %v2738 = vadd.f32 %v641, %v2737
        %v2739 = vpop.f32.mrb[0].mxu0
        %v2740 = vadd.f32 %v645, %v2739
        %2741 = vmatprep.mubr.bf16.mxu0 %v963
        %2742 = vmatmul.mubr.bf16.gmra.mrb[0].mxu0 %v962
        %v2743 = vpop.f32.mrb[0].mxu0
        %v2744 = vadd.f32 %v641, %v2743
        %v2745 = vpop.f32.mrb[0].mxu0
        %v2746 = vadd.f32 %v645, %v2745
        %v2747 = vpop.f32.mrb[0].mxu0
        %v2748 = vadd.f32 %v641, %v2747
        %v2749 = vpop.f32.mrb[0].mxu0
        %v2750 = vadd.f32 %v645, %v2749
        %2751 = vmatprep.mubr.bf16.mxu0 %v969
        %2752 = vmatmul.mubr.bf16.gmra.mrb[0].mxu0 %v968
        %v2753 = vpop.f32.mrb[0].mxu0
        %v2754 = vadd.f32 %v641, %v2753
        %v2755 = vpop.f32.mrb[0].mxu0
        %v2756 = vadd.f32 %v645, %v2755
        %v2757 = vpop.f32.mrb[0].mxu0
        %v2758 = vadd.f32 %v641, %v2757
        %v2759 = vpop.f32.mrb[0].mxu0
        %v2760 = vadd.f32 %v645, %v2759
        %2761 = vmatprep.mubr.bf16.mxu0 %v975
        %2762 = vmatmul.mubr.bf16.gmra.mrb[0].mxu0 %v974
        %v2763 = vpop.f32.mrb[0].mxu0
        %v2764 = vadd.f32 %v641, %v2763
        %v2765 = vpop.f32.mrb[0].mxu0
        %v2766 = vadd.f32 %v645, %v2765
        %v2767 = vpop.f32.mrb[0].mxu0
        %v2768 = vadd.f32 %v641, %v2767
        %v2769 = vpop.f32.mrb[0].mxu0
        %v2770 = vadd.f32 %v645, %v2769
        %2771 = vmatprep.mubr.bf16.mxu0 %v981
        %2772 = vmatmul.mubr.bf16.gmra.mrb[0].mxu0 %v980
        %v2773 = vpop.f32.mrb[0].mxu0
        %v2774 = vadd.f32 %v641, %v2773
        %v2775 = vpop.f32.mrb[0].mxu0
        %v2776 = vadd.f32 %v645, %v2775
        %v2777 = vpop.f32.mrb[0].mxu0
        %v2778 = vadd.f32 %v641, %v2777
        %v2779 = vpop.f32.mrb[0].mxu0
        %v2780 = vadd.f32 %v645, %v2779
        %2781 = vmatprep.mubr.bf16.mxu0 %v987
        %2782 = vmatmul.mubr.bf16.gmra.mrb[0].mxu0 %v986
        %v2783 = vpop.f32.mrb[0].mxu0
        %v2784 = vadd.f32 %v641, %v2783
        %v2785 = vpop.f32.mrb[0].mxu0
        %v2786 = vadd.f32 %v645, %v2785
        %v2787 = vpop.f32.mrb[0].mxu0
        %v2788 = vadd.f32 %v641, %v2787
        %v2789 = vpop.f32.mrb[0].mxu0
        %v2790 = vadd.f32 %v645, %v2789
        %2791 = vmatprep.mubr.bf16.mxu0 %v993
        %2792 = vmatmul.mubr.bf16.gmra.mrb[0].mxu0 %v992
        %v2793 = vpop.f32.mrb[0].mxu0
        %v2794 = vadd.f32 %v641, %v2793
        %v2795 = vpop.f32.mrb[0].mxu0
        %v2796 = vadd.f32 %v645, %v2795
        %v2797 = vpop.f32.mrb[0].mxu0
        %v2798 = vadd.f32 %v641, %v2797
        %v2799 = vpop.f32.mrb[0].mxu0
        %v2800 = vadd.f32 %v645, %v2799
        %2801 = vmatprep.mubr.bf16.mxu0 %v999
        %2802 = vmatmul.mubr.bf16.gmra.mrb[0].mxu0 %v998
        %v2803 = vpop.f32.mrb[0].mxu0
        %v2804 = vadd.f32 %v641, %v2803
        %v2805 = vpop.f32.mrb[0].mxu0
        %v2806 = vadd.f32 %v645, %v2805
        %v2807 = vpop.f32.mrb[0].mxu0
        %v2808 = vadd.f32 %v641, %v2807
        %v2809 = vpop.f32.mrb[0].mxu0
        %v2810 = vadd.f32 %v645, %v2809
        %2811 = vmatprep.mubr.bf16.mxu0 %v1005
        %2812 = vmatmul.mubr.bf16.gmra.mrb[0].mxu0 %v1004
        %v2813 = vpop.f32.mrb[0].mxu0
        %v2814 = vadd.f32 %v641, %v2813
        %v2815 = vpop.f32.mrb[0].mxu0
        %v2816 = vadd.f32 %v645, %v2815
        %v2817 = vpop.f32.mrb[0].mxu0
        %v2818 = vadd.f32 %v641, %v2817
        %v2819 = vpop.f32.mrb[0].mxu0
        %v2820 = vadd.f32 %v645, %v2819
        %2821 = vmatprep.mubr.bf16.mxu0 %v1011
        %2822 = vmatmul.mubr.bf16.gmra.mrb[0].mxu0 %v1010
        %v2823 = vpop.f32.mrb[0].mxu0
        %v2824 = vadd.f32 %v641, %v2823
        %v2825 = vpop.f32.mrb[0].mxu0
        %v2826 = vadd.f32 %v645, %v2825
        %v2827 = vpop.f32.mrb[0].mxu0
        %v2828 = vadd.f32 %v641, %v2827
        %v2829 = vpop.f32.mrb[0].mxu0
        %v2830 = vadd.f32 %v645, %v2829
        %2831 = vmatprep.mubr.bf16.mxu0 %v1017
        %2832 = vmatmul.mubr.bf16.gmra.mrb[0].mxu0 %v1016
        %v2833 = vpop.f32.mrb[0].mxu0
        %v2834 = vadd.f32 %v641, %v2833
        %v2835 = vpop.f32.mrb[0].mxu0
        %v2836 = vadd.f32 %v645, %v2835
        %v2837 = vpop.f32.mrb[0].mxu0
        %v2838 = vadd.f32 %v641, %v2837
        %v2839 = vpop.f32.mrb[0].mxu0
        %v2840 = vadd.f32 %v645, %v2839
        %2841 = vmatprep.mubr.bf16.mxu0 %v1023
        %2842 = vmatmul.mubr.bf16.gmra.mrb[0].mxu0 %v1022
        %v2843 = vpop.f32.mrb[0].mxu0
        %v2844 = vadd.f32 %v641, %v2843
        %v2845 = vpop.f32.mrb[0].mxu0
        %v2846 = vadd.f32 %v645, %v2845
        %v2847 = vpop.f32.mrb[0].mxu0
        %v2848 = vadd.f32 %v641, %v2847
        %v2849 = vpop.f32.mrb[0].mxu0
        %v2850 = vadd.f32 %v645, %v2849
        %2851 = vmatprep.mubr.bf16.mxu0 %v1029
        %2852 = vmatmul.mubr.bf16.gmra.mrb[0].mxu0 %v1028
        %v2853 = vpop.f32.mrb[0].mxu0
        %v2854 = vadd.f32 %v641, %v2853
        %v2855 = vpop.f32.mrb[0].mxu0
        %v2856 = vadd.f32 %v645, %v2855
        %v2857 = vpop.f32.mrb[0].mxu0
        %v2858 = vadd.f32 %v641, %v2857
        %v2859 = vpop.f32.mrb[0].mxu0
        %v2860 = vadd.f32 %v645, %v2859
        %2861 = vdwg.mxu0
        %2862 = vmatprep.subr.bf16.mxu0 %v1773
        %2863 = vmatpush1.bf16.msra.mxu0 %v1772
        %2864 = vmatprep.subr.bf16.mxu0 %v1777
        %2865 = vmatpush1.bf16.msra.mxu0 %v1776
        %2866 = vmatprep.subr.bf16.mxu0 %v1781
        %2867 = vmatpush1.bf16.msra.mxu0 %v1780
        %2868 = vmatprep.subr.bf16.mxu0 %v1785
        %2869 = vmatpush1.bf16.msra.mxu0 %v1784
        %2870 = vmatprep.subr.bf16.mxu0 %v1789
        %2871 = vmatpush1.bf16.msra.mxu0 %v1788
        %2872 = vmatprep.subr.bf16.mxu0 %v1793
        %2873 = vmatpush1.bf16.msra.mxu0 %v1792
        %2874 = vmatprep.subr.bf16.mxu0 %v1797
        %2875 = vmatpush1.bf16.msra.mxu0 %v1796
        %2876 = vmatprep.subr.bf16.mxu0 %v1801
        %2877 = vmatpush1.bf16.msra.mxu0 %v1800
        %2878 = vmatprep.subr.bf16.mxu0 %v1805
        %2879 = vmatpush1.bf16.msra.mxu0 %v1804
        %2880 = vmatprep.subr.bf16.mxu0 %v1809
        %2881 = vmatpush1.bf16.msra.mxu0 %v1808
        %2882 = vmatprep.subr.bf16.mxu0 %v1813
        %2883 = vmatpush1.bf16.msra.mxu0 %v1812
        %2884 = vmatprep.subr.bf16.mxu0 %v1817
        %2885 = vmatpush1.bf16.msra.mxu0 %v1816
        %2886 = vmatprep.subr.bf16.mxu0 %v1821
        %2887 = vmatpush1.bf16.msra.mxu0 %v1820
        %2888 = vmatprep.subr.bf16.mxu0 %v1825
        %2889 = vmatpush1.bf16.msra.mxu0 %v1824
        %2890 = vmatprep.subr.bf16.mxu0 %v1829
        %2891 = vmatpush1.bf16.msra.mxu0 %v1828
        %2892 = vmatprep.subr.bf16.mxu0 %v1833
        %2893 = vmatpush1.bf16.msra.mxu0 %v1832
        %2894 = vmatprep.mubr.bf16.mxu0 %v941
        %2895 = vmatmul.mubr.bf16.gmra.mrb[0].mxu0 %v940
        %v2896 = vpop.f32.mrb[0].mxu0
        %v2897 = vadd.f32 %v2704, %v2896
        %v2898 = vpop.f32.mrb[0].mxu0
        %v2899 = vadd.f32 %v2706, %v2898
        %v2900 = vpop.f32.mrb[0].mxu0
        %v2901 = vadd.f32 %v2708, %v2900
        %v2902 = vpop.f32.mrb[0].mxu0
        %v2903 = vadd.f32 %v2710, %v2902
        %2904 = vmatprep.mubr.bf16.mxu0 %v947
        %2905 = vmatmul.mubr.bf16.gmra.mrb[0].mxu0 %v946
        %v2906 = vpop.f32.mrb[0].mxu0
        %v2907 = vadd.f32 %v2714, %v2906
        %v2908 = vpop.f32.mrb[0].mxu0
        %v2909 = vadd.f32 %v2716, %v2908
        %v2910 = vpop.f32.mrb[0].mxu0
        %v2911 = vadd.f32 %v2718, %v2910
        %v2912 = vpop.f32.mrb[0].mxu0
        %v2913 = vadd.f32 %v2720, %v2912
        %2914 = vmatprep.mubr.bf16.mxu0 %v953
        %2915 = vmatmul.mubr.bf16.gmra.mrb[0].mxu0 %v952
        %v2916 = vpop.f32.mrb[0].mxu0
        %v2917 = vadd.f32 %v2724, %v2916
        %v2918 = vpop.f32.mrb[0].mxu0
        %v2919 = vadd.f32 %v2726, %v2918
        %v2920 = vpop.f32.mrb[0].mxu0
        %v2921 = vadd.f32 %v2728, %v2920
        %v2922 = vpop.f32.mrb[0].mxu0
        %v2923 = vadd.f32 %v2730, %v2922
        %2924 = vmatprep.mubr.bf16.mxu0 %v959
        %2925 = vmatmul.mubr.bf16.gmra.mrb[0].mxu0 %v958
        %v2926 = vpop.f32.mrb[0].mxu0
        %v2927 = vadd.f32 %v2734, %v2926
        %v2928 = vpop.f32.mrb[0].mxu0
        %v2929 = vadd.f32 %v2736, %v2928
        %v2930 = vpop.f32.mrb[0].mxu0
        %v2931 = vadd.f32 %v2738, %v2930
        %v2932 = vpop.f32.mrb[0].mxu0
        %v2933 = vadd.f32 %v2740, %v2932
        %2934 = vmatprep.mubr.bf16.mxu0 %v965
        %2935 = vmatmul.mubr.bf16.gmra.mrb[0].mxu0 %v964
        %v2936 = vpop.f32.mrb[0].mxu0
        %v2937 = vadd.f32 %v2744, %v2936
        %v2938 = vpop.f32.mrb[0].mxu0
        %v2939 = vadd.f32 %v2746, %v2938
        %v2940 = vpop.f32.mrb[0].mxu0
        %v2941 = vadd.f32 %v2748, %v2940
        %v2942 = vpop.f32.mrb[0].mxu0
        %v2943 = vadd.f32 %v2750, %v2942
        %2944 = vmatprep.mubr.bf16.mxu0 %v971
        %2945 = vmatmul.mubr.bf16.gmra.mrb[0].mxu0 %v970
        %v2946 = vpop.f32.mrb[0].mxu0
        %v2947 = vadd.f32 %v2754, %v2946
        %v2948 = vpop.f32.mrb[0].mxu0
        %v2949 = vadd.f32 %v2756, %v2948
        %v2950 = vpop.f32.mrb[0].mxu0
        %v2951 = vadd.f32 %v2758, %v2950
        %v2952 = vpop.f32.mrb[0].mxu0
        %v2953 = vadd.f32 %v2760, %v2952
        %2954 = vmatprep.mubr.bf16.mxu0 %v977
        %2955 = vmatmul.mubr.bf16.gmra.mrb[0].mxu0 %v976
        %v2956 = vpop.f32.mrb[0].mxu0
        %v2957 = vadd.f32 %v2764, %v2956
        %v2958 = vpop.f32.mrb[0].mxu0
        %v2959 = vadd.f32 %v2766, %v2958
        %v2960 = vpop.f32.mrb[0].mxu0
        %v2961 = vadd.f32 %v2768, %v2960
        %v2962 = vpop.f32.mrb[0].mxu0
        %v2963 = vadd.f32 %v2770, %v2962
        %2964 = vmatprep.mubr.bf16.mxu0 %v983
        %2965 = vmatmul.mubr.bf16.gmra.mrb[0].mxu0 %v982
        %v2966 = vpop.f32.mrb[0].mxu0
        %v2967 = vadd.f32 %v2774, %v2966
        %v2968 = vpop.f32.mrb[0].mxu0
        %v2969 = vadd.f32 %v2776, %v2968
        %v2970 = vpop.f32.mrb[0].mxu0
        %v2971 = vadd.f32 %v2778, %v2970
        %v2972 = vpop.f32.mrb[0].mxu0
        %v2973 = vadd.f32 %v2780, %v2972
        %2974 = vmatprep.mubr.bf16.mxu0 %v989
        %2975 = vmatmul.mubr.bf16.gmra.mrb[0].mxu0 %v988
        %v2976 = vpop.f32.mrb[0].mxu0
        %v2977 = vadd.f32 %v2784, %v2976
        %v2978 = vpop.f32.mrb[0].mxu0
        %v2979 = vadd.f32 %v2786, %v2978
        %v2980 = vpop.f32.mrb[0].mxu0
        %v2981 = vadd.f32 %v2788, %v2980
        %v2982 = vpop.f32.mrb[0].mxu0
        %v2983 = vadd.f32 %v2790, %v2982
        %2984 = vmatprep.mubr.bf16.mxu0 %v995
        %2985 = vmatmul.mubr.bf16.gmra.mrb[0].mxu0 %v994
        %v2986 = vpop.f32.mrb[0].mxu0
        %v2987 = vadd.f32 %v2794, %v2986
        %v2988 = vpop.f32.mrb[0].mxu0
        %v2989 = vadd.f32 %v2796, %v2988
        %v2990 = vpop.f32.mrb[0].mxu0
        %v2991 = vadd.f32 %v2798, %v2990
        %v2992 = vpop.f32.mrb[0].mxu0
        %v2993 = vadd.f32 %v2800, %v2992
        %2994 = vmatprep.mubr.bf16.mxu0 %v1001
        %2995 = vmatmul.mubr.bf16.gmra.mrb[0].mxu0 %v1000
        %v2996 = vpop.f32.mrb[0].mxu0
        %v2997 = vadd.f32 %v2804, %v2996
        %v2998 = vpop.f32.mrb[0].mxu0
        %v2999 = vadd.f32 %v2806, %v2998
        %v3000 = vpop.f32.mrb[0].mxu0
        %v3001 = vadd.f32 %v2808, %v3000
        %v3002 = vpop.f32.mrb[0].mxu0
        %v3003 = vadd.f32 %v2810, %v3002
        %3004 = vmatprep.mubr.bf16.mxu0 %v1007
        %3005 = vmatmul.mubr.bf16.gmra.mrb[0].mxu0 %v1006
        %v3006 = vpop.f32.mrb[0].mxu0
        %v3007 = vadd.f32 %v2814, %v3006
        %v3008 = vpop.f32.mrb[0].mxu0
        %v3009 = vadd.f32 %v2816, %v3008
        %v3010 = vpop.f32.mrb[0].mxu0
        %v3011 = vadd.f32 %v2818, %v3010
        %v3012 = vpop.f32.mrb[0].mxu0
        %v3013 = vadd.f32 %v2820, %v3012
        %3014 = vmatprep.mubr.bf16.mxu0 %v1013
        %3015 = vmatmul.mubr.bf16.gmra.mrb[0].mxu0 %v1012
        %v3016 = vpop.f32.mrb[0].mxu0
        %v3017 = vadd.f32 %v2824, %v3016
        %v3018 = vpop.f32.mrb[0].mxu0
        %v3019 = vadd.f32 %v2826, %v3018
        %v3020 = vpop.f32.mrb[0].mxu0
        %v3021 = vadd.f32 %v2828, %v3020
        %v3022 = vpop.f32.mrb[0].mxu0
        %v3023 = vadd.f32 %v2830, %v3022
        %3024 = vmatprep.mubr.bf16.mxu0 %v1019
        %3025 = vmatmul.mubr.bf16.gmra.mrb[0].mxu0 %v1018
        %v3026 = vpop.f32.mrb[0].mxu0
        %v3027 = vadd.f32 %v2834, %v3026
        %v3028 = vpop.f32.mrb[0].mxu0
        %v3029 = vadd.f32 %v2836, %v3028
        %v3030 = vpop.f32.mrb[0].mxu0
        %v3031 = vadd.f32 %v2838, %v3030
        %v3032 = vpop.f32.mrb[0].mxu0
        %v3033 = vadd.f32 %v2840, %v3032
        %3034 = vmatprep.mubr.bf16.mxu0 %v1025
        %3035 = vmatmul.mubr.bf16.gmra.mrb[0].mxu0 %v1024
        %v3036 = vpop.f32.mrb[0].mxu0
        %v3037 = vadd.f32 %v2844, %v3036
        %v3038 = vpop.f32.mrb[0].mxu0
        %v3039 = vadd.f32 %v2846, %v3038
        %v3040 = vpop.f32.mrb[0].mxu0
        %v3041 = vadd.f32 %v2848, %v3040
        %v3042 = vpop.f32.mrb[0].mxu0
        %v3043 = vadd.f32 %v2850, %v3042
        %3044 = vmatprep.mubr.bf16.mxu0 %v1031
        %3045 = vmatmul.mubr.bf16.gmra.mrb[0].mxu0 %v1030
        %v3046 = vpop.f32.mrb[0].mxu0
        %v3047 = vadd.f32 %v2854, %v3046
        %v3048 = vpop.f32.mrb[0].mxu0
        %v3049 = vadd.f32 %v2856, %v3048
        %v3050 = vpop.f32.mrb[0].mxu0
        %v3051 = vadd.f32 %v2858, %v3050
        %v3052 = vpop.f32.mrb[0].mxu0
        %v3053 = vadd.f32 %v2860, %v3052
        %3054 = vdwg.mxu0
        %3055 = vmatprep.subr.bf16.mxu0 %v1837
        %3056 = vmatpush1.bf16.msra.mxu0 %v1836
        %3057 = vmatprep.subr.bf16.mxu0 %v1841
        %3058 = vmatpush1.bf16.msra.mxu0 %v1840
        %3059 = vmatprep.subr.bf16.mxu0 %v1845
        %3060 = vmatpush1.bf16.msra.mxu0 %v1844
        %3061 = vmatprep.subr.bf16.mxu0 %v1849
        %3062 = vmatpush1.bf16.msra.mxu0 %v1848
        %3063 = vmatprep.subr.bf16.mxu0 %v1853
        %3064 = vmatpush1.bf16.msra.mxu0 %v1852
        %3065 = vmatprep.subr.bf16.mxu0 %v1857
        %3066 = vmatpush1.bf16.msra.mxu0 %v1856
        %3067 = vmatprep.subr.bf16.mxu0 %v1861
        %3068 = vmatpush1.bf16.msra.mxu0 %v1860
        %3069 = vmatprep.subr.bf16.mxu0 %v1865
        %3070 = vmatpush1.bf16.msra.mxu0 %v1864
        %3071 = vmatprep.subr.bf16.mxu0 %v1869
        %3072 = vmatpush1.bf16.msra.mxu0 %v1868
        %3073 = vmatprep.subr.bf16.mxu0 %v1873
        %3074 = vmatpush1.bf16.msra.mxu0 %v1872
        %3075 = vmatprep.subr.bf16.mxu0 %v1877
        %3076 = vmatpush1.bf16.msra.mxu0 %v1876
        %3077 = vmatprep.subr.bf16.mxu0 %v1881
        %3078 = vmatpush1.bf16.msra.mxu0 %v1880
        %3079 = vmatprep.subr.bf16.mxu0 %v1885
        %3080 = vmatpush1.bf16.msra.mxu0 %v1884
        %3081 = vmatprep.subr.bf16.mxu0 %v1889
        %3082 = vmatpush1.bf16.msra.mxu0 %v1888
        %3083 = vmatprep.subr.bf16.mxu0 %v1893
        %3084 = vmatpush1.bf16.msra.mxu0 %v1892
        %3085 = vmatprep.subr.bf16.mxu0 %v1897
        %3086 = vmatpush1.bf16.msra.mxu0 %v1896
        %3087 = vmatprep.mubr.bf16.mxu0 %v943
        %3088 = vmatmul.mubr.bf16.gmra.mrb[0].mxu0 %v942
        %v3089 = vpop.f32.mrb[0].mxu0
        %v3090 = vadd.f32 %v2897, %v3089
        %v3091 = vpop.f32.mrb[0].mxu0
        %v3092 = vadd.f32 %v2899, %v3091
        %v3093 = vpop.f32.mrb[0].mxu0
        %v3094 = vadd.f32 %v2901, %v3093
        %v3095 = vpop.f32.mrb[0].mxu0
        %v3096 = vadd.f32 %v2903, %v3095
        %3097 = vmatprep.mubr.bf16.mxu0 %v949
        %3098 = vmatmul.mubr.bf16.gmra.mrb[0].mxu0 %v948
        %v3099 = vpop.f32.mrb[0].mxu0
        %v3100 = vadd.f32 %v2907, %v3099
        %v3101 = vpop.f32.mrb[0].mxu0
        %v3102 = vadd.f32 %v2909, %v3101
        %v3103 = vpop.f32.mrb[0].mxu0
        %v3104 = vadd.f32 %v2911, %v3103
        %v3105 = vpop.f32.mrb[0].mxu0
        %v3106 = vadd.f32 %v2913, %v3105
        %3107 = vmatprep.mubr.bf16.mxu0 %v955
        %3108 = vmatmul.mubr.bf16.gmra.mrb[0].mxu0 %v954
        %v3109 = vpop.f32.mrb[0].mxu0
        %v3110 = vadd.f32 %v2917, %v3109
        %v3111 = vpop.f32.mrb[0].mxu0
        %v3112 = vadd.f32 %v2919, %v3111
        %v3113 = vpop.f32.mrb[0].mxu0
        %v3114 = vadd.f32 %v2921, %v3113
        %v3115 = vpop.f32.mrb[0].mxu0
        %v3116 = vadd.f32 %v2923, %v3115
        %3117 = vmatprep.mubr.bf16.mxu0 %v961
        %3118 = vmatmul.mubr.bf16.gmra.mrb[0].mxu0 %v960
        %v3119 = vpop.f32.mrb[0].mxu0
        %v3120 = vadd.f32 %v2927, %v3119
        %v3121 = vpop.f32.mrb[0].mxu0
        %v3122 = vadd.f32 %v2929, %v3121
        %v3123 = vpop.f32.mrb[0].mxu0
        %v3124 = vadd.f32 %v2931, %v3123
        %v3125 = vpop.f32.mrb[0].mxu0
        %v3126 = vadd.f32 %v2933, %v3125
        %3127 = vmatprep.mubr.bf16.mxu0 %v967
        %3128 = vmatmul.mubr.bf16.gmra.mrb[0].mxu0 %v966
        %v3129 = vpop.f32.mrb[0].mxu0
        %v3130 = vadd.f32 %v2937, %v3129
        %v3131 = vpop.f32.mrb[0].mxu0
        %v3132 = vadd.f32 %v2939, %v3131
        %v3133 = vpop.f32.mrb[0].mxu0
        %v3134 = vadd.f32 %v2941, %v3133
        %v3135 = vpop.f32.mrb[0].mxu0
        %v3136 = vadd.f32 %v2943, %v3135
        %3137 = vmatprep.mubr.bf16.mxu0 %v973
        %3138 = vmatmul.mubr.bf16.gmra.mrb[0].mxu0 %v972
        %v3139 = vpop.f32.mrb[0].mxu0
        %v3140 = vadd.f32 %v2947, %v3139
        %v3141 = vpop.f32.mrb[0].mxu0
        %v3142 = vadd.f32 %v2949, %v3141
        %v3143 = vpop.f32.mrb[0].mxu0
        %v3144 = vadd.f32 %v2951, %v3143
        %v3145 = vpop.f32.mrb[0].mxu0
        %v3146 = vadd.f32 %v2953, %v3145
        %3147 = vmatprep.mubr.bf16.mxu0 %v979
        %3148 = vmatmul.mubr.bf16.gmra.mrb[0].mxu0 %v978
        %v3149 = vpop.f32.mrb[0].mxu0
        %v3150 = vadd.f32 %v2957, %v3149
        %v3151 = vpop.f32.mrb[0].mxu0
        %v3152 = vadd.f32 %v2959, %v3151
        %v3153 = vpop.f32.mrb[0].mxu0
        %v3154 = vadd.f32 %v2961, %v3153
        %v3155 = vpop.f32.mrb[0].mxu0
        %v3156 = vadd.f32 %v2963, %v3155
        %3157 = vmatprep.mubr.bf16.mxu0 %v985
        %3158 = vmatmul.mubr.bf16.gmra.mrb[0].mxu0 %v984
        %v3159 = vpop.f32.mrb[0].mxu0
        %v3160 = vadd.f32 %v2967, %v3159
        %v3161 = vpop.f32.mrb[0].mxu0
        %v3162 = vadd.f32 %v2969, %v3161
        %v3163 = vpop.f32.mrb[0].mxu0
        %v3164 = vadd.f32 %v2971, %v3163
        %v3165 = vpop.f32.mrb[0].mxu0
        %v3166 = vadd.f32 %v2973, %v3165
        %3167 = vmatprep.mubr.bf16.mxu0 %v991
        %3168 = vmatmul.mubr.bf16.gmra.mrb[0].mxu0 %v990
        %v3169 = vpop.f32.mrb[0].mxu0
        %v3170 = vadd.f32 %v2977, %v3169
        %v3171 = vpop.f32.mrb[0].mxu0
        %v3172 = vadd.f32 %v2979, %v3171
        %v3173 = vpop.f32.mrb[0].mxu0
        %v3174 = vadd.f32 %v2981, %v3173
        %v3175 = vpop.f32.mrb[0].mxu0
        %v3176 = vadd.f32 %v2983, %v3175
        %3177 = vmatprep.mubr.bf16.mxu0 %v997
        %3178 = vmatmul.mubr.bf16.gmra.mrb[0].mxu0 %v996
        %v3179 = vpop.f32.mrb[0].mxu0
        %v3180 = vadd.f32 %v2987, %v3179
        %v3181 = vpop.f32.mrb[0].mxu0
        %v3182 = vadd.f32 %v2989, %v3181
        %v3183 = vpop.f32.mrb[0].mxu0
        %v3184 = vadd.f32 %v2991, %v3183
        %v3185 = vpop.f32.mrb[0].mxu0
        %v3186 = vadd.f32 %v2993, %v3185
        %3187 = vmatprep.mubr.bf16.mxu0 %v1003
        %3188 = vmatmul.mubr.bf16.gmra.mrb[0].mxu0 %v1002
        %v3189 = vpop.f32.mrb[0].mxu0
        %v3190 = vadd.f32 %v2997, %v3189
        %v3191 = vpop.f32.mrb[0].mxu0
        %v3192 = vadd.f32 %v2999, %v3191
        %v3193 = vpop.f32.mrb[0].mxu0
        %v3194 = vadd.f32 %v3001, %v3193
        %v3195 = vpop.f32.mrb[0].mxu0
        %v3196 = vadd.f32 %v3003, %v3195
        %3197 = vmatprep.mubr.bf16.mxu0 %v1009
        %3198 = vmatmul.mubr.bf16.gmra.mrb[0].mxu0 %v1008
        %v3199 = vpop.f32.mrb[0].mxu0
        %v3200 = vadd.f32 %v3007, %v3199
        %v3201 = vpop.f32.mrb[0].mxu0
        %v3202 = vadd.f32 %v3009, %v3201
        %v3203 = vpop.f32.mrb[0].mxu0
        %v3204 = vadd.f32 %v3011, %v3203
        %v3205 = vpop.f32.mrb[0].mxu0
        %v3206 = vadd.f32 %v3013, %v3205
        %3207 = vmatprep.mubr.bf16.mxu0 %v1015
        %3208 = vmatmul.mubr.bf16.gmra.mrb[0].mxu0 %v1014
        %v3209 = vpop.f32.mrb[0].mxu0
        %v3210 = vadd.f32 %v3017, %v3209
        %v3211 = vpop.f32.mrb[0].mxu0
        %v3212 = vadd.f32 %v3019, %v3211
        %v3213 = vpop.f32.mrb[0].mxu0
        %v3214 = vadd.f32 %v3021, %v3213
        %v3215 = vpop.f32.mrb[0].mxu0
        %v3216 = vadd.f32 %v3023, %v3215
        %3217 = vmatprep.mubr.bf16.mxu0 %v1021
        %3218 = vmatmul.mubr.bf16.gmra.mrb[0].mxu0 %v1020
        %v3219 = vpop.f32.mrb[0].mxu0
        %v3220 = vadd.f32 %v3027, %v3219
        %v3221 = vpop.f32.mrb[0].mxu0
        %v3222 = vadd.f32 %v3029, %v3221
        %v3223 = vpop.f32.mrb[0].mxu0
        %v3224 = vadd.f32 %v3031, %v3223
        %v3225 = vpop.f32.mrb[0].mxu0
        %v3226 = vadd.f32 %v3033, %v3225
        %3227 = vmatprep.mubr.bf16.mxu0 %v1027
        %3228 = vmatmul.mubr.bf16.gmra.mrb[0].mxu0 %v1026
        %v3229 = vpop.f32.mrb[0].mxu0
        %v3230 = vadd.f32 %v3037, %v3229
        %v3231 = vpop.f32.mrb[0].mxu0
        %v3232 = vadd.f32 %v3039, %v3231
        %v3233 = vpop.f32.mrb[0].mxu0
        %v3234 = vadd.f32 %v3041, %v3233
        %v3235 = vpop.f32.mrb[0].mxu0
        %v3236 = vadd.f32 %v3043, %v3235
        %3237 = vmatprep.mubr.bf16.mxu0 %v1033
        %3238 = vmatmul.mubr.bf16.gmra.mrb[0].mxu0 %v1032
        %v3239 = vpop.f32.mrb[0].mxu0
        %v3240 = vadd.f32 %v3047, %v3239
        %v3241 = vpop.f32.mrb[0].mxu0
        %v3242 = vadd.f32 %v3049, %v3241
        %v3243 = vpop.f32.mrb[0].mxu0
        %v3244 = vadd.f32 %v3051, %v3243
        %v3245 = vpop.f32.mrb[0].mxu0
        %v3246 = vadd.f32 %v3053, %v3245
        %3247 = vdwg.mxu0
        %v3248 = vtanh.pop %v2511
        %v3249 = vtanh.pop %v2513
        %v3250 = vtanh.pop %v3090
        %v3251 = vtanh.pop %v3092
        %v3252 = vtanh.pop %v2515
        %v3253 = vtanh.pop %v2517
        %v3254 = vtanh.pop %v3094
        %v3255 = vtanh.pop %v3096
        %v3256 = vtanh.pop %v2521
        %v3257 = vtanh.pop %v2523
        %v3258 = vtanh.pop %v3100
        %v3259 = vtanh.pop %v3102
        %v3260 = vtanh.pop %v2525
        %v3261 = vtanh.pop %v2527
        %v3262 = vtanh.pop %v3104
        %v3263 = vtanh.pop %v3106
        %v3264 = vtanh.pop %v2531
        %v3265 = vtanh.pop %v2533
        %v3266 = vtanh.pop %v3110
        %v3267 = vtanh.pop %v3112
        %v3268 = vtanh.pop %v2535
        %v3269 = vtanh.pop %v2537
        %v3270 = vtanh.pop %v3114
        %v3271 = vtanh.pop %v3116
        %v3272 = vtanh.pop %v2541
        %v3273 = vtanh.pop %v2543
        %v3274 = vtanh.pop %v3120
        %v3275 = vtanh.pop %v3122
        %v3276 = vtanh.pop %v2545
        %v3277 = vtanh.pop %v2547
        %v3278 = vtanh.pop %v3124
        %v3279 = vtanh.pop %v3126
        %v3280 = vtanh.pop %v2551
        %v3281 = vtanh.pop %v2553
        %v3282 = vtanh.pop %v3130
        %v3283 = vtanh.pop %v3132
        %v3284 = vtanh.pop %v2555
        %v3285 = vtanh.pop %v2557
        %v3286 = vtanh.pop %v3134
        %v3287 = vtanh.pop %v3136
        %v3288 = vtanh.pop %v2561
        %v3289 = vtanh.pop %v2563
        %v3290 = vtanh.pop %v3140
        %v3291 = vtanh.pop %v3142
        %v3292 = vtanh.pop %v2565
        %v3293 = vtanh.pop %v2567
        %v3294 = vtanh.pop %v3144
        %v3295 = vtanh.pop %v3146
        %v3296 = vtanh.pop %v2571
        %v3297 = vtanh.pop %v2573
        %v3298 = vtanh.pop %v3150
        %v3299 = vtanh.pop %v3152
        %v3300 = vtanh.pop %v2575
        %v3301 = vtanh.pop %v2577
        %v3302 = vtanh.pop %v3154
        %v3303 = vtanh.pop %v3156
        %v3304 = vtanh.pop %v2581
        %v3305 = vtanh.pop %v2583
        %v3306 = vtanh.pop %v3160
        %v3307 = vtanh.pop %v3162
        %v3308 = vtanh.pop %v2585
        %v3309 = vtanh.pop %v2587
        %v3310 = vtanh.pop %v3164
        %v3311 = vtanh.pop %v3166
        %v3312 = vtanh.pop %v2591
        %v3313 = vtanh.pop %v2593
        %v3314 = vtanh.pop %v3170
        %v3315 = vtanh.pop %v3172
        %v3316 = vtanh.pop %v2595
        %v3317 = vtanh.pop %v2597
        %v3318 = vtanh.pop %v3174
        %v3319 = vtanh.pop %v3176
        %v3320 = vtanh.pop %v2601
        %v3321 = vtanh.pop %v2603
        %v3322 = vtanh.pop %v3180
        %v3323 = vtanh.pop %v3182
        %v3324 = vtanh.pop %v2605
        %v3325 = vtanh.pop %v2607
        %v3326 = vtanh.pop %v3184
        %v3327 = vtanh.pop %v3186
        %v3328 = vtanh.pop %v2611
        %v3329 = vtanh.pop %v2613
        %v3330 = vtanh.pop %v3190
        %v3331 = vtanh.pop %v3192
        %v3332 = vtanh.pop %v2615
        %v3333 = vtanh.pop %v2617
        %v3334 = vtanh.pop %v3194
        %v3335 = vtanh.pop %v3196
        %v3336 = vtanh.pop %v2621
        %v3337 = vtanh.pop %v2623
        %v3338 = vtanh.pop %v3200
        %v3339 = vtanh.pop %v3202
        %v3340 = vtanh.pop %v2625
        %v3341 = vtanh.pop %v2627
        %v3342 = vtanh.pop %v3204
        %v3343 = vtanh.pop %v3206
        %v3344 = vtanh.pop %v2631
        %v3345 = vtanh.pop %v2633
        %v3346 = vtanh.pop %v3210
        %v3347 = vtanh.pop %v3212
        %v3348 = vtanh.pop %v2635
        %v3349 = vtanh.pop %v2637
        %v3350 = vtanh.pop %v3214
        %v3351 = vtanh.pop %v3216
        %v3352 = vtanh.pop %v2641
        %v3353 = vtanh.pop %v2643
        %v3354 = vtanh.pop %v3220
        %v3355 = vtanh.pop %v3222
        %v3356 = vtanh.pop %v2645
        %v3357 = vtanh.pop %v2647
        %v3358 = vtanh.pop %v3224
        %v3359 = vtanh.pop %v3226
        %v3360 = vtanh.pop %v2651
        %v3361 = vtanh.pop %v2653
        %v3362 = vtanh.pop %v3230
        %v3363 = vtanh.pop %v3232
        %v3364 = vtanh.pop %v2655
        %v3365 = vtanh.pop %v2657
        %v3366 = vtanh.pop %v3234
        %v3367 = vtanh.pop %v3236
        %v3368 = vtanh.pop %v2661
        %v3369 = vtanh.pop %v2663
        %v3370 = vtanh.pop %v3240
        %v3371 = vtanh.pop %v3242
        %v3372 = vtanh.pop %v2665
        %v3373 = vtanh.pop %v2667
        %v3374 = vtanh.pop %v3244
        %v3375 = vtanh.pop %v3246
        %v3376 = vld [vmem:[#allocation8] sm:$0xf]
        %v3378 = vlaneseq
        %v3379 = vshrl.u32 %v3378, 7
        %v3380 = vsub.s32 0, %v3379
        %v3381 = vrot.slane %v3376, %v3380
        %v3382 = vlaneseq
        %v3383 = vshrl.u32 %v3382, 7
        %v3384 = vsub.s32 1, %v3383
        %v3385 = vrot.slane %v3376, %v3384
        %v3386 = vlaneseq
        %v3387 = vshrl.u32 %v3386, 7
        %v3388 = vsub.s32 2, %v3387
        %v3389 = vrot.slane %v3376, %v3388
        %v3390 = vlaneseq
        %v3391 = vshrl.u32 %v3390, 7
        %v3392 = vsub.s32 3, %v3391
        %v3393 = vrot.slane %v3376, %v3392
        %v3398 = vmul.f32 %v3248, %v3381
        %v3399 = vmul.f32 %v3249, %v3385
        %v3400 = vmul.f32 %v3250, %v3389
        %v3401 = vmul.f32 %v3251, %v3393
        %v3402 = vmul.f32 %v3252, %v3381
        %v3403 = vmul.f32 %v3253, %v3385
        %v3404 = vmul.f32 %v3254, %v3389
        %v3405 = vmul.f32 %v3255, %v3393
        %v3406 = vmul.f32 %v3256, %v3381
        %v3407 = vmul.f32 %v3257, %v3385
        %v3408 = vmul.f32 %v3258, %v3389
        %v3409 = vmul.f32 %v3259, %v3393
        %v3410 = vmul.f32 %v3260, %v3381
        %v3411 = vmul.f32 %v3261, %v3385
        %v3412 = vmul.f32 %v3262, %v3389
        %v3413 = vmul.f32 %v3263, %v3393
        %v3414 = vmul.f32 %v3264, %v3381
        %v3415 = vmul.f32 %v3265, %v3385
        %v3416 = vmul.f32 %v3266, %v3389
        %v3417 = vmul.f32 %v3267, %v3393
        %v3418 = vmul.f32 %v3268, %v3381
        %v3419 = vmul.f32 %v3269, %v3385
        %v3420 = vmul.f32 %v3270, %v3389
        %v3421 = vmul.f32 %v3271, %v3393
        %v3422 = vmul.f32 %v3272, %v3381
        %v3423 = vmul.f32 %v3273, %v3385
        %v3424 = vmul.f32 %v3274, %v3389
        %v3425 = vmul.f32 %v3275, %v3393
        %v3426 = vmul.f32 %v3276, %v3381
        %v3427 = vmul.f32 %v3277, %v3385
        %v3428 = vmul.f32 %v3278, %v3389
        %v3429 = vmul.f32 %v3279, %v3393
        %v3430 = vmul.f32 %v3280, %v3381
        %v3431 = vmul.f32 %v3281, %v3385
        %v3432 = vmul.f32 %v3282, %v3389
        %v3433 = vmul.f32 %v3283, %v3393
        %v3434 = vmul.f32 %v3284, %v3381
        %v3435 = vmul.f32 %v3285, %v3385
        %v3436 = vmul.f32 %v3286, %v3389
        %v3437 = vmul.f32 %v3287, %v3393
        %v3438 = vmul.f32 %v3288, %v3381
        %v3439 = vmul.f32 %v3289, %v3385
        %v3440 = vmul.f32 %v3290, %v3389
        %v3441 = vmul.f32 %v3291, %v3393
        %v3442 = vmul.f32 %v3292, %v3381
        %v3443 = vmul.f32 %v3293, %v3385
        %v3444 = vmul.f32 %v3294, %v3389
        %v3445 = vmul.f32 %v3295, %v3393
        %v3446 = vmul.f32 %v3296, %v3381
        %v3447 = vmul.f32 %v3297, %v3385
        %v3448 = vmul.f32 %v3298, %v3389
        %v3449 = vmul.f32 %v3299, %v3393
        %v3450 = vmul.f32 %v3300, %v3381
        %v3451 = vmul.f32 %v3301, %v3385
        %v3452 = vmul.f32 %v3302, %v3389
        %v3453 = vmul.f32 %v3303, %v3393
        %v3454 = vmul.f32 %v3304, %v3381
        %v3455 = vmul.f32 %v3305, %v3385
        %v3456 = vmul.f32 %v3306, %v3389
        %v3457 = vmul.f32 %v3307, %v3393
        %v3458 = vmul.f32 %v3308, %v3381
        %v3459 = vmul.f32 %v3309, %v3385
        %v3460 = vmul.f32 %v3310, %v3389
        %v3461 = vmul.f32 %v3311, %v3393
        %v3462 = vmul.f32 %v3312, %v3381
        %v3463 = vmul.f32 %v3313, %v3385
        %v3464 = vmul.f32 %v3314, %v3389
        %v3465 = vmul.f32 %v3315, %v3393
        %v3466 = vmul.f32 %v3316, %v3381
        %v3467 = vmul.f32 %v3317, %v3385
        %v3468 = vmul.f32 %v3318, %v3389
        %v3469 = vmul.f32 %v3319, %v3393
        %v3470 = vmul.f32 %v3320, %v3381
        %v3471 = vmul.f32 %v3321, %v3385
        %v3472 = vmul.f32 %v3322, %v3389
        %v3473 = vmul.f32 %v3323, %v3393
        %v3474 = vmul.f32 %v3324, %v3381
        %v3475 = vmul.f32 %v3325, %v3385
        %v3476 = vmul.f32 %v3326, %v3389
        %v3477 = vmul.f32 %v3327, %v3393
        %v3478 = vmul.f32 %v3328, %v3381
        %v3479 = vmul.f32 %v3329, %v3385
        %v3480 = vmul.f32 %v3330, %v3389
        %v3481 = vmul.f32 %v3331, %v3393
        %v3482 = vmul.f32 %v3332, %v3381
        %v3483 = vmul.f32 %v3333, %v3385
        %v3484 = vmul.f32 %v3334, %v3389
        %v3485 = vmul.f32 %v3335, %v3393
        %v3486 = vmul.f32 %v3336, %v3381
        %v3487 = vmul.f32 %v3337, %v3385
        %v3488 = vmul.f32 %v3338, %v3389
        %v3489 = vmul.f32 %v3339, %v3393
        %v3490 = vmul.f32 %v3340, %v3381
        %v3491 = vmul.f32 %v3341, %v3385
        %v3492 = vmul.f32 %v3342, %v3389
        %v3493 = vmul.f32 %v3343, %v3393
        %v3494 = vmul.f32 %v3344, %v3381
        %v3495 = vmul.f32 %v3345, %v3385
        %v3496 = vmul.f32 %v3346, %v3389
        %v3497 = vmul.f32 %v3347, %v3393
        %v3498 = vmul.f32 %v3348, %v3381
        %v3499 = vmul.f32 %v3349, %v3385
        %v3500 = vmul.f32 %v3350, %v3389
        %v3501 = vmul.f32 %v3351, %v3393
        %v3502 = vmul.f32 %v3352, %v3381
        %v3503 = vmul.f32 %v3353, %v3385
        %v3504 = vmul.f32 %v3354, %v3389
        %v3505 = vmul.f32 %v3355, %v3393
        %v3506 = vmul.f32 %v3356, %v3381
        %v3507 = vmul.f32 %v3357, %v3385
        %v3508 = vmul.f32 %v3358, %v3389
        %v3509 = vmul.f32 %v3359, %v3393
        %v3510 = vmul.f32 %v3360, %v3381
        %v3511 = vmul.f32 %v3361, %v3385
        %v3512 = vmul.f32 %v3362, %v3389
        %v3513 = vmul.f32 %v3363, %v3393
        %v3514 = vmul.f32 %v3364, %v3381
        %v3515 = vmul.f32 %v3365, %v3385
        %v3516 = vmul.f32 %v3366, %v3389
        %v3517 = vmul.f32 %v3367, %v3393
        %v3518 = vmul.f32 %v3368, %v3381
        %v3519 = vmul.f32 %v3369, %v3385
        %v3520 = vmul.f32 %v3370, %v3389
        %v3521 = vmul.f32 %v3371, %v3393
        %v3522 = vmul.f32 %v3372, %v3381
        %v3523 = vmul.f32 %v3373, %v3385
        %v3524 = vmul.f32 %v3374, %v3389
        %v3525 = vmul.f32 %v3375, %v3393
        %v3526 = vadd.f32 %v3398, %v3399
        %v3527 = vadd.f32 %v3526, %v3400
        %v3528 = vadd.f32 %v3527, %v3401
        %3529 = vadd.xlane.f32.xlu0 %v3528
        %v3530 = vpop.xlane.xlu0 %3529
        %v3531 = vadd.f32 %v3402, %v3403
        %v3532 = vadd.f32 %v3531, %v3404
        %v3533 = vadd.f32 %v3532, %v3405
        %3534 = vadd.xlane.f32.xlu0 %v3533
        %v3535 = vpop.xlane.xlu0 %3534
        %v3536 = vadd.f32 %v3406, %v3407
        %v3537 = vadd.f32 %v3536, %v3408
        %v3538 = vadd.f32 %v3537, %v3409
        %3539 = vadd.xlane.f32.xlu0 %v3538
        %v3540 = vpop.xlane.xlu0 %3539
        %v3541 = vadd.f32 %v3410, %v3411
        %v3542 = vadd.f32 %v3541, %v3412
        %v3543 = vadd.f32 %v3542, %v3413
        %3544 = vadd.xlane.f32.xlu0 %v3543
        %v3545 = vpop.xlane.xlu0 %3544
        %v3546 = vadd.f32 %v3414, %v3415
        %v3547 = vadd.f32 %v3546, %v3416
        %v3548 = vadd.f32 %v3547, %v3417
        %3549 = vadd.xlane.f32.xlu0 %v3548
        %v3550 = vpop.xlane.xlu0 %3549
        %v3551 = vadd.f32 %v3418, %v3419
        %v3552 = vadd.f32 %v3551, %v3420
        %v3553 = vadd.f32 %v3552, %v3421
        %3554 = vadd.xlane.f32.xlu0 %v3553
        %v3555 = vpop.xlane.xlu0 %3554
        %v3556 = vadd.f32 %v3422, %v3423
        %v3557 = vadd.f32 %v3556, %v3424
        %v3558 = vadd.f32 %v3557, %v3425
        %3559 = vadd.xlane.f32.xlu0 %v3558
        %v3560 = vpop.xlane.xlu0 %3559
        %v3561 = vadd.f32 %v3426, %v3427
        %v3562 = vadd.f32 %v3561, %v3428
        %v3563 = vadd.f32 %v3562, %v3429
        %3564 = vadd.xlane.f32.xlu0 %v3563
        %v3565 = vpop.xlane.xlu0 %3564
        %v3566 = vadd.f32 %v3430, %v3431
        %v3567 = vadd.f32 %v3566, %v3432
        %v3568 = vadd.f32 %v3567, %v3433
        %3569 = vadd.xlane.f32.xlu0 %v3568
        %v3570 = vpop.xlane.xlu0 %3569
        %v3571 = vadd.f32 %v3434, %v3435
        %v3572 = vadd.f32 %v3571, %v3436
        %v3573 = vadd.f32 %v3572, %v3437
        %3574 = vadd.xlane.f32.xlu0 %v3573
        %v3575 = vpop.xlane.xlu0 %3574
        %v3576 = vadd.f32 %v3438, %v3439
        %v3577 = vadd.f32 %v3576, %v3440
        %v3578 = vadd.f32 %v3577, %v3441
        %3579 = vadd.xlane.f32.xlu0 %v3578
        %v3580 = vpop.xlane.xlu0 %3579
        %v3581 = vadd.f32 %v3442, %v3443
        %v3582 = vadd.f32 %v3581, %v3444
        %v3583 = vadd.f32 %v3582, %v3445
        %3584 = vadd.xlane.f32.xlu0 %v3583
        %v3585 = vpop.xlane.xlu0 %3584
        %v3586 = vadd.f32 %v3446, %v3447
        %v3587 = vadd.f32 %v3586, %v3448
        %v3588 = vadd.f32 %v3587, %v3449
        %3589 = vadd.xlane.f32.xlu0 %v3588
        %v3590 = vpop.xlane.xlu0 %3589
        %v3591 = vadd.f32 %v3450, %v3451
        %v3592 = vadd.f32 %v3591, %v3452
        %v3593 = vadd.f32 %v3592, %v3453
        %3594 = vadd.xlane.f32.xlu0 %v3593
        %v3595 = vpop.xlane.xlu0 %3594
        %v3596 = vadd.f32 %v3454, %v3455
        %v3597 = vadd.f32 %v3596, %v3456
        %v3598 = vadd.f32 %v3597, %v3457
        %3599 = vadd.xlane.f32.xlu0 %v3598
        %v3600 = vpop.xlane.xlu0 %3599
        %v3601 = vadd.f32 %v3458, %v3459
        %v3602 = vadd.f32 %v3601, %v3460
        %v3603 = vadd.f32 %v3602, %v3461
        %3604 = vadd.xlane.f32.xlu0 %v3603
        %v3605 = vpop.xlane.xlu0 %3604
        %v3606 = vadd.f32 %v3462, %v3463
        %v3607 = vadd.f32 %v3606, %v3464
        %v3608 = vadd.f32 %v3607, %v3465
        %3609 = vadd.xlane.f32.xlu0 %v3608
        %v3610 = vpop.xlane.xlu0 %3609
        %v3611 = vadd.f32 %v3466, %v3467
        %v3612 = vadd.f32 %v3611, %v3468
        %v3613 = vadd.f32 %v3612, %v3469
        %3614 = vadd.xlane.f32.xlu0 %v3613
        %v3615 = vpop.xlane.xlu0 %3614
        %v3616 = vadd.f32 %v3470, %v3471
        %v3617 = vadd.f32 %v3616, %v3472
        %v3618 = vadd.f32 %v3617, %v3473
        %3619 = vadd.xlane.f32.xlu0 %v3618
        %v3620 = vpop.xlane.xlu0 %3619
        %v3621 = vadd.f32 %v3474, %v3475
        %v3622 = vadd.f32 %v3621, %v3476
        %v3623 = vadd.f32 %v3622, %v3477
        %3624 = vadd.xlane.f32.xlu0 %v3623
        %v3625 = vpop.xlane.xlu0 %3624
        %v3626 = vadd.f32 %v3478, %v3479
        %v3627 = vadd.f32 %v3626, %v3480
        %v3628 = vadd.f32 %v3627, %v3481
        %3629 = vadd.xlane.f32.xlu0 %v3628
        %v3630 = vpop.xlane.xlu0 %3629
        %v3631 = vadd.f32 %v3482, %v3483
        %v3632 = vadd.f32 %v3631, %v3484
        %v3633 = vadd.f32 %v3632, %v3485
        %3634 = vadd.xlane.f32.xlu0 %v3633
        %v3635 = vpop.xlane.xlu0 %3634
        %v3636 = vadd.f32 %v3486, %v3487
        %v3637 = vadd.f32 %v3636, %v3488
        %v3638 = vadd.f32 %v3637, %v3489
        %3639 = vadd.xlane.f32.xlu0 %v3638
        %v3640 = vpop.xlane.xlu0 %3639
        %v3641 = vadd.f32 %v3490, %v3491
        %v3642 = vadd.f32 %v3641, %v3492
        %v3643 = vadd.f32 %v3642, %v3493
        %3644 = vadd.xlane.f32.xlu0 %v3643
        %v3645 = vpop.xlane.xlu0 %3644
        %v3646 = vadd.f32 %v3494, %v3495
        %v3647 = vadd.f32 %v3646, %v3496
        %v3648 = vadd.f32 %v3647, %v3497
        %3649 = vadd.xlane.f32.xlu0 %v3648
        %v3650 = vpop.xlane.xlu0 %3649
        %v3651 = vadd.f32 %v3498, %v3499
        %v3652 = vadd.f32 %v3651, %v3500
        %v3653 = vadd.f32 %v3652, %v3501
        %3654 = vadd.xlane.f32.xlu0 %v3653
        %v3655 = vpop.xlane.xlu0 %3654
        %v3656 = vadd.f32 %v3502, %v3503
        %v3657 = vadd.f32 %v3656, %v3504
        %v3658 = vadd.f32 %v3657, %v3505
        %3659 = vadd.xlane.f32.xlu0 %v3658
        %v3660 = vpop.xlane.xlu0 %3659
        %v3661 = vadd.f32 %v3506, %v3507
        %v3662 = vadd.f32 %v3661, %v3508
        %v3663 = vadd.f32 %v3662, %v3509
        %3664 = vadd.xlane.f32.xlu0 %v3663
        %v3665 = vpop.xlane.xlu0 %3664
        %v3666 = vadd.f32 %v3510, %v3511
        %v3667 = vadd.f32 %v3666, %v3512
        %v3668 = vadd.f32 %v3667, %v3513
        %3669 = vadd.xlane.f32.xlu0 %v3668
        %v3670 = vpop.xlane.xlu0 %3669
        %v3671 = vadd.f32 %v3514, %v3515
        %v3672 = vadd.f32 %v3671, %v3516
        %v3673 = vadd.f32 %v3672, %v3517
        %3674 = vadd.xlane.f32.xlu0 %v3673
        %v3675 = vpop.xlane.xlu0 %3674
        %v3676 = vadd.f32 %v3518, %v3519
        %v3677 = vadd.f32 %v3676, %v3520
        %v3678 = vadd.f32 %v3677, %v3521
        %3679 = vadd.xlane.f32.xlu0 %v3678
        %v3680 = vpop.xlane.xlu0 %3679
        %v3681 = vadd.f32 %v3522, %v3523
        %v3682 = vadd.f32 %v3681, %v3524
        %v3683 = vadd.f32 %v3682, %v3525
        %3684 = vadd.xlane.f32.xlu0 %v3683
        %v3685 = vpop.xlane.xlu0 %3684
        %v3718 = vlaneseq
        %v3719 = vand.u32 %v3718, 127
        %v3720 = vlaneseq
        %v3721 = vshrl.u32 %v3720, 7
        %v3722 = vsub.s32 %v3719, %v3721
        %v3723 = vrot.slane %v3530, %v3722
        %v3724 = vadd.s32 %v3719, 4294967288
        %v3725 = vlaneseq
        %v3726 = vshrl.u32 %v3725, 7
        %v3727 = vsub.s32 %v3724, %v3726
        %v3728 = vrot.slane %v3535, %v3727
        %vm3729 = vcmask 130112
        %v3730 = vsel %vm3729, %v3728, %v3723
        %v3731 = vadd.s32 %v3719, 4294967280
        %v3732 = vlaneseq
        %v3733 = vshrl.u32 %v3732, 7
        %v3734 = vsub.s32 %v3731, %v3733
        %v3735 = vrot.slane %v3540, %v3734
        %vm3736 = vcmask 195712
        %v3737 = vsel %vm3736, %v3735, %v3730
        %v3738 = vadd.s32 %v3719, 4294967272
        %v3739 = vlaneseq
        %v3740 = vshrl.u32 %v3739, 7
        %v3741 = vsub.s32 %v3738, %v3740
        %v3742 = vrot.slane %v3545, %v3741
        %vm3743 = vcmask 261312
        %v3744 = vsel %vm3743, %v3742, %v3737
        %v3745 = vadd.s32 %v3719, 4294967264
        %v3746 = vlaneseq
        %v3747 = vshrl.u32 %v3746, 7
        %v3748 = vsub.s32 %v3745, %v3747
        %v3749 = vrot.slane %v3550, %v3748
        %vm3750 = vcmask 326912
        %v3751 = vsel %vm3750, %v3749, %v3744
        %v3752 = vadd.s32 %v3719, 4294967256
        %v3753 = vlaneseq
        %v3754 = vshrl.u32 %v3753, 7
        %v3755 = vsub.s32 %v3752, %v3754
        %v3756 = vrot.slane %v3555, %v3755
        %vm3757 = vcmask 392512
        %v3758 = vsel %vm3757, %v3756, %v3751
        %v3759 = vadd.s32 %v3719, 4294967248
        %v3760 = vlaneseq
        %v3761 = vshrl.u32 %v3760, 7
        %v3762 = vsub.s32 %v3759, %v3761
        %v3763 = vrot.slane %v3560, %v3762
        %vm3764 = vcmask 458112
        %v3765 = vsel %vm3764, %v3763, %v3758
        %v3766 = vadd.s32 %v3719, 4294967240
        %v3767 = vlaneseq
        %v3768 = vshrl.u32 %v3767, 7
        %v3769 = vsub.s32 %v3766, %v3768
        %v3770 = vrot.slane %v3565, %v3769
        %vm3771 = vcmask 523712
        %v3772 = vsel %vm3771, %v3770, %v3765
        %v3773 = vadd.s32 %v3719, 4294967232
        %v3774 = vlaneseq
        %v3775 = vshrl.u32 %v3774, 7
        %v3776 = vsub.s32 %v3773, %v3775
        %v3777 = vrot.slane %v3570, %v3776
        %vm3778 = vcmask 589312
        %v3779 = vsel %vm3778, %v3777, %v3772
        %v3780 = vadd.s32 %v3719, 4294967224
        %v3781 = vlaneseq
        %v3782 = vshrl.u32 %v3781, 7
        %v3783 = vsub.s32 %v3780, %v3782
        %v3784 = vrot.slane %v3575, %v3783
        %vm3785 = vcmask 654912
        %v3786 = vsel %vm3785, %v3784, %v3779
        %v3787 = vadd.s32 %v3719, 4294967216
        %v3788 = vlaneseq
        %v3789 = vshrl.u32 %v3788, 7
        %v3790 = vsub.s32 %v3787, %v3789
        %v3791 = vrot.slane %v3580, %v3790
        %vm3792 = vcmask 720512
        %v3793 = vsel %vm3792, %v3791, %v3786
        %v3794 = vadd.s32 %v3719, 4294967208
        %v3795 = vlaneseq
        %v3796 = vshrl.u32 %v3795, 7
        %v3797 = vsub.s32 %v3794, %v3796
        %v3798 = vrot.slane %v3585, %v3797
        %vm3799 = vcmask 786112
        %v3800 = vsel %vm3799, %v3798, %v3793
        %v3801 = vadd.s32 %v3719, 4294967200
        %v3802 = vlaneseq
        %v3803 = vshrl.u32 %v3802, 7
        %v3804 = vsub.s32 %v3801, %v3803
        %v3805 = vrot.slane %v3590, %v3804
        %vm3806 = vcmask 851712
        %v3807 = vsel %vm3806, %v3805, %v3800
        %v3808 = vadd.s32 %v3719, 4294967192
        %v3809 = vlaneseq
        %v3810 = vshrl.u32 %v3809, 7
        %v3811 = vsub.s32 %v3808, %v3810
        %v3812 = vrot.slane %v3595, %v3811
        %vm3813 = vcmask 917312
        %v3814 = vsel %vm3813, %v3812, %v3807
        %v3815 = vadd.s32 %v3719, 4294967184
        %v3816 = vlaneseq
        %v3817 = vshrl.u32 %v3816, 7
        %v3818 = vsub.s32 %v3815, %v3817
        %v3819 = vrot.slane %v3600, %v3818
        %vm3820 = vcmask 982912
        %v3821 = vsel %vm3820, %v3819, %v3814
        %v3822 = vadd.s32 %v3719, 4294967176
        %v3823 = vlaneseq
        %v3824 = vshrl.u32 %v3823, 7
        %v3825 = vsub.s32 %v3822, %v3824
        %v3826 = vrot.slane %v3605, %v3825
        %vm3827 = vcmask 1048512
        %v3828 = vsel %vm3827, %v3826, %v3821
        %v3829 = vlaneseq
        %v3830 = vshrl.u32 %v3829, 7
        %v3831 = vsub.s32 %v3719, %v3830
        %v3832 = vrot.slane %v3610, %v3831
        %v3833 = vlaneseq
        %v3834 = vshrl.u32 %v3833, 7
        %v3835 = vsub.s32 %v3724, %v3834
        %v3836 = vrot.slane %v3615, %v3835
        %v3837 = vsel %vm3729, %v3836, %v3832
        %v3838 = vlaneseq
        %v3839 = vshrl.u32 %v3838, 7
        %v3840 = vsub.s32 %v3731, %v3839
        %v3841 = vrot.slane %v3620, %v3840
        %v3842 = vsel %vm3736, %v3841, %v3837
        %v3843 = vlaneseq
        %v3844 = vshrl.u32 %v3843, 7
        %v3845 = vsub.s32 %v3738, %v3844
        %v3846 = vrot.slane %v3625, %v3845
        %v3847 = vsel %vm3743, %v3846, %v3842
        %v3848 = vlaneseq
        %v3849 = vshrl.u32 %v3848, 7
        %v3850 = vsub.s32 %v3745, %v3849
        %v3851 = vrot.slane %v3630, %v3850
        %v3852 = vsel %vm3750, %v3851, %v3847
        %v3853 = vlaneseq
        %v3854 = vshrl.u32 %v3853, 7
        %v3855 = vsub.s32 %v3752, %v3854
        %v3856 = vrot.slane %v3635, %v3855
        %v3857 = vsel %vm3757, %v3856, %v3852
        %v3858 = vlaneseq
        %v3859 = vshrl.u32 %v3858, 7
        %v3860 = vsub.s32 %v3759, %v3859
        %v3861 = vrot.slane %v3640, %v3860
        %v3862 = vsel %vm3764, %v3861, %v3857
        %v3863 = vlaneseq
        %v3864 = vshrl.u32 %v3863, 7
        %v3865 = vsub.s32 %v3766, %v3864
        %v3866 = vrot.slane %v3645, %v3865
        %v3867 = vsel %vm3771, %v3866, %v3862
        %v3868 = vlaneseq
        %v3869 = vshrl.u32 %v3868, 7
        %v3870 = vsub.s32 %v3773, %v3869
        %v3871 = vrot.slane %v3650, %v3870
        %v3872 = vsel %vm3778, %v3871, %v3867
        %v3873 = vlaneseq
        %v3874 = vshrl.u32 %v3873, 7
        %v3875 = vsub.s32 %v3780, %v3874
        %v3876 = vrot.slane %v3655, %v3875
        %v3877 = vsel %vm3785, %v3876, %v3872
        %v3878 = vlaneseq
        %v3879 = vshrl.u32 %v3878, 7
        %v3880 = vsub.s32 %v3787, %v3879
        %v3881 = vrot.slane %v3660, %v3880
        %v3882 = vsel %vm3792, %v3881, %v3877
        %v3883 = vlaneseq
        %v3884 = vshrl.u32 %v3883, 7
        %v3885 = vsub.s32 %v3794, %v3884
        %v3886 = vrot.slane %v3665, %v3885
        %v3887 = vsel %vm3799, %v3886, %v3882
        %v3888 = vlaneseq
        %v3889 = vshrl.u32 %v3888, 7
        %v3890 = vsub.s32 %v3801, %v3889
        %v3891 = vrot.slane %v3670, %v3890
        %v3892 = vsel %vm3806, %v3891, %v3887
        %v3893 = vlaneseq
        %v3894 = vshrl.u32 %v3893, 7
        %v3895 = vsub.s32 %v3808, %v3894
        %v3896 = vrot.slane %v3675, %v3895
        %v3897 = vsel %vm3813, %v3896, %v3892
        %v3898 = vlaneseq
        %v3899 = vshrl.u32 %v3898, 7
        %v3900 = vsub.s32 %v3815, %v3899
        %v3901 = vrot.slane %v3680, %v3900
        %v3902 = vsel %vm3820, %v3901, %v3897
        %v3903 = vlaneseq
        %v3904 = vshrl.u32 %v3903, 7
        %v3905 = vsub.s32 %v3822, %v3904
        %v3906 = vrot.slane %v3685, %v3905
        %v3907 = vsel %vm3827, %v3906, %v3902
        %vm3908 = vcmask 1041409
        %v3909 = vsel %vm3908, %v3907, %v3828
        %vm3911 = vcmask 1041408
        %v3912 = vsel %vm3911, %v3909, -inf
        %3913 = vmax.xlane.f32.xlu0 %v3912
        %v3914 = vpop.xlane.xlu0 %3913
        %v3916 = vlaneseq
        %v3917 = vshrl.u32 %v3916, 7
        %v3918 = vsub.s32 0, %v3917
        %v3919 = vrot.slane %v3914, %v3918
        %v3920 = vlaneseq
        %v3921 = vshrl.u32 %v3920, 7
        %v3922 = vsub.s32 1, %v3921
        %v3923 = vrot.slane %v3914, %v3922
        %v3926 = vsub.f32 %v3530, %v3919
        %v3927 = vsub.f32 %v3535, %v3919
        %v3928 = vsub.f32 %v3540, %v3919
        %v3929 = vsub.f32 %v3545, %v3919
        %v3930 = vsub.f32 %v3550, %v3919
        %v3931 = vsub.f32 %v3555, %v3919
        %v3932 = vsub.f32 %v3560, %v3919
        %v3933 = vsub.f32 %v3565, %v3919
        %v3934 = vsub.f32 %v3570, %v3919
        %v3935 = vsub.f32 %v3575, %v3919
        %v3936 = vsub.f32 %v3580, %v3919
        %v3937 = vsub.f32 %v3585, %v3919
        %v3938 = vsub.f32 %v3590, %v3919
        %v3939 = vsub.f32 %v3595, %v3919
        %v3940 = vsub.f32 %v3600, %v3919
        %v3941 = vsub.f32 %v3605, %v3919
        %v3942 = vsub.f32 %v3610, %v3923
        %v3943 = vsub.f32 %v3615, %v3923
        %v3944 = vsub.f32 %v3620, %v3923
        %v3945 = vsub.f32 %v3625, %v3923
        %v3946 = vsub.f32 %v3630, %v3923
        %v3947 = vsub.f32 %v3635, %v3923
        %v3948 = vsub.f32 %v3640, %v3923
        %v3949 = vsub.f32 %v3645, %v3923
        %v3950 = vsub.f32 %v3650, %v3923
        %v3951 = vsub.f32 %v3655, %v3923
        %v3952 = vsub.f32 %v3660, %v3923
        %v3953 = vsub.f32 %v3665, %v3923
        %v3954 = vsub.f32 %v3670, %v3923
        %v3955 = vsub.f32 %v3675, %v3923
        %v3956 = vsub.f32 %v3680, %v3923
        %v3957 = vsub.f32 %v3685, %v3923
        %v3958 = vmul.f32 %v3926, 1.442695
        %v3959 = vpow.pop %v3958
        %v3960 = vmul.f32 %v3927, 1.442695
        %v3961 = vpow.pop %v3960
        %v3962 = vmul.f32 %v3928, 1.442695
        %v3963 = vpow.pop %v3962
        %v3964 = vmul.f32 %v3929, 1.442695
        %v3965 = vpow.pop %v3964
        %v3966 = vmul.f32 %v3930, 1.442695
        %v3967 = vpow.pop %v3966
        %v3968 = vmul.f32 %v3931, 1.442695
        %v3969 = vpow.pop %v3968
        %v3970 = vmul.f32 %v3932, 1.442695
        %v3971 = vpow.pop %v3970
        %v3972 = vmul.f32 %v3933, 1.442695
        %v3973 = vpow.pop %v3972
        %v3974 = vmul.f32 %v3934, 1.442695
        %v3975 = vpow.pop %v3974
        %v3976 = vmul.f32 %v3935, 1.442695
        %v3977 = vpow.pop %v3976
        %v3978 = vmul.f32 %v3936, 1.442695
        %v3979 = vpow.pop %v3978
        %v3980 = vmul.f32 %v3937, 1.442695
        %v3981 = vpow.pop %v3980
        %v3982 = vmul.f32 %v3938, 1.442695
        %v3983 = vpow.pop %v3982
        %v3984 = vmul.f32 %v3939, 1.442695
        %v3985 = vpow.pop %v3984
        %v3986 = vmul.f32 %v3940, 1.442695
        %v3987 = vpow.pop %v3986
        %v3988 = vmul.f32 %v3941, 1.442695
        %v3989 = vpow.pop %v3988
        %v3990 = vmul.f32 %v3942, 1.442695
        %v3991 = vpow.pop %v3990
        %v3992 = vmul.f32 %v3943, 1.442695
        %v3993 = vpow.pop %v3992
        %v3994 = vmul.f32 %v3944, 1.442695
        %v3995 = vpow.pop %v3994
        %v3996 = vmul.f32 %v3945, 1.442695
        %v3997 = vpow.pop %v3996
        %v3998 = vmul.f32 %v3946, 1.442695
        %v3999 = vpow.pop %v3998
        %v4000 = vmul.f32 %v3947, 1.442695
        %v4001 = vpow.pop %v4000
        %v4002 = vmul.f32 %v3948, 1.442695
        %v4003 = vpow.pop %v4002
        %v4004 = vmul.f32 %v3949, 1.442695
        %v4005 = vpow.pop %v4004
        %v4006 = vmul.f32 %v3950, 1.442695
        %v4007 = vpow.pop %v4006
        %v4008 = vmul.f32 %v3951, 1.442695
        %v4009 = vpow.pop %v4008
        %v4010 = vmul.f32 %v3952, 1.442695
        %v4011 = vpow.pop %v4010
        %v4012 = vmul.f32 %v3953, 1.442695
        %v4013 = vpow.pop %v4012
        %v4014 = vmul.f32 %v3954, 1.442695
        %v4015 = vpow.pop %v4014
        %v4016 = vmul.f32 %v3955, 1.442695
        %v4017 = vpow.pop %v4016
        %v4018 = vmul.f32 %v3956, 1.442695
        %v4019 = vpow.pop %v4018
        %v4020 = vmul.f32 %v3957, 1.442695
        %v4021 = vpow.pop %v4020
        %4054 = vset.pattern.permute.xlu0 0
        %4055 = vperm.xlu0 %4054, %v3959
        %v4056 = vpop.permute.xlu0 %4055
        %4057 = vset.pattern.permute.xlu0 0
        %4058 = vperm.xlu0 %4057, %v3961
        %v4059 = vpop.permute.xlu0 %4058
        %4060 = vset.pattern.permute.xlu0 0
        %4061 = vperm.xlu0 %4060, %v3963
        %v4062 = vpop.permute.xlu0 %4061
        %4063 = vset.pattern.permute.xlu0 0
        %4064 = vperm.xlu0 %4063, %v3965
        %v4065 = vpop.permute.xlu0 %4064
        %4066 = vset.pattern.permute.xlu0 0
        %4067 = vperm.xlu0 %4066, %v3967
        %v4068 = vpop.permute.xlu0 %4067
        %4069 = vset.pattern.permute.xlu0 0
        %4070 = vperm.xlu0 %4069, %v3969
        %v4071 = vpop.permute.xlu0 %4070
        %4072 = vset.pattern.permute.xlu0 0
        %4073 = vperm.xlu0 %4072, %v3971
        %v4074 = vpop.permute.xlu0 %4073
        %4075 = vset.pattern.permute.xlu0 0
        %4076 = vperm.xlu0 %4075, %v3973
        %v4077 = vpop.permute.xlu0 %4076
        %4078 = vset.pattern.permute.xlu0 0
        %4079 = vperm.xlu0 %4078, %v3975
        %v4080 = vpop.permute.xlu0 %4079
        %4081 = vset.pattern.permute.xlu0 0
        %4082 = vperm.xlu0 %4081, %v3977
        %v4083 = vpop.permute.xlu0 %4082
        %4084 = vset.pattern.permute.xlu0 0
        %4085 = vperm.xlu0 %4084, %v3979
        %v4086 = vpop.permute.xlu0 %4085
        %4087 = vset.pattern.permute.xlu0 0
        %4088 = vperm.xlu0 %4087, %v3981
        %v4089 = vpop.permute.xlu0 %4088
        %4090 = vset.pattern.permute.xlu0 0
        %4091 = vperm.xlu0 %4090, %v3983
        %v4092 = vpop.permute.xlu0 %4091
        %4093 = vset.pattern.permute.xlu0 0
        %4094 = vperm.xlu0 %4093, %v3985
        %v4095 = vpop.permute.xlu0 %4094
        %4096 = vset.pattern.permute.xlu0 0
        %4097 = vperm.xlu0 %4096, %v3987
        %v4098 = vpop.permute.xlu0 %4097
        %4099 = vset.pattern.permute.xlu0 0
        %4100 = vperm.xlu0 %4099, %v3989
        %v4101 = vpop.permute.xlu0 %4100
        %4102 = vset.pattern.permute.xlu0 0
        %4103 = vperm.xlu0 %4102, %v3991
        %v4104 = vpop.permute.xlu0 %4103
        %4105 = vset.pattern.permute.xlu0 0
        %4106 = vperm.xlu0 %4105, %v3993
        %v4107 = vpop.permute.xlu0 %4106
        %4108 = vset.pattern.permute.xlu0 0
        %4109 = vperm.xlu0 %4108, %v3995
        %v4110 = vpop.permute.xlu0 %4109
        %4111 = vset.pattern.permute.xlu0 0
        %4112 = vperm.xlu0 %4111, %v3997
        %v4113 = vpop.permute.xlu0 %4112
        %4114 = vset.pattern.permute.xlu0 0
        %4115 = vperm.xlu0 %4114, %v3999
        %v4116 = vpop.permute.xlu0 %4115
        %4117 = vset.pattern.permute.xlu0 0
        %4118 = vperm.xlu0 %4117, %v4001
        %v4119 = vpop.permute.xlu0 %4118
        %4120 = vset.pattern.permute.xlu0 0
        %4121 = vperm.xlu0 %4120, %v4003
        %v4122 = vpop.permute.xlu0 %4121
        %4123 = vset.pattern.permute.xlu0 0
        %4124 = vperm.xlu0 %4123, %v4005
        %v4125 = vpop.permute.xlu0 %4124
        %4126 = vset.pattern.permute.xlu0 0
        %4127 = vperm.xlu0 %4126, %v4007
        %v4128 = vpop.permute.xlu0 %4127
        %4129 = vset.pattern.permute.xlu0 0
        %4130 = vperm.xlu0 %4129, %v4009
        %v4131 = vpop.permute.xlu0 %4130
        %4132 = vset.pattern.permute.xlu0 0
        %4133 = vperm.xlu0 %4132, %v4011
        %v4134 = vpop.permute.xlu0 %4133
        %4135 = vset.pattern.permute.xlu0 0
        %4136 = vperm.xlu0 %4135, %v4013
        %v4137 = vpop.permute.xlu0 %4136
        %4138 = vset.pattern.permute.xlu0 0
        %4139 = vperm.xlu0 %4138, %v4015
        %v4140 = vpop.permute.xlu0 %4139
        %4141 = vset.pattern.permute.xlu0 0
        %4142 = vperm.xlu0 %4141, %v4017
        %v4143 = vpop.permute.xlu0 %4142
        %4144 = vset.pattern.permute.xlu0 0
        %4145 = vperm.xlu0 %4144, %v4019
        %v4146 = vpop.permute.xlu0 %4145
        %4147 = vset.pattern.permute.xlu0 0
        %4148 = vperm.xlu0 %4147, %v4021
        %v4149 = vpop.permute.xlu0 %4148
        %v4150 = vlaneseq
        %v4151 = vshrl.u32 %v4150, 7
        %v4152 = vsub.s32 %v3719, %v4151
        %v4153 = vrot.slane %v4056, %v4152
        %v4154 = vlaneseq
        %v4155 = vshrl.u32 %v4154, 7
        %v4156 = vsub.s32 %v3724, %v4155
        %v4157 = vrot.slane %v4059, %v4156
        %v4158 = vsel %vm3729, %v4157, %v4153
        %v4159 = vlaneseq
        %v4160 = vshrl.u32 %v4159, 7
        %v4161 = vsub.s32 %v3731, %v4160
        %v4162 = vrot.slane %v4062, %v4161
        %v4163 = vsel %vm3736, %v4162, %v4158
        %v4164 = vlaneseq
        %v4165 = vshrl.u32 %v4164, 7
        %v4166 = vsub.s32 %v3738, %v4165
        %v4167 = vrot.slane %v4065, %v4166
        %v4168 = vsel %vm3743, %v4167, %v4163
        %v4169 = vlaneseq
        %v4170 = vshrl.u32 %v4169, 7
        %v4171 = vsub.s32 %v3745, %v4170
        %v4172 = vrot.slane %v4068, %v4171
        %v4173 = vsel %vm3750, %v4172, %v4168
        %v4174 = vlaneseq
        %v4175 = vshrl.u32 %v4174, 7
        %v4176 = vsub.s32 %v3752, %v4175
        %v4177 = vrot.slane %v4071, %v4176
        %v4178 = vsel %vm3757, %v4177, %v4173
        %v4179 = vlaneseq
        %v4180 = vshrl.u32 %v4179, 7
        %v4181 = vsub.s32 %v3759, %v4180
        %v4182 = vrot.slane %v4074, %v4181
        %v4183 = vsel %vm3764, %v4182, %v4178
        %v4184 = vlaneseq
        %v4185 = vshrl.u32 %v4184, 7
        %v4186 = vsub.s32 %v3766, %v4185
        %v4187 = vrot.slane %v4077, %v4186
        %v4188 = vsel %vm3771, %v4187, %v4183
        %v4189 = vlaneseq
        %v4190 = vshrl.u32 %v4189, 7
        %v4191 = vsub.s32 %v3773, %v4190
        %v4192 = vrot.slane %v4080, %v4191
        %v4193 = vsel %vm3778, %v4192, %v4188
        %v4194 = vlaneseq
        %v4195 = vshrl.u32 %v4194, 7
        %v4196 = vsub.s32 %v3780, %v4195
        %v4197 = vrot.slane %v4083, %v4196
        %v4198 = vsel %vm3785, %v4197, %v4193
        %v4199 = vlaneseq
        %v4200 = vshrl.u32 %v4199, 7
        %v4201 = vsub.s32 %v3787, %v4200
        %v4202 = vrot.slane %v4086, %v4201
        %v4203 = vsel %vm3792, %v4202, %v4198
        %v4204 = vlaneseq
        %v4205 = vshrl.u32 %v4204, 7
        %v4206 = vsub.s32 %v3794, %v4205
        %v4207 = vrot.slane %v4089, %v4206
        %v4208 = vsel %vm3799, %v4207, %v4203
        %v4209 = vlaneseq
        %v4210 = vshrl.u32 %v4209, 7
        %v4211 = vsub.s32 %v3801, %v4210
        %v4212 = vrot.slane %v4092, %v4211
        %v4213 = vsel %vm3806, %v4212, %v4208
        %v4214 = vlaneseq
        %v4215 = vshrl.u32 %v4214, 7
        %v4216 = vsub.s32 %v3808, %v4215
        %v4217 = vrot.slane %v4095, %v4216
        %v4218 = vsel %vm3813, %v4217, %v4213
        %v4219 = vlaneseq
        %v4220 = vshrl.u32 %v4219, 7
        %v4221 = vsub.s32 %v3815, %v4220
        %v4222 = vrot.slane %v4098, %v4221
        %v4223 = vsel %vm3820, %v4222, %v4218
        %v4224 = vlaneseq
        %v4225 = vshrl.u32 %v4224, 7
        %v4226 = vsub.s32 %v3822, %v4225
        %v4227 = vrot.slane %v4101, %v4226
        %v4228 = vsel %vm3827, %v4227, %v4223
        %v4229 = vlaneseq
        %v4230 = vshrl.u32 %v4229, 7
        %v4231 = vsub.s32 %v3719, %v4230
        %v4232 = vrot.slane %v4104, %v4231
        %v4233 = vlaneseq
        %v4234 = vshrl.u32 %v4233, 7
        %v4235 = vsub.s32 %v3724, %v4234
        %v4236 = vrot.slane %v4107, %v4235
        %v4237 = vsel %vm3729, %v4236, %v4232
        %v4238 = vlaneseq
        %v4239 = vshrl.u32 %v4238, 7
        %v4240 = vsub.s32 %v3731, %v4239
        %v4241 = vrot.slane %v4110, %v4240
        %v4242 = vsel %vm3736, %v4241, %v4237
        %v4243 = vlaneseq
        %v4244 = vshrl.u32 %v4243, 7
        %v4245 = vsub.s32 %v3738, %v4244
        %v4246 = vrot.slane %v4113, %v4245
        %v4247 = vsel %vm3743, %v4246, %v4242
        %v4248 = vlaneseq
        %v4249 = vshrl.u32 %v4248, 7
        %v4250 = vsub.s32 %v3745, %v4249
        %v4251 = vrot.slane %v4116, %v4250
        %v4252 = vsel %vm3750, %v4251, %v4247
        %v4253 = vlaneseq
        %v4254 = vshrl.u32 %v4253, 7
        %v4255 = vsub.s32 %v3752, %v4254
        %v4256 = vrot.slane %v4119, %v4255
        %v4257 = vsel %vm3757, %v4256, %v4252
        %v4258 = vlaneseq
        %v4259 = vshrl.u32 %v4258, 7
        %v4260 = vsub.s32 %v3759, %v4259
        %v4261 = vrot.slane %v4122, %v4260
        %v4262 = vsel %vm3764, %v4261, %v4257
        %v4263 = vlaneseq
        %v4264 = vshrl.u32 %v4263, 7
        %v4265 = vsub.s32 %v3766, %v4264
        %v4266 = vrot.slane %v4125, %v4265
        %v4267 = vsel %vm3771, %v4266, %v4262
        %v4268 = vlaneseq
        %v4269 = vshrl.u32 %v4268, 7
        %v4270 = vsub.s32 %v3773, %v4269
        %v4271 = vrot.slane %v4128, %v4270
        %v4272 = vsel %vm3778, %v4271, %v4267
        %v4273 = vlaneseq
        %v4274 = vshrl.u32 %v4273, 7
        %v4275 = vsub.s32 %v3780, %v4274
        %v4276 = vrot.slane %v4131, %v4275
        %v4277 = vsel %vm3785, %v4276, %v4272
        %v4278 = vlaneseq
        %v4279 = vshrl.u32 %v4278, 7
        %v4280 = vsub.s32 %v3787, %v4279
        %v4281 = vrot.slane %v4134, %v4280
        %v4282 = vsel %vm3792, %v4281, %v4277
        %v4283 = vlaneseq
        %v4284 = vshrl.u32 %v4283, 7
        %v4285 = vsub.s32 %v3794, %v4284
        %v4286 = vrot.slane %v4137, %v4285
        %v4287 = vsel %vm3799, %v4286, %v4282
        %v4288 = vlaneseq
        %v4289 = vshrl.u32 %v4288, 7
        %v4290 = vsub.s32 %v3801, %v4289
        %v4291 = vrot.slane %v4140, %v4290
        %v4292 = vsel %vm3806, %v4291, %v4287
        %v4293 = vlaneseq
        %v4294 = vshrl.u32 %v4293, 7
        %v4295 = vsub.s32 %v3808, %v4294
        %v4296 = vrot.slane %v4143, %v4295
        %v4297 = vsel %vm3813, %v4296, %v4292
        %v4298 = vlaneseq
        %v4299 = vshrl.u32 %v4298, 7
        %v4300 = vsub.s32 %v3815, %v4299
        %v4301 = vrot.slane %v4146, %v4300
        %v4302 = vsel %vm3820, %v4301, %v4297
        %v4303 = vlaneseq
        %v4304 = vshrl.u32 %v4303, 7
        %v4305 = vsub.s32 %v3822, %v4304
        %v4306 = vrot.slane %v4149, %v4305
        %v4307 = vsel %vm3827, %v4306, %v4302
        %v4308 = vsel %vm3908, %v4307, %v4228
        %v4310 = vsel %vm3911, %v4308, 0.0
        %4311 = vadd.xlane.f32.xlu0 %v4310
        %v4312 = vpop.xlane.xlu0 %4311
        %v4313 = vrcp.pop %v4312
        %v4315 = vlaneseq
        %v4316 = vshrl.u32 %v4315, 7
        %v4317 = vsub.s32 0, %v4316
        %v4318 = vrot.slane %v4313, %v4317
        %v4319 = vlaneseq
        %v4320 = vshrl.u32 %v4319, 7
        %v4321 = vsub.s32 1, %v4320
        %v4322 = vrot.slane %v4313, %v4321
        %v4325 = vmul.f32 %v3959, %v4318
        %v4326 = vmul.f32 %v3961, %v4318
        %v4327 = vmul.f32 %v3963, %v4318
        %v4328 = vmul.f32 %v3965, %v4318
        %v4329 = vmul.f32 %v3967, %v4318
        %v4330 = vmul.f32 %v3969, %v4318
        %v4331 = vmul.f32 %v3971, %v4318
        %v4332 = vmul.f32 %v3973, %v4318
        %v4333 = vmul.f32 %v3975, %v4318
        %v4334 = vmul.f32 %v3977, %v4318
        %v4335 = vmul.f32 %v3979, %v4318
        %v4336 = vmul.f32 %v3981, %v4318
        %v4337 = vmul.f32 %v3983, %v4318
        %v4338 = vmul.f32 %v3985, %v4318
        %v4339 = vmul.f32 %v3987, %v4318
        %v4340 = vmul.f32 %v3989, %v4318
        %v4341 = vmul.f32 %v3991, %v4322
        %v4342 = vmul.f32 %v3993, %v4322
        %v4343 = vmul.f32 %v3995, %v4322
        %v4344 = vmul.f32 %v3997, %v4322
        %v4345 = vmul.f32 %v3999, %v4322
        %v4346 = vmul.f32 %v4001, %v4322
        %v4347 = vmul.f32 %v4003, %v4322
        %v4348 = vmul.f32 %v4005, %v4322
        %v4349 = vmul.f32 %v4007, %v4322
        %v4350 = vmul.f32 %v4009, %v4322
        %v4351 = vmul.f32 %v4011, %v4322
        %v4352 = vmul.f32 %v4013, %v4322
        %v4353 = vmul.f32 %v4015, %v4322
        %v4354 = vmul.f32 %v4017, %v4322
        %v4355 = vmul.f32 %v4019, %v4322
        %v4356 = vmul.f32 %v4021, %v4322
        %v4357 = vpack.c.bf16 %v4326, %v4325
        %v4358 = vpack.c.bf16 %v4328, %v4327
        %v4359 = vpack.c.bf16 %v4330, %v4329
        %v4360 = vpack.c.bf16 %v4332, %v4331
        %v4361 = vpack.c.bf16 %v4334, %v4333
        %v4362 = vpack.c.bf16 %v4336, %v4335
        %v4363 = vpack.c.bf16 %v4338, %v4337
        %v4364 = vpack.c.bf16 %v4340, %v4339
        %v4365 = vpack.c.bf16 %v4342, %v4341
        %v4366 = vpack.c.bf16 %v4344, %v4343
        %v4367 = vpack.c.bf16 %v4346, %v4345
        %v4368 = vpack.c.bf16 %v4348, %v4347
        %v4369 = vpack.c.bf16 %v4350, %v4349
        %v4370 = vpack.c.bf16 %v4352, %v4351
        %v4371 = vpack.c.bf16 %v4354, %v4353
        %v4372 = vpack.c.bf16 %v4356, %v4355
        %4374 = vset.pattern.permute.xlu0 0
        %4375 = vperm.xlu0 %4374, %v4357
        %v4376 = vpop.permute.xlu0 %4375
        %4378 = vset.pattern.permute.xlu0 0
        %4379 = vperm.xlu0 %4378, %v4358
        %v4380 = vpop.permute.xlu0 %4379
        %4382 = vset.pattern.permute.xlu0 0
        %4383 = vperm.xlu0 %4382, %v4359
        %v4384 = vpop.permute.xlu0 %4383
        %4386 = vset.pattern.permute.xlu0 0
        %4387 = vperm.xlu0 %4386, %v4360
        %v4388 = vpop.permute.xlu0 %4387
        %4390 = vset.pattern.permute.xlu0 0
        %4391 = vperm.xlu0 %4390, %v4361
        %v4392 = vpop.permute.xlu0 %4391
        %4394 = vset.pattern.permute.xlu0 0
        %4395 = vperm.xlu0 %4394, %v4362
        %v4396 = vpop.permute.xlu0 %4395
        %4398 = vset.pattern.permute.xlu0 0
        %4399 = vperm.xlu0 %4398, %v4363
        %v4400 = vpop.permute.xlu0 %4399
        %4402 = vset.pattern.permute.xlu0 0
        %4403 = vperm.xlu0 %4402, %v4364
        %v4404 = vpop.permute.xlu0 %4403
        %4406 = vset.pattern.permute.xlu0 0
        %4407 = vperm.xlu0 %4406, %v4365
        %v4408 = vpop.permute.xlu0 %4407
        %4410 = vset.pattern.permute.xlu0 0
        %4411 = vperm.xlu0 %4410, %v4366
        %v4412 = vpop.permute.xlu0 %4411
        %4414 = vset.pattern.permute.xlu0 0
        %4415 = vperm.xlu0 %4414, %v4367
        %v4416 = vpop.permute.xlu0 %4415
        %4418 = vset.pattern.permute.xlu0 0
        %4419 = vperm.xlu0 %4418, %v4368
        %v4420 = vpop.permute.xlu0 %4419
        %4422 = vset.pattern.permute.xlu0 0
        %4423 = vperm.xlu0 %4422, %v4369
        %v4424 = vpop.permute.xlu0 %4423
        %4426 = vset.pattern.permute.xlu0 0
        %4427 = vperm.xlu0 %4426, %v4370
        %v4428 = vpop.permute.xlu0 %4427
        %4430 = vset.pattern.permute.xlu0 0
        %4431 = vperm.xlu0 %4430, %v4371
        %v4432 = vpop.permute.xlu0 %4431
        %4434 = vset.pattern.permute.xlu0 0
        %4435 = vperm.xlu0 %4434, %v4372
        %v4436 = vpop.permute.xlu0 %4435
        %v4454 = vunpack.c.l.s4 839922192
        %v4455 = vunpack.c.0.s8 %v4454
        %v4456 = vlaneseq
        %v4457 = vshrl.u32 %v4456, 7
        %v4458 = vsub.s32 %v4455, %v4457
        %v4459 = vrot.slane %v4376, %v4458
        %v4461 = vunpack.c.l.s4 1985246804
        %v4462 = vunpack.c.0.s8 %v4461
        %v4463 = vlaneseq
        %v4464 = vshrl.u32 %v4463, 7
        %v4465 = vsub.s32 %v4462, %v4464
        %v4466 = vrot.slane %v4376, %v4465
        %v4468 = vunpack.c.l.s4 839922192
        %v4469 = vunpack.c.0.s8 %v4468
        %v4470 = vlaneseq
        %v4471 = vshrl.u32 %v4470, 7
        %v4472 = vsub.s32 %v4469, %v4471
        %v4473 = vrot.slane %v4380, %v4472
        %v4475 = vunpack.c.l.s4 1985246804
        %v4476 = vunpack.c.0.s8 %v4475
        %v4477 = vlaneseq
        %v4478 = vshrl.u32 %v4477, 7
        %v4479 = vsub.s32 %v4476, %v4478
        %v4480 = vrot.slane %v4380, %v4479
        %v4482 = vunpack.c.l.s4 839922192
        %v4483 = vunpack.c.0.s8 %v4482
        %v4484 = vlaneseq
        %v4485 = vshrl.u32 %v4484, 7
        %v4486 = vsub.s32 %v4483, %v4485
        %v4487 = vrot.slane %v4384, %v4486
        %v4489 = vunpack.c.l.s4 1985246804
        %v4490 = vunpack.c.0.s8 %v4489
        %v4491 = vlaneseq
        %v4492 = vshrl.u32 %v4491, 7
        %v4493 = vsub.s32 %v4490, %v4492
        %v4494 = vrot.slane %v4384, %v4493
        %v4496 = vunpack.c.l.s4 839922192
        %v4497 = vunpack.c.0.s8 %v4496
        %v4498 = vlaneseq
        %v4499 = vshrl.u32 %v4498, 7
        %v4500 = vsub.s32 %v4497, %v4499
        %v4501 = vrot.slane %v4388, %v4500
        %v4503 = vunpack.c.l.s4 1985246804
        %v4504 = vunpack.c.0.s8 %v4503
        %v4505 = vlaneseq
        %v4506 = vshrl.u32 %v4505, 7
        %v4507 = vsub.s32 %v4504, %v4506
        %v4508 = vrot.slane %v4388, %v4507
        %v4510 = vunpack.c.l.s4 839922192
        %v4511 = vunpack.c.0.s8 %v4510
        %v4512 = vlaneseq
        %v4513 = vshrl.u32 %v4512, 7
        %v4514 = vsub.s32 %v4511, %v4513
        %v4515 = vrot.slane %v4392, %v4514
        %v4517 = vunpack.c.l.s4 1985246804
        %v4518 = vunpack.c.0.s8 %v4517
        %v4519 = vlaneseq
        %v4520 = vshrl.u32 %v4519, 7
        %v4521 = vsub.s32 %v4518, %v4520
        %v4522 = vrot.slane %v4392, %v4521
        %v4524 = vunpack.c.l.s4 839922192
        %v4525 = vunpack.c.0.s8 %v4524
        %v4526 = vlaneseq
        %v4527 = vshrl.u32 %v4526, 7
        %v4528 = vsub.s32 %v4525, %v4527
        %v4529 = vrot.slane %v4396, %v4528
        %v4531 = vunpack.c.l.s4 1985246804
        %v4532 = vunpack.c.0.s8 %v4531
        %v4533 = vlaneseq
        %v4534 = vshrl.u32 %v4533, 7
        %v4535 = vsub.s32 %v4532, %v4534
        %v4536 = vrot.slane %v4396, %v4535
        %v4538 = vunpack.c.l.s4 839922192
        %v4539 = vunpack.c.0.s8 %v4538
        %v4540 = vlaneseq
        %v4541 = vshrl.u32 %v4540, 7
        %v4542 = vsub.s32 %v4539, %v4541
        %v4543 = vrot.slane %v4400, %v4542
        %v4545 = vunpack.c.l.s4 1985246804
        %v4546 = vunpack.c.0.s8 %v4545
        %v4547 = vlaneseq
        %v4548 = vshrl.u32 %v4547, 7
        %v4549 = vsub.s32 %v4546, %v4548
        %v4550 = vrot.slane %v4400, %v4549
        %v4552 = vunpack.c.l.s4 839922192
        %v4553 = vunpack.c.0.s8 %v4552
        %v4554 = vlaneseq
        %v4555 = vshrl.u32 %v4554, 7
        %v4556 = vsub.s32 %v4553, %v4555
        %v4557 = vrot.slane %v4404, %v4556
        %v4559 = vunpack.c.l.s4 1985246804
        %v4560 = vunpack.c.0.s8 %v4559
        %v4561 = vlaneseq
        %v4562 = vshrl.u32 %v4561, 7
        %v4563 = vsub.s32 %v4560, %v4562
        %v4564 = vrot.slane %v4404, %v4563
        %v4566 = vunpack.c.l.s4 839922192
        %v4567 = vunpack.c.0.s8 %v4566
        %v4568 = vlaneseq
        %v4569 = vshrl.u32 %v4568, 7
        %v4570 = vsub.s32 %v4567, %v4569
        %v4571 = vrot.slane %v4408, %v4570
        %v4573 = vunpack.c.l.s4 1985246804
        %v4574 = vunpack.c.0.s8 %v4573
        %v4575 = vlaneseq
        %v4576 = vshrl.u32 %v4575, 7
        %v4577 = vsub.s32 %v4574, %v4576
        %v4578 = vrot.slane %v4408, %v4577
        %v4580 = vunpack.c.l.s4 839922192
        %v4581 = vunpack.c.0.s8 %v4580
        %v4582 = vlaneseq
        %v4583 = vshrl.u32 %v4582, 7
        %v4584 = vsub.s32 %v4581, %v4583
        %v4585 = vrot.slane %v4412, %v4584
        %v4587 = vunpack.c.l.s4 1985246804
        %v4588 = vunpack.c.0.s8 %v4587
        %v4589 = vlaneseq
        %v4590 = vshrl.u32 %v4589, 7
        %v4591 = vsub.s32 %v4588, %v4590
        %v4592 = vrot.slane %v4412, %v4591
        %v4594 = vunpack.c.l.s4 839922192
        %v4595 = vunpack.c.0.s8 %v4594
        %v4596 = vlaneseq
        %v4597 = vshrl.u32 %v4596, 7
        %v4598 = vsub.s32 %v4595, %v4597
        %v4599 = vrot.slane %v4416, %v4598
        %v4601 = vunpack.c.l.s4 1985246804
        %v4602 = vunpack.c.0.s8 %v4601
        %v4603 = vlaneseq
        %v4604 = vshrl.u32 %v4603, 7
        %v4605 = vsub.s32 %v4602, %v4604
        %v4606 = vrot.slane %v4416, %v4605
        %v4608 = vunpack.c.l.s4 839922192
        %v4609 = vunpack.c.0.s8 %v4608
        %v4610 = vlaneseq
        %v4611 = vshrl.u32 %v4610, 7
        %v4612 = vsub.s32 %v4609, %v4611
        %v4613 = vrot.slane %v4420, %v4612
        %v4615 = vunpack.c.l.s4 1985246804
        %v4616 = vunpack.c.0.s8 %v4615
        %v4617 = vlaneseq
        %v4618 = vshrl.u32 %v4617, 7
        %v4619 = vsub.s32 %v4616, %v4618
        %v4620 = vrot.slane %v4420, %v4619
        %v4622 = vunpack.c.l.s4 839922192
        %v4623 = vunpack.c.0.s8 %v4622
        %v4624 = vlaneseq
        %v4625 = vshrl.u32 %v4624, 7
        %v4626 = vsub.s32 %v4623, %v4625
        %v4627 = vrot.slane %v4424, %v4626
        %v4629 = vunpack.c.l.s4 1985246804
        %v4630 = vunpack.c.0.s8 %v4629
        %v4631 = vlaneseq
        %v4632 = vshrl.u32 %v4631, 7
        %v4633 = vsub.s32 %v4630, %v4632
        %v4634 = vrot.slane %v4424, %v4633
        %v4636 = vunpack.c.l.s4 839922192
        %v4637 = vunpack.c.0.s8 %v4636
        %v4638 = vlaneseq
        %v4639 = vshrl.u32 %v4638, 7
        %v4640 = vsub.s32 %v4637, %v4639
        %v4641 = vrot.slane %v4428, %v4640
        %v4643 = vunpack.c.l.s4 1985246804
        %v4644 = vunpack.c.0.s8 %v4643
        %v4645 = vlaneseq
        %v4646 = vshrl.u32 %v4645, 7
        %v4647 = vsub.s32 %v4644, %v4646
        %v4648 = vrot.slane %v4428, %v4647
        %v4650 = vunpack.c.l.s4 839922192
        %v4651 = vunpack.c.0.s8 %v4650
        %v4652 = vlaneseq
        %v4653 = vshrl.u32 %v4652, 7
        %v4654 = vsub.s32 %v4651, %v4653
        %v4655 = vrot.slane %v4432, %v4654
        %v4657 = vunpack.c.l.s4 1985246804
        %v4658 = vunpack.c.0.s8 %v4657
        %v4659 = vlaneseq
        %v4660 = vshrl.u32 %v4659, 7
        %v4661 = vsub.s32 %v4658, %v4660
        %v4662 = vrot.slane %v4432, %v4661
        %v4664 = vunpack.c.l.s4 839922192
        %v4665 = vunpack.c.0.s8 %v4664
        %v4666 = vlaneseq
        %v4667 = vshrl.u32 %v4666, 7
        %v4668 = vsub.s32 %v4665, %v4667
        %v4669 = vrot.slane %v4436, %v4668
        %v4671 = vunpack.c.l.s4 1985246804
        %v4672 = vunpack.c.0.s8 %v4671
        %v4673 = vlaneseq
        %v4674 = vshrl.u32 %v4673, 7
        %v4675 = vsub.s32 %v4672, %v4674
        %v4676 = vrot.slane %v4436, %v4675
        %v4709 = vmul.bf16 %v340, %v4459
        %v4710 = vmul.bf16 %v341, %v4459
        %v4711 = vmul.bf16 %v342, %v4459
        %v4712 = vmul.bf16 %v343, %v4466
        %v4713 = vmul.bf16 %v344, %v4466
        %v4714 = vmul.bf16 %v345, %v4466
        %v4715 = vmul.bf16 %v346, %v4473
        %v4716 = vmul.bf16 %v347, %v4473
        %v4717 = vmul.bf16 %v348, %v4473
        %v4718 = vmul.bf16 %v349, %v4480
        %v4719 = vmul.bf16 %v350, %v4480
        %v4720 = vmul.bf16 %v351, %v4480
        %v4721 = vmul.bf16 %v352, %v4487
        %v4722 = vmul.bf16 %v353, %v4487
        %v4723 = vmul.bf16 %v354, %v4487
        %v4724 = vmul.bf16 %v355, %v4494
        %v4725 = vmul.bf16 %v356, %v4494
        %v4726 = vmul.bf16 %v357, %v4494
        %v4727 = vmul.bf16 %v358, %v4501
        %v4728 = vmul.bf16 %v359, %v4501
        %v4729 = vmul.bf16 %v360, %v4501
        %v4730 = vmul.bf16 %v361, %v4508
        %v4731 = vmul.bf16 %v362, %v4508
        %v4732 = vmul.bf16 %v363, %v4508
        %v4733 = vmul.bf16 %v364, %v4515
        %v4734 = vmul.bf16 %v365, %v4515
        %v4735 = vmul.bf16 %v366, %v4515
        %v4736 = vmul.bf16 %v367, %v4522
        %v4737 = vmul.bf16 %v368, %v4522
        %v4738 = vmul.bf16 %v369, %v4522
        %v4739 = vmul.bf16 %v370, %v4529
        %v4740 = vmul.bf16 %v371, %v4529
        %v4741 = vmul.bf16 %v372, %v4529
        %v4742 = vmul.bf16 %v373, %v4536
        %v4743 = vmul.bf16 %v374, %v4536
        %v4744 = vmul.bf16 %v375, %v4536
        %v4745 = vmul.bf16 %v376, %v4543
        %v4746 = vmul.bf16 %v377, %v4543
        %v4747 = vmul.bf16 %v378, %v4543
        %v4748 = vmul.bf16 %v379, %v4550
        %v4749 = vmul.bf16 %v380, %v4550
        %v4750 = vmul.bf16 %v381, %v4550
        %v4751 = vmul.bf16 %v382, %v4557
        %v4752 = vmul.bf16 %v383, %v4557
        %v4753 = vmul.bf16 %v384, %v4557
        %v4754 = vmul.bf16 %v385, %v4564
        %v4755 = vmul.bf16 %v386, %v4564
        %v4756 = vmul.bf16 %v387, %v4564
        %v4757 = vmul.bf16 %v388, %v4571
        %v4758 = vmul.bf16 %v389, %v4571
        %v4759 = vmul.bf16 %v390, %v4571
        %v4760 = vmul.bf16 %v391, %v4578
        %v4761 = vmul.bf16 %v392, %v4578
        %v4762 = vmul.bf16 %v393, %v4578
        %v4763 = vmul.bf16 %v394, %v4585
        %v4764 = vmul.bf16 %v395, %v4585
        %v4765 = vmul.bf16 %v396, %v4585
        %v4766 = vmul.bf16 %v397, %v4592
        %v4767 = vmul.bf16 %v398, %v4592
        %v4768 = vmul.bf16 %v399, %v4592
        %v4769 = vmul.bf16 %v400, %v4599
        %v4770 = vmul.bf16 %v401, %v4599
        %v4771 = vmul.bf16 %v402, %v4599
        %v4772 = vmul.bf16 %v403, %v4606
        %v4773 = vmul.bf16 %v404, %v4606
        %v4774 = vmul.bf16 %v405, %v4606
        %v4775 = vmul.bf16 %v406, %v4613
        %v4776 = vmul.bf16 %v407, %v4613
        %v4777 = vmul.bf16 %v408, %v4613
        %v4778 = vmul.bf16 %v409, %v4620
        %v4779 = vmul.bf16 %v410, %v4620
        %v4780 = vmul.bf16 %v411, %v4620
        %v4781 = vmul.bf16 %v412, %v4627
        %v4782 = vmul.bf16 %v413, %v4627
        %v4783 = vmul.bf16 %v414, %v4627
        %v4784 = vmul.bf16 %v415, %v4634
        %v4785 = vmul.bf16 %v416, %v4634
        %v4786 = vmul.bf16 %v417, %v4634
        %v4787 = vmul.bf16 %v418, %v4641
        %v4788 = vmul.bf16 %v419, %v4641
        %v4789 = vmul.bf16 %v420, %v4641
        %v4790 = vmul.bf16 %v421, %v4648
        %v4791 = vmul.bf16 %v422, %v4648
        %v4792 = vmul.bf16 %v423, %v4648
        %v4793 = vmul.bf16 %v424, %v4655
        %v4794 = vmul.bf16 %v425, %v4655
        %v4795 = vmul.bf16 %v426, %v4655
        %v4796 = vmul.bf16 %v427, %v4662
        %v4797 = vmul.bf16 %v428, %v4662
        %v4798 = vmul.bf16 %v429, %v4662
        %v4799 = vmul.bf16 %v430, %v4669
        %v4800 = vmul.bf16 %v431, %v4669
        %v4801 = vmul.bf16 %v432, %v4669
        %v4802 = vmul.bf16 %v433, %v4676
        %v4803 = vmul.bf16 %v434, %v4676
        %v4804 = vmul.bf16 %v435, %v4676
        %v4805 = vunpack.c.l.bf16 %v4709
        %v4806 = vunpack.c.h.bf16 %v4709
        %v4807 = vunpack.c.l.bf16 %v4710
        %v4808 = vunpack.c.h.bf16 %v4710
        %v4809 = vunpack.c.l.bf16 %v4711
        %v4810 = vunpack.c.h.bf16 %v4711
        %v4811 = vunpack.c.l.bf16 %v4712
        %v4812 = vunpack.c.h.bf16 %v4712
        %v4813 = vunpack.c.l.bf16 %v4713
        %v4814 = vunpack.c.h.bf16 %v4713
        %v4815 = vunpack.c.l.bf16 %v4714
        %v4816 = vunpack.c.h.bf16 %v4714
        %v4817 = vunpack.c.l.bf16 %v4715
        %v4818 = vunpack.c.h.bf16 %v4715
        %v4819 = vunpack.c.l.bf16 %v4716
        %v4820 = vunpack.c.h.bf16 %v4716
        %v4821 = vunpack.c.l.bf16 %v4717
        %v4822 = vunpack.c.h.bf16 %v4717
        %v4823 = vunpack.c.l.bf16 %v4718
        %v4824 = vunpack.c.h.bf16 %v4718
        %v4825 = vunpack.c.l.bf16 %v4719
        %v4826 = vunpack.c.h.bf16 %v4719
        %v4827 = vunpack.c.l.bf16 %v4720
        %v4828 = vunpack.c.h.bf16 %v4720
        %v4829 = vunpack.c.l.bf16 %v4721
        %v4830 = vunpack.c.h.bf16 %v4721
        %v4831 = vunpack.c.l.bf16 %v4722
        %v4832 = vunpack.c.h.bf16 %v4722
        %v4833 = vunpack.c.l.bf16 %v4723
        %v4834 = vunpack.c.h.bf16 %v4723
        %v4835 = vunpack.c.l.bf16 %v4724
        %v4836 = vunpack.c.h.bf16 %v4724
        %v4837 = vunpack.c.l.bf16 %v4725
        %v4838 = vunpack.c.h.bf16 %v4725
        %v4839 = vunpack.c.l.bf16 %v4726
        %v4840 = vunpack.c.h.bf16 %v4726
        %v4841 = vunpack.c.l.bf16 %v4727
        %v4842 = vunpack.c.h.bf16 %v4727
        %v4843 = vunpack.c.l.bf16 %v4728
        %v4844 = vunpack.c.h.bf16 %v4728
        %v4845 = vunpack.c.l.bf16 %v4729
        %v4846 = vunpack.c.h.bf16 %v4729
        %v4847 = vunpack.c.l.bf16 %v4730
        %v4848 = vunpack.c.h.bf16 %v4730
        %v4849 = vunpack.c.l.bf16 %v4731
        %v4850 = vunpack.c.h.bf16 %v4731
        %v4851 = vunpack.c.l.bf16 %v4732
        %v4852 = vunpack.c.h.bf16 %v4732
        %v4853 = vunpack.c.l.bf16 %v4733
        %v4854 = vunpack.c.h.bf16 %v4733
        %v4855 = vunpack.c.l.bf16 %v4734
        %v4856 = vunpack.c.h.bf16 %v4734
        %v4857 = vunpack.c.l.bf16 %v4735
        %v4858 = vunpack.c.h.bf16 %v4735
        %v4859 = vunpack.c.l.bf16 %v4736
        %v4860 = vunpack.c.h.bf16 %v4736
        %v4861 = vunpack.c.l.bf16 %v4737
        %v4862 = vunpack.c.h.bf16 %v4737
        %v4863 = vunpack.c.l.bf16 %v4738
        %v4864 = vunpack.c.h.bf16 %v4738
        %v4865 = vunpack.c.l.bf16 %v4739
        %v4866 = vunpack.c.h.bf16 %v4739
        %v4867 = vunpack.c.l.bf16 %v4740
        %v4868 = vunpack.c.h.bf16 %v4740
        %v4869 = vunpack.c.l.bf16 %v4741
        %v4870 = vunpack.c.h.bf16 %v4741
        %v4871 = vunpack.c.l.bf16 %v4742
        %v4872 = vunpack.c.h.bf16 %v4742
        %v4873 = vunpack.c.l.bf16 %v4743
        %v4874 = vunpack.c.h.bf16 %v4743
        %v4875 = vunpack.c.l.bf16 %v4744
        %v4876 = vunpack.c.h.bf16 %v4744
        %v4877 = vunpack.c.l.bf16 %v4745
        %v4878 = vunpack.c.h.bf16 %v4745
        %v4879 = vunpack.c.l.bf16 %v4746
        %v4880 = vunpack.c.h.bf16 %v4746
        %v4881 = vunpack.c.l.bf16 %v4747
        %v4882 = vunpack.c.h.bf16 %v4747
        %v4883 = vunpack.c.l.bf16 %v4748
        %v4884 = vunpack.c.h.bf16 %v4748
        %v4885 = vunpack.c.l.bf16 %v4749
        %v4886 = vunpack.c.h.bf16 %v4749
        %v4887 = vunpack.c.l.bf16 %v4750
        %v4888 = vunpack.c.h.bf16 %v4750
        %v4889 = vunpack.c.l.bf16 %v4751
        %v4890 = vunpack.c.h.bf16 %v4751
        %v4891 = vunpack.c.l.bf16 %v4752
        %v4892 = vunpack.c.h.bf16 %v4752
        %v4893 = vunpack.c.l.bf16 %v4753
        %v4894 = vunpack.c.h.bf16 %v4753
        %v4895 = vunpack.c.l.bf16 %v4754
        %v4896 = vunpack.c.h.bf16 %v4754
        %v4897 = vunpack.c.l.bf16 %v4755
        %v4898 = vunpack.c.h.bf16 %v4755
        %v4899 = vunpack.c.l.bf16 %v4756
        %v4900 = vunpack.c.h.bf16 %v4756
        %v4901 = vunpack.c.l.bf16 %v4757
        %v4902 = vunpack.c.h.bf16 %v4757
        %v4903 = vunpack.c.l.bf16 %v4758
        %v4904 = vunpack.c.h.bf16 %v4758
        %v4905 = vunpack.c.l.bf16 %v4759
        %v4906 = vunpack.c.h.bf16 %v4759
        %v4907 = vunpack.c.l.bf16 %v4760
        %v4908 = vunpack.c.h.bf16 %v4760
        %v4909 = vunpack.c.l.bf16 %v4761
        %v4910 = vunpack.c.h.bf16 %v4761
        %v4911 = vunpack.c.l.bf16 %v4762
        %v4912 = vunpack.c.h.bf16 %v4762
        %v4913 = vunpack.c.l.bf16 %v4763
        %v4914 = vunpack.c.h.bf16 %v4763
        %v4915 = vunpack.c.l.bf16 %v4764
        %v4916 = vunpack.c.h.bf16 %v4764
        %v4917 = vunpack.c.l.bf16 %v4765
        %v4918 = vunpack.c.h.bf16 %v4765
        %v4919 = vunpack.c.l.bf16 %v4766
        %v4920 = vunpack.c.h.bf16 %v4766
        %v4921 = vunpack.c.l.bf16 %v4767
        %v4922 = vunpack.c.h.bf16 %v4767
        %v4923 = vunpack.c.l.bf16 %v4768
        %v4924 = vunpack.c.h.bf16 %v4768
        %v4925 = vunpack.c.l.bf16 %v4769
        %v4926 = vunpack.c.h.bf16 %v4769
        %v4927 = vunpack.c.l.bf16 %v4770
        %v4928 = vunpack.c.h.bf16 %v4770
        %v4929 = vunpack.c.l.bf16 %v4771
        %v4930 = vunpack.c.h.bf16 %v4771
        %v4931 = vunpack.c.l.bf16 %v4772
        %v4932 = vunpack.c.h.bf16 %v4772
        %v4933 = vunpack.c.l.bf16 %v4773
        %v4934 = vunpack.c.h.bf16 %v4773
        %v4935 = vunpack.c.l.bf16 %v4774
        %v4936 = vunpack.c.h.bf16 %v4774
        %v4937 = vunpack.c.l.bf16 %v4775
        %v4938 = vunpack.c.h.bf16 %v4775
        %v4939 = vunpack.c.l.bf16 %v4776
        %v4940 = vunpack.c.h.bf16 %v4776
        %v4941 = vunpack.c.l.bf16 %v4777
        %v4942 = vunpack.c.h.bf16 %v4777
        %v4943 = vunpack.c.l.bf16 %v4778
        %v4944 = vunpack.c.h.bf16 %v4778
        %v4945 = vunpack.c.l.bf16 %v4779
        %v4946 = vunpack.c.h.bf16 %v4779
        %v4947 = vunpack.c.l.bf16 %v4780
        %v4948 = vunpack.c.h.bf16 %v4780
        %v4949 = vunpack.c.l.bf16 %v4781
        %v4950 = vunpack.c.h.bf16 %v4781
        %v4951 = vunpack.c.l.bf16 %v4782
        %v4952 = vunpack.c.h.bf16 %v4782
        %v4953 = vunpack.c.l.bf16 %v4783
        %v4954 = vunpack.c.h.bf16 %v4783
        %v4955 = vunpack.c.l.bf16 %v4784
        %v4956 = vunpack.c.h.bf16 %v4784
        %v4957 = vunpack.c.l.bf16 %v4785
        %v4958 = vunpack.c.h.bf16 %v4785
        %v4959 = vunpack.c.l.bf16 %v4786
        %v4960 = vunpack.c.h.bf16 %v4786
        %v4961 = vunpack.c.l.bf16 %v4787
        %v4962 = vunpack.c.h.bf16 %v4787
        %v4963 = vunpack.c.l.bf16 %v4788
        %v4964 = vunpack.c.h.bf16 %v4788
        %v4965 = vunpack.c.l.bf16 %v4789
        %v4966 = vunpack.c.h.bf16 %v4789
        %v4967 = vunpack.c.l.bf16 %v4790
        %v4968 = vunpack.c.h.bf16 %v4790
        %v4969 = vunpack.c.l.bf16 %v4791
        %v4970 = vunpack.c.h.bf16 %v4791
        %v4971 = vunpack.c.l.bf16 %v4792
        %v4972 = vunpack.c.h.bf16 %v4792
        %v4973 = vunpack.c.l.bf16 %v4793
        %v4974 = vunpack.c.h.bf16 %v4793
        %v4975 = vunpack.c.l.bf16 %v4794
        %v4976 = vunpack.c.h.bf16 %v4794
        %v4977 = vunpack.c.l.bf16 %v4795
        %v4978 = vunpack.c.h.bf16 %v4795
        %v4979 = vunpack.c.l.bf16 %v4796
        %v4980 = vunpack.c.h.bf16 %v4796
        %v4981 = vunpack.c.l.bf16 %v4797
        %v4982 = vunpack.c.h.bf16 %v4797
        %v4983 = vunpack.c.l.bf16 %v4798
        %v4984 = vunpack.c.h.bf16 %v4798
        %v4985 = vunpack.c.l.bf16 %v4799
        %v4986 = vunpack.c.h.bf16 %v4799
        %v4987 = vunpack.c.l.bf16 %v4800
        %v4988 = vunpack.c.h.bf16 %v4800
        %v4989 = vunpack.c.l.bf16 %v4801
        %v4990 = vunpack.c.h.bf16 %v4801
        %v4991 = vunpack.c.l.bf16 %v4802
        %v4992 = vunpack.c.h.bf16 %v4802
        %v4993 = vunpack.c.l.bf16 %v4803
        %v4994 = vunpack.c.h.bf16 %v4803
        %v4995 = vunpack.c.l.bf16 %v4804
        %v4996 = vunpack.c.h.bf16 %v4804
        %v4997 = vadd.f32 %v4805, %v4811
        %v4998 = vadd.f32 %v4997, %v4817
        %v4999 = vadd.f32 %v4998, %v4823
        %v5000 = vadd.f32 %v4999, %v4829
        %v5001 = vadd.f32 %v5000, %v4835
        %v5002 = vadd.f32 %v5001, %v4841
        %v5003 = vadd.f32 %v5002, %v4847
        %v5004 = vadd.f32 %v5003, %v4853
        %v5005 = vadd.f32 %v5004, %v4859
        %v5006 = vadd.f32 %v5005, %v4865
        %v5007 = vadd.f32 %v5006, %v4871
        %v5008 = vadd.f32 %v5007, %v4877
        %v5009 = vadd.f32 %v5008, %v4883
        %v5010 = vadd.f32 %v5009, %v4889
        %v5011 = vadd.f32 %v5010, %v4895
        %v5012 = vrot.slane %v5011, 4
        %v5013 = vadd.f32 %v5011, %v5012
        %v5014 = vrot.slane %v5013, 2
        %v5015 = vadd.f32 %v5013, %v5014
        %v5016 = vrot.slane %v5015, 1
        %v5017 = vadd.f32 %v5015, %v5016
        %v5018 = vadd.f32 %v4806, %v4812
        %v5019 = vadd.f32 %v5018, %v4818
        %v5020 = vadd.f32 %v5019, %v4824
        %v5021 = vadd.f32 %v5020, %v4830
        %v5022 = vadd.f32 %v5021, %v4836
        %v5023 = vadd.f32 %v5022, %v4842
        %v5024 = vadd.f32 %v5023, %v4848
        %v5025 = vadd.f32 %v5024, %v4854
        %v5026 = vadd.f32 %v5025, %v4860
        %v5027 = vadd.f32 %v5026, %v4866
        %v5028 = vadd.f32 %v5027, %v4872
        %v5029 = vadd.f32 %v5028, %v4878
        %v5030 = vadd.f32 %v5029, %v4884
        %v5031 = vadd.f32 %v5030, %v4890
        %v5032 = vadd.f32 %v5031, %v4896
        %v5033 = vrot.slane %v5032, 4
        %v5034 = vadd.f32 %v5032, %v5033
        %v5035 = vrot.slane %v5034, 2
        %v5036 = vadd.f32 %v5034, %v5035
        %v5037 = vrot.slane %v5036, 1
        %v5038 = vadd.f32 %v5036, %v5037
        %v5039 = vadd.f32 %v4807, %v4813
        %v5040 = vadd.f32 %v5039, %v4819
        %v5041 = vadd.f32 %v5040, %v4825
        %v5042 = vadd.f32 %v5041, %v4831
        %v5043 = vadd.f32 %v5042, %v4837
        %v5044 = vadd.f32 %v5043, %v4843
        %v5045 = vadd.f32 %v5044, %v4849
        %v5046 = vadd.f32 %v5045, %v4855
        %v5047 = vadd.f32 %v5046, %v4861
        %v5048 = vadd.f32 %v5047, %v4867
        %v5049 = vadd.f32 %v5048, %v4873
        %v5050 = vadd.f32 %v5049, %v4879
        %v5051 = vadd.f32 %v5050, %v4885
        %v5052 = vadd.f32 %v5051, %v4891
        %v5053 = vadd.f32 %v5052, %v4897
        %v5054 = vrot.slane %v5053, 4
        %v5055 = vadd.f32 %v5053, %v5054
        %v5056 = vrot.slane %v5055, 2
        %v5057 = vadd.f32 %v5055, %v5056
        %v5058 = vrot.slane %v5057, 1
        %v5059 = vadd.f32 %v5057, %v5058
        %v5060 = vadd.f32 %v4808, %v4814
        %v5061 = vadd.f32 %v5060, %v4820
        %v5062 = vadd.f32 %v5061, %v4826
        %v5063 = vadd.f32 %v5062, %v4832
        %v5064 = vadd.f32 %v5063, %v4838
        %v5065 = vadd.f32 %v5064, %v4844
        %v5066 = vadd.f32 %v5065, %v4850
        %v5067 = vadd.f32 %v5066, %v4856
        %v5068 = vadd.f32 %v5067, %v4862
        %v5069 = vadd.f32 %v5068, %v4868
        %v5070 = vadd.f32 %v5069, %v4874
        %v5071 = vadd.f32 %v5070, %v4880
        %v5072 = vadd.f32 %v5071, %v4886
        %v5073 = vadd.f32 %v5072, %v4892
        %v5074 = vadd.f32 %v5073, %v4898
        %v5075 = vrot.slane %v5074, 4
        %v5076 = vadd.f32 %v5074, %v5075
        %v5077 = vrot.slane %v5076, 2
        %v5078 = vadd.f32 %v5076, %v5077
        %v5079 = vrot.slane %v5078, 1
        %v5080 = vadd.f32 %v5078, %v5079
        %v5081 = vadd.f32 %v4809, %v4815
        %v5082 = vadd.f32 %v5081, %v4821
        %v5083 = vadd.f32 %v5082, %v4827
        %v5084 = vadd.f32 %v5083, %v4833
        %v5085 = vadd.f32 %v5084, %v4839
        %v5086 = vadd.f32 %v5085, %v4845
        %v5087 = vadd.f32 %v5086, %v4851
        %v5088 = vadd.f32 %v5087, %v4857
        %v5089 = vadd.f32 %v5088, %v4863
        %v5090 = vadd.f32 %v5089, %v4869
        %v5091 = vadd.f32 %v5090, %v4875
        %v5092 = vadd.f32 %v5091, %v4881
        %v5093 = vadd.f32 %v5092, %v4887
        %v5094 = vadd.f32 %v5093, %v4893
        %v5095 = vadd.f32 %v5094, %v4899
        %v5096 = vrot.slane %v5095, 4
        %v5097 = vadd.f32 %v5095, %v5096
        %v5098 = vrot.slane %v5097, 2
        %v5099 = vadd.f32 %v5097, %v5098
        %v5100 = vrot.slane %v5099, 1
        %v5101 = vadd.f32 %v5099, %v5100
        %v5102 = vadd.f32 %v4810, %v4816
        %v5103 = vadd.f32 %v5102, %v4822
        %v5104 = vadd.f32 %v5103, %v4828
        %v5105 = vadd.f32 %v5104, %v4834
        %v5106 = vadd.f32 %v5105, %v4840
        %v5107 = vadd.f32 %v5106, %v4846
        %v5108 = vadd.f32 %v5107, %v4852
        %v5109 = vadd.f32 %v5108, %v4858
        %v5110 = vadd.f32 %v5109, %v4864
        %v5111 = vadd.f32 %v5110, %v4870
        %v5112 = vadd.f32 %v5111, %v4876
        %v5113 = vadd.f32 %v5112, %v4882
        %v5114 = vadd.f32 %v5113, %v4888
        %v5115 = vadd.f32 %v5114, %v4894
        %v5116 = vadd.f32 %v5115, %v4900
        %v5117 = vrot.slane %v5116, 4
        %v5118 = vadd.f32 %v5116, %v5117
        %v5119 = vrot.slane %v5118, 2
        %v5120 = vadd.f32 %v5118, %v5119
        %v5121 = vrot.slane %v5120, 1
        %v5122 = vadd.f32 %v5120, %v5121
        %v5123 = vadd.f32 %v4901, %v4907
        %v5124 = vadd.f32 %v5123, %v4913
        %v5125 = vadd.f32 %v5124, %v4919
        %v5126 = vadd.f32 %v5125, %v4925
        %v5127 = vadd.f32 %v5126, %v4931
        %v5128 = vadd.f32 %v5127, %v4937
        %v5129 = vadd.f32 %v5128, %v4943
        %v5130 = vadd.f32 %v5129, %v4949
        %v5131 = vadd.f32 %v5130, %v4955
        %v5132 = vadd.f32 %v5131, %v4961
        %v5133 = vadd.f32 %v5132, %v4967
        %v5134 = vadd.f32 %v5133, %v4973
        %v5135 = vadd.f32 %v5134, %v4979
        %v5136 = vadd.f32 %v5135, %v4985
        %v5137 = vadd.f32 %v5136, %v4991
        %v5138 = vrot.slane %v5137, 4
        %v5139 = vadd.f32 %v5137, %v5138
        %v5140 = vrot.slane %v5139, 2
        %v5141 = vadd.f32 %v5139, %v5140
        %v5142 = vrot.slane %v5141, 1
        %v5143 = vadd.f32 %v5141, %v5142
        %v5144 = vadd.f32 %v4902, %v4908
        %v5145 = vadd.f32 %v5144, %v4914
        %v5146 = vadd.f32 %v5145, %v4920
        %v5147 = vadd.f32 %v5146, %v4926
        %v5148 = vadd.f32 %v5147, %v4932
        %v5149 = vadd.f32 %v5148, %v4938
        %v5150 = vadd.f32 %v5149, %v4944
        %v5151 = vadd.f32 %v5150, %v4950
        %v5152 = vadd.f32 %v5151, %v4956
        %v5153 = vadd.f32 %v5152, %v4962
        %v5154 = vadd.f32 %v5153, %v4968
        %v5155 = vadd.f32 %v5154, %v4974
        %v5156 = vadd.f32 %v5155, %v4980
        %v5157 = vadd.f32 %v5156, %v4986
        %v5158 = vadd.f32 %v5157, %v4992
        %v5159 = vrot.slane %v5158, 4
        %v5160 = vadd.f32 %v5158, %v5159
        %v5161 = vrot.slane %v5160, 2
        %v5162 = vadd.f32 %v5160, %v5161
        %v5163 = vrot.slane %v5162, 1
        %v5164 = vadd.f32 %v5162, %v5163
        %v5165 = vadd.f32 %v4903, %v4909
        %v5166 = vadd.f32 %v5165, %v4915
        %v5167 = vadd.f32 %v5166, %v4921
        %v5168 = vadd.f32 %v5167, %v4927
        %v5169 = vadd.f32 %v5168, %v4933
        %v5170 = vadd.f32 %v5169, %v4939
        %v5171 = vadd.f32 %v5170, %v4945
        %v5172 = vadd.f32 %v5171, %v4951
        %v5173 = vadd.f32 %v5172, %v4957
        %v5174 = vadd.f32 %v5173, %v4963
        %v5175 = vadd.f32 %v5174, %v4969
        %v5176 = vadd.f32 %v5175, %v4975
        %v5177 = vadd.f32 %v5176, %v4981
        %v5178 = vadd.f32 %v5177, %v4987
        %v5179 = vadd.f32 %v5178, %v4993
        %v5180 = vrot.slane %v5179, 4
        %v5181 = vadd.f32 %v5179, %v5180
        %v5182 = vrot.slane %v5181, 2
        %v5183 = vadd.f32 %v5181, %v5182
        %v5184 = vrot.slane %v5183, 1
        %v5185 = vadd.f32 %v5183, %v5184
        %v5186 = vadd.f32 %v4904, %v4910
        %v5187 = vadd.f32 %v5186, %v4916
        %v5188 = vadd.f32 %v5187, %v4922
        %v5189 = vadd.f32 %v5188, %v4928
        %v5190 = vadd.f32 %v5189, %v4934
        %v5191 = vadd.f32 %v5190, %v4940
        %v5192 = vadd.f32 %v5191, %v4946
        %v5193 = vadd.f32 %v5192, %v4952
        %v5194 = vadd.f32 %v5193, %v4958
        %v5195 = vadd.f32 %v5194, %v4964
        %v5196 = vadd.f32 %v5195, %v4970
        %v5197 = vadd.f32 %v5196, %v4976
        %v5198 = vadd.f32 %v5197, %v4982
        %v5199 = vadd.f32 %v5198, %v4988
        %v5200 = vadd.f32 %v5199, %v4994
        %v5201 = vrot.slane %v5200, 4
        %v5202 = vadd.f32 %v5200, %v5201
        %v5203 = vrot.slane %v5202, 2
        %v5204 = vadd.f32 %v5202, %v5203
        %v5205 = vrot.slane %v5204, 1
        %v5206 = vadd.f32 %v5204, %v5205
        %v5207 = vadd.f32 %v4905, %v4911
        %v5208 = vadd.f32 %v5207, %v4917
        %v5209 = vadd.f32 %v5208, %v4923
        %v5210 = vadd.f32 %v5209, %v4929
        %v5211 = vadd.f32 %v5210, %v4935
        %v5212 = vadd.f32 %v5211, %v4941
        %v5213 = vadd.f32 %v5212, %v4947
        %v5214 = vadd.f32 %v5213, %v4953
        %v5215 = vadd.f32 %v5214, %v4959
        %v5216 = vadd.f32 %v5215, %v4965
        %v5217 = vadd.f32 %v5216, %v4971
        %v5218 = vadd.f32 %v5217, %v4977
        %v5219 = vadd.f32 %v5218, %v4983
        %v5220 = vadd.f32 %v5219, %v4989
        %v5221 = vadd.f32 %v5220, %v4995
        %v5222 = vrot.slane %v5221, 4
        %v5223 = vadd.f32 %v5221, %v5222
        %v5224 = vrot.slane %v5223, 2
        %v5225 = vadd.f32 %v5223, %v5224
        %v5226 = vrot.slane %v5225, 1
        %v5227 = vadd.f32 %v5225, %v5226
        %v5228 = vadd.f32 %v4906, %v4912
        %v5229 = vadd.f32 %v5228, %v4918
        %v5230 = vadd.f32 %v5229, %v4924
        %v5231 = vadd.f32 %v5230, %v4930
        %v5232 = vadd.f32 %v5231, %v4936
        %v5233 = vadd.f32 %v5232, %v4942
        %v5234 = vadd.f32 %v5233, %v4948
        %v5235 = vadd.f32 %v5234, %v4954
        %v5236 = vadd.f32 %v5235, %v4960
        %v5237 = vadd.f32 %v5236, %v4966
        %v5238 = vadd.f32 %v5237, %v4972
        %v5239 = vadd.f32 %v5238, %v4978
        %v5240 = vadd.f32 %v5239, %v4984
        %v5241 = vadd.f32 %v5240, %v4990
        %v5242 = vadd.f32 %v5241, %v4996
        %v5243 = vrot.slane %v5242, 4
        %v5244 = vadd.f32 %v5242, %v5243
        %v5245 = vrot.slane %v5244, 2
        %v5246 = vadd.f32 %v5244, %v5245
        %v5247 = vrot.slane %v5246, 1
        %v5248 = vadd.f32 %v5246, %v5247
        %v5249 = vpack.c.bf16 %v5017, %v5017
        %v5250 = vpack.c.bf16 %v5038, %v5038
        %v5251 = vpack.c.bf16 %v5059, %v5059
        %v5252 = vpack.c.bf16 %v5080, %v5080
        %v5253 = vpack.c.bf16 %v5101, %v5101
        %v5254 = vpack.c.bf16 %v5122, %v5122
        %v5255 = vpack.c.bf16 %v5143, %v5143
        %v5256 = vpack.c.bf16 %v5164, %v5164
        %v5257 = vpack.c.bf16 %v5185, %v5185
        %v5258 = vpack.c.bf16 %v5206, %v5206
        %v5259 = vpack.c.bf16 %v5227, %v5227
        %v5260 = vpack.c.bf16 %v5248, %v5248
        %v5261 = vld [vmem:[#allocation10] sm:$0xf]
        %v5262 = vld [vmem:[#allocation10 + $0x4] sm:$0xf]
        %v5263 = vld [vmem:[#allocation10 + $0x8] sm:$0xf]
        %v5264 = vld [vmem:[#allocation10 + $0xc] sm:$0xf]
        %v5265 = vld [vmem:[#allocation10 + $0x10] sm:$0xf]
        %v5266 = vld [vmem:[#allocation10 + $0x14] sm:$0xf]
        %v5267 = vld [vmem:[#allocation10 + $0x18] sm:$0xf]
        %v5268 = vld [vmem:[#allocation10 + $0x1c] sm:$0xf]
        %v5269 = vld [vmem:[#allocation10 + $0x20] sm:$0xf]
        %v5270 = vld [vmem:[#allocation10 + $0x24] sm:$0xf]
        %v5271 = vld [vmem:[#allocation10 + $0x28] sm:$0xf]
        %v5272 = vld [vmem:[#allocation10 + $0x2c] sm:$0xf]
        %v5273 = vld [vmem:[#allocation10 + $0x30] sm:$0xf]
        %v5274 = vld [vmem:[#allocation10 + $0x34] sm:$0xf]
        %v5275 = vld [vmem:[#allocation10 + $0x38] sm:$0xf]
        %v5276 = vld [vmem:[#allocation10 + $0x3c] sm:$0xf]
        %v5277 = vld [vmem:[#allocation10 + $0x40] sm:$0xf]
        %v5278 = vld [vmem:[#allocation10 + $0x44] sm:$0xf]
        %v5279 = vld [vmem:[#allocation10 + $0x48] sm:$0xf]
        %v5280 = vld [vmem:[#allocation10 + $0x4c] sm:$0xf]
        %v5281 = vld [vmem:[#allocation10 + $0x50] sm:$0xf]
        %v5282 = vld [vmem:[#allocation10 + $0x54] sm:$0xf]
        %v5283 = vld [vmem:[#allocation10 + $0x58] sm:$0xf]
        %v5284 = vld [vmem:[#allocation10 + $0x5c] sm:$0xf]
        %v5285 = vld [vmem:[#allocation10 + $0x60] sm:$0xf]
        %v5286 = vld [vmem:[#allocation10 + $0x64] sm:$0xf]
        %v5287 = vld [vmem:[#allocation10 + $0x68] sm:$0xf]
        %v5288 = vld [vmem:[#allocation10 + $0x6c] sm:$0xf]
        %v5289 = vld [vmem:[#allocation10 + $0x70] sm:$0xf]
        %v5290 = vld [vmem:[#allocation10 + $0x74] sm:$0xf]
        %v5291 = vld [vmem:[#allocation10 + $0x78] sm:$0xf]
        %v5292 = vld [vmem:[#allocation10 + $0x7c] sm:$0xf]
        %v5293 = vld [vmem:[#allocation10 + $0x80] sm:$0xf]
        %v5294 = vld [vmem:[#allocation10 + $0x84] sm:$0xf]
        %v5295 = vld [vmem:[#allocation10 + $0x88] sm:$0xf]
        %v5296 = vld [vmem:[#allocation10 + $0x8c] sm:$0xf]
        %v5297 = vld [vmem:[#allocation10 + $0x90] sm:$0xf]
        %v5298 = vld [vmem:[#allocation10 + $0x94] sm:$0xf]
        %v5299 = vld [vmem:[#allocation10 + $0x98] sm:$0xf]
        %v5300 = vld [vmem:[#allocation10 + $0x9c] sm:$0xf]
        %v5301 = vld [vmem:[#allocation10 + $0xa0] sm:$0xf]
        %v5302 = vld [vmem:[#allocation10 + $0xa4] sm:$0xf]
        %v5303 = vld [vmem:[#allocation10 + $0xa8] sm:$0xf]
        %v5304 = vld [vmem:[#allocation10 + $0xac] sm:$0xf]
        %v5305 = vld [vmem:[#allocation10 + $0xb0] sm:$0xf]
        %v5306 = vld [vmem:[#allocation10 + $0xb4] sm:$0xf]
        %v5307 = vld [vmem:[#allocation10 + $0xb8] sm:$0xf]
        %v5308 = vld [vmem:[#allocation10 + $0xbc] sm:$0xf]
        %v5309 = vld [vmem:[#allocation10 + $0xc0] sm:$0xf]
        %v5310 = vld [vmem:[#allocation10 + $0xc4] sm:$0xf]
        %v5311 = vld [vmem:[#allocation10 + $0xc8] sm:$0xf]
        %v5312 = vld [vmem:[#allocation10 + $0xcc] sm:$0xf]
        %v5313 = vld [vmem:[#allocation10 + $0xd0] sm:$0xf]
        %v5314 = vld [vmem:[#allocation10 + $0xd4] sm:$0xf]
        %v5315 = vld [vmem:[#allocation10 + $0xd8] sm:$0xf]
        %v5316 = vld [vmem:[#allocation10 + $0xdc] sm:$0xf]
        %v5317 = vld [vmem:[#allocation10 + $0xe0] sm:$0xf]
        %v5318 = vld [vmem:[#allocation10 + $0xe4] sm:$0xf]
        %v5319 = vld [vmem:[#allocation10 + $0xe8] sm:$0xf]
        %v5320 = vld [vmem:[#allocation10 + $0xec] sm:$0xf]
        %v5321 = vld [vmem:[#allocation10 + $0xf0] sm:$0xf]
        %v5322 = vld [vmem:[#allocation10 + $0xf4] sm:$0xf]
        %v5323 = vld [vmem:[#allocation10 + $0xf8] sm:$0xf]
        %v5324 = vld [vmem:[#allocation10 + $0xfc] sm:$0xf]
        %v5325 = vld [vmem:[#allocation10 + $0x100] sm:$0xf]
        %v5326 = vld [vmem:[#allocation10 + $0x104] sm:$0xf]
        %v5327 = vld [vmem:[#allocation10 + $0x108] sm:$0xf]
        %v5328 = vld [vmem:[#allocation10 + $0x10c] sm:$0xf]
        %v5329 = vld [vmem:[#allocation10 + $0x110] sm:$0xf]
        %v5330 = vld [vmem:[#allocation10 + $0x114] sm:$0xf]
        %v5331 = vld [vmem:[#allocation10 + $0x118] sm:$0xf]
        %v5332 = vld [vmem:[#allocation10 + $0x11c] sm:$0xf]
        %v5333 = vld [vmem:[#allocation10 + $0x120] sm:$0xf]
        %v5334 = vld [vmem:[#allocation10 + $0x124] sm:$0xf]
        %v5335 = vld [vmem:[#allocation10 + $0x128] sm:$0xf]
        %v5336 = vld [vmem:[#allocation10 + $0x12c] sm:$0xf]
        %v5337 = vld [vmem:[#allocation10 + $0x130] sm:$0xf]
        %v5338 = vld [vmem:[#allocation10 + $0x134] sm:$0xf]
        %v5339 = vld [vmem:[#allocation10 + $0x138] sm:$0xf]
        %v5340 = vld [vmem:[#allocation10 + $0x13c] sm:$0xf]
        %v5341 = vld [vmem:[#allocation10 + $0x140] sm:$0xf]
        %v5342 = vld [vmem:[#allocation10 + $0x144] sm:$0xf]
        %v5343 = vld [vmem:[#allocation10 + $0x148] sm:$0xf]
        %v5344 = vld [vmem:[#allocation10 + $0x14c] sm:$0xf]
        %v5345 = vld [vmem:[#allocation10 + $0x150] sm:$0xf]
        %v5346 = vld [vmem:[#allocation10 + $0x154] sm:$0xf]
        %v5347 = vld [vmem:[#allocation10 + $0x158] sm:$0xf]
        %v5348 = vld [vmem:[#allocation10 + $0x15c] sm:$0xf]
        %v5349 = vld [vmem:[#allocation10 + $0x160] sm:$0xf]
        %v5350 = vld [vmem:[#allocation10 + $0x164] sm:$0xf]
        %v5351 = vld [vmem:[#allocation10 + $0x168] sm:$0xf]
        %v5352 = vld [vmem:[#allocation10 + $0x16c] sm:$0xf]
        %v5353 = vld [vmem:[#allocation10 + $0x170] sm:$0xf]
        %v5354 = vld [vmem:[#allocation10 + $0x174] sm:$0xf]
        %v5355 = vld [vmem:[#allocation10 + $0x178] sm:$0xf]
        %v5356 = vld [vmem:[#allocation10 + $0x17c] sm:$0xf]
        %v5357 = vld [vmem:[#allocation11] sm:$0x1]
        %v5359 = vlaneseq
        %v5360 = vshrl.u32 %v5359, 7
        %v5361 = vsub.s32 0, %v5360
        %v5362 = vrot.slane %v5357, %v5361
        %v5376 = vunpack.c.l.b16 %v5249
        %v5377 = vunpack.c.l.b16 %v5250
        %v5378 = vunpack.c.l.b16 %v5251
        %v5379 = vunpack.c.l.b16 %v5252
        %v5380 = vunpack.c.l.b16 %v5253
        %v5381 = vunpack.c.l.b16 %v5254
        %v5382 = vunpack.c.l.b16 %v5255
        %v5383 = vunpack.c.l.b16 %v5256
        %v5384 = vunpack.c.l.b16 %v5257
        %v5385 = vunpack.c.l.b16 %v5258
        %v5386 = vunpack.c.l.b16 %v5259
        %v5387 = vunpack.c.l.b16 %v5260
        %v5388 = vsel %vm3908, %v5382, %v5376
        %v5389 = vsel %vm3908, %v5383, %v5377
        %v5390 = vsel %vm3908, %v5384, %v5378
        %v5391 = vsel %vm3908, %v5385, %v5379
        %v5392 = vsel %vm3908, %v5386, %v5380
        %v5393 = vsel %vm3908, %v5387, %v5381
        %v5394 = vpack.c.b16 %v5388, %v5388
        %v5395 = vpack.c.b16 %v5389, %v5389
        %v5396 = vpack.c.b16 %v5390, %v5390
        %v5397 = vpack.c.b16 %v5391, %v5391
        %v5398 = vpack.c.b16 %v5392, %v5392
        %v5399 = vpack.c.b16 %v5393, %v5393
        %v5502 = vunpack.c.l.b16 %v5261
        %v5503 = vunpack.c.l.b16 %v5262
        %v5504 = vunpack.c.l.b16 %v5263
        %v5505 = vunpack.c.l.b16 %v5264
        %v5506 = vunpack.c.l.b16 %v5265
        %v5507 = vunpack.c.l.b16 %v5266
        %v5508 = vunpack.c.l.b16 %v5267
        %v5509 = vunpack.c.l.b16 %v5268
        %v5510 = vunpack.c.l.b16 %v5269
        %v5511 = vunpack.c.l.b16 %v5270
        %v5512 = vunpack.c.l.b16 %v5271
        %v5513 = vunpack.c.l.b16 %v5272
        %v5514 = vunpack.c.l.b16 %v5273
        %v5515 = vunpack.c.l.b16 %v5274
        %v5516 = vunpack.c.l.b16 %v5275
        %v5517 = vunpack.c.l.b16 %v5276
        %v5518 = vunpack.c.l.b16 %v5277
        %v5519 = vunpack.c.l.b16 %v5278
        %v5520 = vunpack.c.l.b16 %v5279
        %v5521 = vunpack.c.l.b16 %v5280
        %v5522 = vunpack.c.l.b16 %v5281
        %v5523 = vunpack.c.l.b16 %v5282
        %v5524 = vunpack.c.l.b16 %v5283
        %v5525 = vunpack.c.l.b16 %v5284
        %v5526 = vunpack.c.l.b16 %v5285
        %v5527 = vunpack.c.l.b16 %v5286
        %v5528 = vunpack.c.l.b16 %v5287
        %v5529 = vunpack.c.l.b16 %v5288
        %v5530 = vunpack.c.l.b16 %v5289
        %v5531 = vunpack.c.l.b16 %v5290
        %v5532 = vunpack.c.l.b16 %v5291
        %v5533 = vunpack.c.l.b16 %v5292
        %v5534 = vunpack.c.l.b16 %v5293
        %v5535 = vunpack.c.l.b16 %v5294
        %v5536 = vunpack.c.l.b16 %v5295
        %v5537 = vunpack.c.l.b16 %v5296
        %v5538 = vunpack.c.l.b16 %v5297
        %v5539 = vunpack.c.l.b16 %v5298
        %v5540 = vunpack.c.l.b16 %v5299
        %v5541 = vunpack.c.l.b16 %v5300
        %v5542 = vunpack.c.l.b16 %v5301
        %v5543 = vunpack.c.l.b16 %v5302
        %v5544 = vunpack.c.l.b16 %v5303
        %v5545 = vunpack.c.l.b16 %v5304
        %v5546 = vunpack.c.l.b16 %v5305
        %v5547 = vunpack.c.l.b16 %v5306
        %v5548 = vunpack.c.l.b16 %v5307
        %v5549 = vunpack.c.l.b16 %v5308
        %v5550 = vunpack.c.l.b16 %v5309
        %v5551 = vunpack.c.l.b16 %v5310
        %v5552 = vunpack.c.l.b16 %v5311
        %v5553 = vunpack.c.l.b16 %v5312
        %v5554 = vunpack.c.l.b16 %v5313
        %v5555 = vunpack.c.l.b16 %v5314
        %v5556 = vunpack.c.l.b16 %v5315
        %v5557 = vunpack.c.l.b16 %v5316
        %v5558 = vunpack.c.l.b16 %v5317
        %v5559 = vunpack.c.l.b16 %v5318
        %v5560 = vunpack.c.l.b16 %v5319
        %v5561 = vunpack.c.l.b16 %v5320
        %v5562 = vunpack.c.l.b16 %v5321
        %v5563 = vunpack.c.l.b16 %v5322
        %v5564 = vunpack.c.l.b16 %v5323
        %v5565 = vunpack.c.l.b16 %v5324
        %v5566 = vunpack.c.l.b16 %v5325
        %v5567 = vunpack.c.l.b16 %v5326
        %v5568 = vunpack.c.l.b16 %v5327
        %v5569 = vunpack.c.l.b16 %v5328
        %v5570 = vunpack.c.l.b16 %v5329
        %v5571 = vunpack.c.l.b16 %v5330
        %v5572 = vunpack.c.l.b16 %v5331
        %v5573 = vunpack.c.l.b16 %v5332
        %v5574 = vunpack.c.l.b16 %v5333
        %v5575 = vunpack.c.l.b16 %v5334
        %v5576 = vunpack.c.l.b16 %v5335
        %v5577 = vunpack.c.l.b16 %v5336
        %v5578 = vunpack.c.l.b16 %v5337
        %v5579 = vunpack.c.l.b16 %v5338
        %v5580 = vunpack.c.l.b16 %v5339
        %v5581 = vunpack.c.l.b16 %v5340
        %v5582 = vunpack.c.l.b16 %v5341
        %v5583 = vunpack.c.l.b16 %v5342
        %v5584 = vunpack.c.l.b16 %v5343
        %v5585 = vunpack.c.l.b16 %v5344
        %v5586 = vunpack.c.l.b16 %v5345
        %v5587 = vunpack.c.l.b16 %v5346
        %v5588 = vunpack.c.l.b16 %v5347
        %v5589 = vunpack.c.l.b16 %v5348
        %v5590 = vunpack.c.l.b16 %v5349
        %v5591 = vunpack.c.l.b16 %v5350
        %v5592 = vunpack.c.l.b16 %v5351
        %v5593 = vunpack.c.l.b16 %v5352
        %v5594 = vunpack.c.l.b16 %v5353
        %v5595 = vunpack.c.l.b16 %v5354
        %v5596 = vunpack.c.l.b16 %v5355
        %v5597 = vunpack.c.l.b16 %v5356
        %v5598 = vpack.c.b16 %v5503, %v5502
        %v5599 = vpack.c.b16 %v5505, %v5504
        %v5600 = vpack.c.b16 %v5507, %v5506
        %v5601 = vpack.c.b16 %v5509, %v5508
        %v5602 = vpack.c.b16 %v5511, %v5510
        %v5603 = vpack.c.b16 %v5513, %v5512
        %v5604 = vpack.c.b16 %v5515, %v5514
        %v5605 = vpack.c.b16 %v5517, %v5516
        %v5606 = vpack.c.b16 %v5519, %v5518
        %v5607 = vpack.c.b16 %v5521, %v5520
        %v5608 = vpack.c.b16 %v5523, %v5522
        %v5609 = vpack.c.b16 %v5525, %v5524
        %v5610 = vpack.c.b16 %v5527, %v5526
        %v5611 = vpack.c.b16 %v5529, %v5528
        %v5612 = vpack.c.b16 %v5531, %v5530
        %v5613 = vpack.c.b16 %v5533, %v5532
        %v5614 = vpack.c.b16 %v5535, %v5534
        %v5615 = vpack.c.b16 %v5537, %v5536
        %v5616 = vpack.c.b16 %v5539, %v5538
        %v5617 = vpack.c.b16 %v5541, %v5540
        %v5618 = vpack.c.b16 %v5543, %v5542
        %v5619 = vpack.c.b16 %v5545, %v5544
        %v5620 = vpack.c.b16 %v5547, %v5546
        %v5621 = vpack.c.b16 %v5549, %v5548
        %v5622 = vpack.c.b16 %v5551, %v5550
        %v5623 = vpack.c.b16 %v5553, %v5552
        %v5624 = vpack.c.b16 %v5555, %v5554
        %v5625 = vpack.c.b16 %v5557, %v5556
        %v5626 = vpack.c.b16 %v5559, %v5558
        %v5627 = vpack.c.b16 %v5561, %v5560
        %v5628 = vpack.c.b16 %v5563, %v5562
        %v5629 = vpack.c.b16 %v5565, %v5564
        %v5630 = vpack.c.b16 %v5567, %v5566
        %v5631 = vpack.c.b16 %v5569, %v5568
        %v5632 = vpack.c.b16 %v5571, %v5570
        %v5633 = vpack.c.b16 %v5573, %v5572
        %v5634 = vpack.c.b16 %v5575, %v5574
        %v5635 = vpack.c.b16 %v5577, %v5576
        %v5636 = vpack.c.b16 %v5579, %v5578
        %v5637 = vpack.c.b16 %v5581, %v5580
        %v5638 = vpack.c.b16 %v5583, %v5582
        %v5639 = vpack.c.b16 %v5585, %v5584
        %v5640 = vpack.c.b16 %v5587, %v5586
        %v5641 = vpack.c.b16 %v5589, %v5588
        %v5642 = vpack.c.b16 %v5591, %v5590
        %v5643 = vpack.c.b16 %v5593, %v5592
        %v5644 = vpack.c.b16 %v5595, %v5594
        %v5645 = vpack.c.b16 %v5597, %v5596
        %5694 = vmatprep.subr.bf16.mxu0 0
        %5695 = vmatpush1.bf16.msra.mxu0 %v5598
        %5696 = vmatprep.subr.bf16.mxu0 0
        %5697 = vmatpush1.bf16.msra.mxu0 %v5599
        %5698 = vmatprep.subr.bf16.mxu0 0
        %5699 = vmatpush1.bf16.msra.mxu0 %v5600
        %5700 = vmatprep.subr.bf16.mxu0 0
        %5701 = vmatpush1.bf16.msra.mxu0 %v5601
        %5702 = vmatprep.subr.bf16.mxu0 0
        %5703 = vmatpush1.bf16.msra.mxu0 %v5602
        %5704 = vmatprep.subr.bf16.mxu0 0
        %5705 = vmatpush1.bf16.msra.mxu0 %v5603
        %5706 = vmatprep.subr.bf16.mxu0 0
        %5707 = vmatpush1.bf16.msra.mxu0 %v5604
        %5708 = vmatprep.subr.bf16.mxu0 0
        %5709 = vmatpush1.bf16.msra.mxu0 %v5605
        %5710 = vmatprep.subr.bf16.mxu0 0
        %5711 = vmatpush1.bf16.msra.mxu0 %v5606
        %5712 = vmatprep.subr.bf16.mxu0 0
        %5713 = vmatpush1.bf16.msra.mxu0 %v5607
        %5714 = vmatprep.subr.bf16.mxu0 0
        %5715 = vmatpush1.bf16.msra.mxu0 %v5608
        %5716 = vmatprep.subr.bf16.mxu0 0
        %5717 = vmatpush1.bf16.msra.mxu0 %v5609
        %5718 = vmatprep.subr.bf16.mxu0 0
        %5719 = vmatpush1.bf16.msra.mxu0 %v5610
        %5720 = vmatprep.subr.bf16.mxu0 0
        %5721 = vmatpush1.bf16.msra.mxu0 %v5611
        %5722 = vmatprep.subr.bf16.mxu0 0
        %5723 = vmatpush1.bf16.msra.mxu0 %v5612
        %5724 = vmatprep.subr.bf16.mxu0 0
        %5725 = vmatpush1.bf16.msra.mxu0 %v5613
        %5726 = vmatprep.mubr.bf16.mxu0 %v5395
        %5727 = vmatmul.mubr.bf16.gmra.mrb[0].mxu0 %v5394
        %v5728 = vpop.f32.mrb[0].mxu0
        %v5729 = vadd.f32 %v5362, %v5728
        %v5730 = vpop.f32.mrb[0].mxu0
        %v5731 = vpop.f32.mrb[0].mxu0
        %v5732 = vpop.f32.mrb[0].mxu0
        %5733 = vdwg.mxu0
        %5734 = vmatprep.subr.bf16.mxu0 0
        %5735 = vmatpush1.bf16.msra.mxu0 %v5614
        %5736 = vmatprep.subr.bf16.mxu0 0
        %5737 = vmatpush1.bf16.msra.mxu0 %v5615
        %5738 = vmatprep.subr.bf16.mxu0 0
        %5739 = vmatpush1.bf16.msra.mxu0 %v5616
        %5740 = vmatprep.subr.bf16.mxu0 0
        %5741 = vmatpush1.bf16.msra.mxu0 %v5617
        %5742 = vmatprep.subr.bf16.mxu0 0
        %5743 = vmatpush1.bf16.msra.mxu0 %v5618
        %5744 = vmatprep.subr.bf16.mxu0 0
        %5745 = vmatpush1.bf16.msra.mxu0 %v5619
        %5746 = vmatprep.subr.bf16.mxu0 0
        %5747 = vmatpush1.bf16.msra.mxu0 %v5620
        %5748 = vmatprep.subr.bf16.mxu0 0
        %5749 = vmatpush1.bf16.msra.mxu0 %v5621
        %5750 = vmatprep.subr.bf16.mxu0 0
        %5751 = vmatpush1.bf16.msra.mxu0 %v5622
        %5752 = vmatprep.subr.bf16.mxu0 0
        %5753 = vmatpush1.bf16.msra.mxu0 %v5623
        %5754 = vmatprep.subr.bf16.mxu0 0
        %5755 = vmatpush1.bf16.msra.mxu0 %v5624
        %5756 = vmatprep.subr.bf16.mxu0 0
        %5757 = vmatpush1.bf16.msra.mxu0 %v5625
        %5758 = vmatprep.subr.bf16.mxu0 0
        %5759 = vmatpush1.bf16.msra.mxu0 %v5626
        %5760 = vmatprep.subr.bf16.mxu0 0
        %5761 = vmatpush1.bf16.msra.mxu0 %v5627
        %5762 = vmatprep.subr.bf16.mxu0 0
        %5763 = vmatpush1.bf16.msra.mxu0 %v5628
        %5764 = vmatprep.subr.bf16.mxu0 0
        %5765 = vmatpush1.bf16.msra.mxu0 %v5629
        %5766 = vmatprep.mubr.bf16.mxu0 %v5397
        %5767 = vmatmul.mubr.bf16.gmra.mrb[0].mxu0 %v5396
        %v5768 = vpop.f32.mrb[0].mxu0
        %v5769 = vadd.f32 %v5729, %v5768
        %v5770 = vpop.f32.mrb[0].mxu0
        %v5771 = vpop.f32.mrb[0].mxu0
        %v5772 = vpop.f32.mrb[0].mxu0
        %5773 = vdwg.mxu0
        %5774 = vmatprep.subr.bf16.mxu0 0
        %5775 = vmatpush1.bf16.msra.mxu0 %v5630
        %5776 = vmatprep.subr.bf16.mxu0 0
        %5777 = vmatpush1.bf16.msra.mxu0 %v5631
        %5778 = vmatprep.subr.bf16.mxu0 0
        %5779 = vmatpush1.bf16.msra.mxu0 %v5632
        %5780 = vmatprep.subr.bf16.mxu0 0
        %5781 = vmatpush1.bf16.msra.mxu0 %v5633
        %5782 = vmatprep.subr.bf16.mxu0 0
        %5783 = vmatpush1.bf16.msra.mxu0 %v5634
        %5784 = vmatprep.subr.bf16.mxu0 0
        %5785 = vmatpush1.bf16.msra.mxu0 %v5635
        %5786 = vmatprep.subr.bf16.mxu0 0
        %5787 = vmatpush1.bf16.msra.mxu0 %v5636
        %5788 = vmatprep.subr.bf16.mxu0 0
        %5789 = vmatpush1.bf16.msra.mxu0 %v5637
        %5790 = vmatprep.subr.bf16.mxu0 0
        %5791 = vmatpush1.bf16.msra.mxu0 %v5638
        %5792 = vmatprep.subr.bf16.mxu0 0
        %5793 = vmatpush1.bf16.msra.mxu0 %v5639
        %5794 = vmatprep.subr.bf16.mxu0 0
        %5795 = vmatpush1.bf16.msra.mxu0 %v5640
        %5796 = vmatprep.subr.bf16.mxu0 0
        %5797 = vmatpush1.bf16.msra.mxu0 %v5641
        %5798 = vmatprep.subr.bf16.mxu0 0
        %5799 = vmatpush1.bf16.msra.mxu0 %v5642
        %5800 = vmatprep.subr.bf16.mxu0 0
        %5801 = vmatpush1.bf16.msra.mxu0 %v5643
        %5802 = vmatprep.subr.bf16.mxu0 0
        %5803 = vmatpush1.bf16.msra.mxu0 %v5644
        %5804 = vmatprep.subr.bf16.mxu0 0
        %5805 = vmatpush1.bf16.msra.mxu0 %v5645
        %5806 = vmatprep.mubr.bf16.mxu0 %v5399
        %5807 = vmatmul.mubr.bf16.gmra.mrb[0].mxu0 %v5398
        %v5808 = vpop.f32.mrb[0].mxu0
        %v5809 = vadd.f32 %v5769, %v5808
        %v5810 = vpop.f32.mrb[0].mxu0
        %v5811 = vpop.f32.mrb[0].mxu0
        %v5812 = vpop.f32.mrb[0].mxu0
        %5813 = vdwg.mxu0
        %5814 = vst [vmem:[%s337] sm:$0x3] %v5809
        %s5815 = sand.u32 %s165, 1
        %s5816 = scalar_lea.sflag [#allocation4], %s5815
        %s5817 = sand.u32 %s165, 1
        %s5818 = smul.addr %s5817, 2
        %s5819 = scalar_lea.vmem [#allocation13], %s5818
        // Predicated region
        $region69: #{tpu_custom_call.1} parent=43 // pred_check
          %p5820 = pneg %p175
        $region70: #{tpu_custom_call.1} parent=43 // pred_check_branch
          %5822 = sbr.rel (%p5820) target = $region72
        $region71: #{tpu_custom_call.1} parent=43 // pred_region
          %s5824 = ssub.s32 32, 32
          %5825 = vsyncadd %s5816, %s5824
          %s5826 = smul.addr %s26, 32
          %s5827 = scalar_lea.hbm %s6, %s5826
          %s5829 = sshll.u32 %s5819, 4
          %s5830 = int_to_ptr.vmem [resolvable:$true] %s5829
          %5832 = dma.vmem_to_hbm [thread:$0]  %s5830, 32, %s5827, %s5816
        $region72: #{tpu_custom_call.1} parent=43 // pred_fallthru
          _
      $region44: #{tpu_custom_call.1} parent=5 // pred_fallthru
        _
      %p5833 = scmp.le.s32.totalorder 2, %s21
      // Predicated region
      $region73: #{tpu_custom_call.1} parent=5 // pred_check
        %p5834 = pneg %p5833
      $region74: #{tpu_custom_call.1} parent=5 // pred_check_branch
        %5836 = sbr.rel (%p5834) target = $region76
      $region75: #{tpu_custom_call.1} parent=5 // pred_region
        %s5837 = ssub.s32 %s21, 2
        // Predicated region
        $region77: #{tpu_custom_call.1} parent=75 // pred_check
          %p5838 = pneg %p181
        $region78: #{tpu_custom_call.1} parent=75 // pred_check_branch
          %5840 = sbr.rel (%p5838) target = $region80
        $region79: #{tpu_custom_call.1} parent=75 // pred_region
          %s5841 = sand.u32 %s166, 1
          %s5842 = scalar_lea.sflag [#allocation4], %s5841
          %s5843 = sand.u32 %s166, 1
          %s5844 = smul.addr %s5843, 2
          %s5845 = scalar_lea.vmem [#allocation13], %s5844
          %5846 = dma.done %s5842, 32
        $region80: #{tpu_custom_call.1} parent=75 // pred_fallthru
          _
      $region76: #{tpu_custom_call.1} parent=5 // pred_fallthru
        _
    $region6: #{tpu_custom_call.1} parent=1 // loop_footer
      %s25 = sadd.s32 1, %s21
    $region7: #{tpu_custom_call.1} parent=1 // loop_footer_branch
      %20 = sbr.rel target = $region3
    $region8: #{tpu_custom_call.1} parent=1 // loop_exit
      _
    %5847 = vsyncpa [#allocation3], 1
    %s5848 = scalar_lea.sflag [#allocation3], 1
    %5849 = vsyncpa %s5848, 1
    %5850 = vsyncpa [#allocation6], 1
    %5851 = vsyncpa [#allocation9], 1
    %5852 = vsyncpa [#allocation12], 1
    %5853 = vsyncpa [#allocation4], 1
    %s5854 = scalar_lea.sflag [#allocation4], 1
    %5855 = vsyncpa %s5854, 1

</llo_original>
